<compile_context>
chip_gen: v5e
topology: v5e:2x2
jax: 0.10.0
libtpu: 0.0.40
codegen_flags: <defaults>
</compile_context>

<pallas_src>
import numpy as np
import jax
import jax.numpy as jnp
from jax.experimental import pallas as pl
from jax.experimental.pallas import tpu as pltpu

C_PAD = 128  # lane-dense channel padding


# ----------------------------------------------------------------------------
# Trace-time packing helpers
# ----------------------------------------------------------------------------
def _vspec(shape):
    nd = len(shape)
    return pl.BlockSpec(shape, lambda i, _nd=nd: (0,) * _nd)


def _fold_bn(gamma, beta, mean, var, conv_bias, eps=1e-5):
    s = gamma / jnp.sqrt(var + eps)
    t = beta - mean * s + conv_bias * s
    return s, t


def _pack_conv_w(w, scale):
    """(cout, cin, k) conv weight * BN scale -> (k, C_PAD, C_PAD) tap matrices."""
    cout, cin, k = w.shape
    wt = jnp.transpose(w, (2, 1, 0)) * scale[None, None, :]      # (k, cin, cout)
    return jnp.zeros((k, C_PAD, C_PAD), jnp.float32).at[:, :cin, :cout].set(wt)


def _pack_bias(t):
    return jnp.zeros((1, C_PAD), jnp.float32).at[0, :t.shape[0]].set(t)


def _boundary_masks(n, lin):
    """(2, n*lin, 1) masks: [0] kills the left tap at l==0, [1] the right at l==lin-1."""
    m = np.ones((2, n * lin, 1), np.float32)
    m[0, 0::lin, 0] = 0.0
    m[1, lin - 1::lin, 0] = 0.0
    return jnp.asarray(m)


def _stride_selection(n, lin, lout, stride):
    """(n*lout, n*lin) 0/1 row-subsampling matrix: picks row stride*j per sample."""
    sel = np.zeros((n * lout, n * lin), np.float32)
    for b in range(n):
        for j in range(lout):
            sel[b * lout + j, b * lin + stride * j] = 1.0
    return jnp.asarray(sel)


# ----------------------------------------------------------------------------
# Parameter init (deterministic)
# ----------------------------------------------------------------------------
def _conv1d_params(key, cin, cout, k):
    wkey, bkey = jax.random.split(key)
    bound = 1.0 / (cin * k) ** 0.5
    w = jax.random.uniform(wkey, (cout, cin, k), jnp.float32, -bound, bound)
    b = jax.random.uniform(bkey, (cout,), jnp.float32, -bound, bound)
    return w, b


def _bn_params(key, c):
    gkey, bkey = jax.random.split(key)
    gamma = 1.0 + 0.1 * jax.random.normal(gkey, (c,), jnp.float32)
    beta = 0.1 * jax.random.normal(bkey, (c,), jnp.float32)
    mean = jnp.zeros((c,), jnp.float32)
    var = jnp.ones((c,), jnp.float32)
    return gamma, beta, mean, var


def init_resblock(key, cin, cout, stride):
    keys = jax.random.split(key, 6)
    p = {
        "conv1": _conv1d_params(keys[0], cin, cout, 3),
        "bn1": _bn_params(keys[1], cout),
        "conv2": _conv1d_params(keys[2], cout, cout, 3),
        "bn2": _bn_params(keys[3], cout),
        "stride": stride,
    }
    if cout != cin:
        p["skip_conv"] = _conv1d_params(keys[4], cin, cout, 1)
        p["skip_bn"] = _bn_params(keys[5], cout)
    return p


def init_cnn(key):
    keys = jax.random.split(key, 7)
    params = {
        "layer1": init_resblock(keys[0], 1, 8, 1),
        "layer2": init_resblock(keys[1], 8, 16, 2),
        "layer3": init_resblock(keys[2], 16, 24, 2),
        "layer4": init_resblock(keys[3], 24, 16, 1),
        "layer5": init_resblock(keys[4], 16, 8, 1),
    }
    bound = 1.0 / (8 * 5) ** 0.5
    wl = jax.random.uniform(keys[5], (1, 8 * 5), jnp.float32, -bound, bound)
    bl = jax.random.uniform(keys[6], (1,), jnp.float32, -bound, bound)
    params["layer6"] = (wl, bl)
    return params


# ----------------------------------------------------------------------------
# Forward: pack operands once, run ONE pallas_call for the whole network.
# ----------------------------------------------------------------------------
def cnn_forward(x, params):
    N, L0 = x.shape
    f32, bf16 = jnp.float32, jnp.bfloat16

    # lane-dense input: rows = (sample, position), lane 0 holds the single channel
    x0 = jnp.zeros((N * L0, C_PAD), f32).at[:, 0].set(
        x.reshape(N * L0).astype(f32))

    w_mats, b_rows, masks, sels = [], [], [], []
    mask_index = {}
    layers = []                       # (w_base, b_base, m_in, m_out, sel_idx, has_skip)
    w_count = b_count = 0
    lin, last_cout = L0, 1

    def mask_id(n, l):
        key = (n, l)
        if key not in mask_index:
            mask_index[key] = len(masks)
            masks.append(_boundary_masks(n, l))
        return mask_index[key]

    for name in ("layer1", "layer2", "layer3", "layer4", "layer5"):
        p = params[name]
        stride = p["stride"]
        (w1, cb1), bn1 = p["conv1"], p["bn1"]
        (w2, cb2), bn2 = p["conv2"], p["bn2"]
        cout = w1.shape[0]
        lout = (lin - 1) // stride + 1          # k=3, pad=1

        s1, t1 = _fold_bn(*bn1, cb1)
        s2, t2 = _fold_bn(*bn2, cb2)

        w_base, b_base = w_count, b_count
        w_mats += [_pack_conv_w(w1, s1), _pack_conv_w(w2, s2)]
        b_rows += [_pack_bias(t1), _pack_bias(t2)]
        w_count += 6
        b_count += 2

        has_skip = "skip_conv" in p
        if has_skip:
            (wsk, cbsk), bnsk = p["skip_conv"], p["skip_bn"]
            ssk, tsk = _fold_bn(*bnsk, cbsk)
            w_mats.append(_pack_conv_w(wsk, ssk))   # 1x1 conv -> one tap matrix
            b_rows.append(_pack_bias(tsk))
            w_count += 1
            b_count += 1

        sel_idx = None
        if stride != 1:
            sel_idx = len(sels)
            sels.append(_stride_selection(N, lin, lout, stride))

        layers.append((w_base, b_base, mask_id(N, lin), mask_id(N, lout),
                       sel_idx, has_skip))
        lin, last_cout = lout, cout

    w_stack = jnp.concatenate(w_mats, axis=0).astype(bf16)   # (35, 128, 128) bf16
    b_stack = jnp.concatenate(b_rows, axis=0)                # (15, 128) f32

    # final Linear: PyTorch flattens (N, C, L) channel-major -> idx = c*L + l
    wl, bl = params["layer6"]
    cf, lf = last_cout, lin
    assert wl.shape[1] == cf * lf
    wl_mat = jnp.zeros((lf, C_PAD), f32).at[:, :cf].set(wl.reshape(cf, lf).T)
    wl_tiled = jnp.tile(wl_mat, (N, 1))                      # (N*lf, 128)
    ssum = jnp.asarray(np.kron(np.eye(N, dtype=np.float32),
                               np.ones((1, lf), np.float32)))  # (N, N*lf)
    ones_col = jnp.ones((C_PAD, 1), f32)
    bl_scalar = bl.reshape(1, 1).astype(f32)

    n_masks, n_sels = len(masks), len(sels)
    layers = tuple(layers)

    def kernel(*refs):
        x_ref, w_ref, b_ref = refs[:3]
        i = 3
        mask_refs = refs[i:i + n_masks]; i += n_masks
        sel_refs = refs[i:i + n_sels]; i += n_sels
        wl_ref, ssum_ref, ones_ref, bl_ref, o_ref = refs[i:]

        biases = b_ref[...]                      # (n_bias, 128) f32, load once
        act = x_ref[...]                         # (N*L0, 128) f32 activations

        def conv3(a_f32, w_base, bias_row, mask_ref):
            rows = a_f32.shape[0]
            a = a_f32.astype(bf16)
            y0 = jnp.dot(a, w_ref[w_base + 0], preferred_element_type=f32)
            y1 = jnp.dot(a, w_ref[w_base + 1], preferred_element_type=f32)
            y2 = jnp.dot(a, w_ref[w_base + 2], preferred_element_type=f32)
            # tap alignment via sublane rotate (XLU) + boundary masks (VPU)
            left = pltpu.roll(y0, 1, 0) * mask_ref[0]
            right = pltpu.roll(y2, rows - 1, 0) * mask_ref[1]
            return left + y1 + right + bias_row

        for (w_base, b_base, m_in, m_out, sel_idx, has_skip) in layers:
            b1 = biases[b_base + 0:b_base + 1, :]
            b2 = biases[b_base + 1:b_base + 2, :]

            # conv1 (k=3) + folded BN1, computed at full input resolution
            full1 = conv3(act, w_base, b1, mask_refs[m_in])
            if sel_idx is not None:
                sel = sel_refs[sel_idx][...]     # tiny 0/1 row-subsample (stride 2)
                h = jnp.dot(sel, full1, preferred_element_type=f32)
                xs = jnp.dot(sel, act, preferred_element_type=f32)
            else:
                h, xs = full1, act
            h = jnp.maximum(h, 0.0)

            # conv2 (k=3, stride 1) + folded BN2
            out = conv3(h, w_base + 3, b2, mask_refs[m_out])

            # skip: 1x1 conv (stride folded above) + folded BN, or identity
            if has_skip:
                bsk = biases[b_base + 2:b_base + 3, :]
                skip = jnp.dot(xs.astype(bf16), w_ref[w_base + 6],
                               preferred_element_type=f32) + bsk
            else:
                skip = xs

            act = jnp.maximum(out + skip, 0.0)

        # final Linear(cf*lf -> 1): elementwise weight, per-sample row sum (MXU),
        # lane reduction via ones column (MXU), SMEM scalar bias.
        z = act * wl_ref[...]
        per_sample = jnp.dot(ssum_ref[...], z, preferred_element_type=f32)   # (N,128)
        y = jnp.dot(per_sample, ones_ref[...], preferred_element_type=f32)   # (N,1)
        o_ref[...] = y + bl_ref[0, 0]

    inputs = [x0, w_stack, b_stack, *masks, *sels, wl_tiled, ssum, ones_col]
    in_specs = [_vspec(a.shape) for a in inputs]
    inputs.append(bl_scalar)
    in_specs.append(pl.BlockSpec((1, 1), lambda i: (0, 0),
                                 memory_space=pltpu.MemorySpace.SMEM))

    return pl.pallas_call(
        kernel,
        out_shape=jax.ShapeDtypeStruct((N, 1), jnp.float32),
        grid=(1,),
        in_specs=in_specs,
        out_specs=_vspec((N, 1)),
        compiler_params=pltpu.CompilerParams(
            dimension_semantics=("arbitrary",)),
    )(*inputs)


# ----------------------------------------------------------------------------
# Pure-JAX reference (f32), for a sanity check of the fused kernel.
# ----------------------------------------------------------------------------
def _ref_conv1d(x, w, b, stride, padding):
    out = jax.lax.conv_general_dilated(
        x, w, window_strides=(stride,), padding=[(padding, padding)],
        dimension_numbers=("NCH", "OIH", "NCH"))
    return out + b[None, :, None]


def _ref_bn(x, gamma, beta, mean, var, eps=1e-5):
    s = gamma / jnp.sqrt(var + eps)
    return (x - mean[None, :, None]) * s[None, :, None] + beta[None, :, None]


def _ref_block(x, p):
    (w1, b1), bn1 = p["conv1"], p["bn1"]
    (w2, b2), bn2 = p["conv2"], p["bn2"]
    h = jax.nn.relu(_ref_bn(_ref_conv1d(x, w1, b1, p["stride"], 1), *bn1))
    out = _ref_bn(_ref_conv1d(h, w2, b2, 1, 1), *bn2)
    if "skip_conv" in p:
        (wsk, bsk), bnsk = p["skip_conv"], p["skip_bn"]
        sk = _ref_bn(_ref_conv1d(x, wsk, bsk, p["stride"], 0), *bnsk)
    else:
        sk = x
    return jax.nn.relu(out + sk)


def cnn_reference(x, params):
    N, L = x.shape
    h = x.reshape(N, 1, L).astype(jnp.float32)
    for name in ("layer1", "layer2", "layer3", "layer4", "layer5"):
        h = _ref_block(h, params[name])
    wl, bl = params["layer6"]
    return (h.reshape(N, -1) @ wl.T + bl).reshape(N, 1)


if __name__ == "__main__":
    key = jax.random.PRNGKey(0)
    pkey, xkey = jax.random.split(key)
    params = init_cnn(pkey)
    # L must be 20 so two stride-2 blocks give length 5 (layer6 expects 8*5 feats).
    x = jax.random.normal(xkey, (8, 20), jnp.float32)

    y = cnn_forward(x, params)
    jax.block_until_ready(y)
    assert y.shape == (8, 1)
    assert bool(jnp.all(jnp.isfinite(y)))

    # Cross-check against a pure-JAX f32 reference (kernel uses bf16 operands).
    y_ref = cnn_reference(x, params)
    tol = 5e-2 + 5e-2 * float(jnp.max(jnp.abs(y_ref)))
    max_err = float(jnp.max(jnp.abs(y - y_ref)))
    assert max_err < tol, f"max |err| {max_err} vs tol {tol}"

    print("KERNEL_OK")
</pallas_src>

<mosaic_0001>
module attributes {stable_mosaic.version = 11 : i64} {
  func.func @kernel(%arg0: i32, %arg1: memref<160x128xf32, #tpu.memory_space<vmem>>, %arg2: memref<35x128x128xbf16, #tpu.memory_space<vmem>>, %arg3: memref<15x128xf32, #tpu.memory_space<vmem>>, %arg4: memref<2x160x1xf32, #tpu.memory_space<vmem>>, %arg5: memref<2x80x1xf32, #tpu.memory_space<vmem>>, %arg6: memref<2x40x1xf32, #tpu.memory_space<vmem>>, %arg7: memref<80x160xf32, #tpu.memory_space<vmem>>, %arg8: memref<40x80xf32, #tpu.memory_space<vmem>>, %arg9: memref<40x128xf32, #tpu.memory_space<vmem>>, %arg10: memref<8x40xf32, #tpu.memory_space<vmem>>, %arg11: memref<128x1xf32, #tpu.memory_space<vmem>>, %arg12: memref<1x1xf32, #tpu.memory_space<smem>>, %arg13: memref<8x1xf32, #tpu.memory_space<vmem>>) attributes {dimension_semantics = [#tpu.dimension_semantics<arbitrary>], iteration_bounds = array<i64: 1>, scalar_prefetch = 0 : i64, scratch_operands = 0 : i64, tpu.core_type = #tpu.core_type<tc>, window_params = [{pipeline_mode = #tpu.pipeline_mode<synchronous>, transform_indices = @transform_0, window_bounds = array<i64: 160, 128>}, {pipeline_mode = #tpu.pipeline_mode<synchronous>, transform_indices = @transform_1, window_bounds = array<i64: 35, 128, 128>}, {pipeline_mode = #tpu.pipeline_mode<synchronous>, transform_indices = @transform_2, window_bounds = array<i64: 15, 128>}, {pipeline_mode = #tpu.pipeline_mode<synchronous>, transform_indices = @transform_3, window_bounds = array<i64: 2, 160, 1>}, {pipeline_mode = #tpu.pipeline_mode<synchronous>, transform_indices = @transform_4, window_bounds = array<i64: 2, 80, 1>}, {pipeline_mode = #tpu.pipeline_mode<synchronous>, transform_indices = @transform_5, window_bounds = array<i64: 2, 40, 1>}, {pipeline_mode = #tpu.pipeline_mode<synchronous>, transform_indices = @transform_6, window_bounds = array<i64: 80, 160>}, {pipeline_mode = #tpu.pipeline_mode<synchronous>, transform_indices = @transform_7, window_bounds = array<i64: 40, 80>}, {pipeline_mode = #tpu.pipeline_mode<synchronous>, transform_indices = @transform_8, window_bounds = array<i64: 40, 128>}, {pipeline_mode = #tpu.pipeline_mode<synchronous>, transform_indices = @transform_9, window_bounds = array<i64: 8, 40>}, {pipeline_mode = #tpu.pipeline_mode<synchronous>, transform_indices = @transform_10, window_bounds = array<i64: 128, 1>}, {transform_indices = @transform_11, window_bounds = array<i64: 1, 1>}, {pipeline_mode = #tpu.pipeline_mode<synchronous>, transform_indices = @transform_12, window_bounds = array<i64: 8, 1>}]} {
    %c0 = arith.constant 0 : index
    %c0_0 = arith.constant 0 : index
    %0 = vector.load %arg3[%c0, %c0_0] : memref<15x128xf32, #tpu.memory_space<vmem>>, vector<15x128xf32>
    %c0_1 = arith.constant 0 : index
    %c0_2 = arith.constant 0 : index
    %1 = vector.load %arg1[%c0_1, %c0_2] : memref<160x128xf32, #tpu.memory_space<vmem>>, vector<160x128xf32>
    %2 = vector.extract_strided_slice %0 {offsets = [0, 0], sizes = [1, 128], strides = [1, 1]} : vector<15x128xf32> to vector<1x128xf32>
    %3 = vector.extract_strided_slice %0 {offsets = [1, 0], sizes = [1, 128], strides = [1, 1]} : vector<15x128xf32> to vector<1x128xf32>
    %4 = arith.truncf %1 : vector<160x128xf32> to vector<160x128xbf16>
    %c0_3 = arith.constant 0 : index
    %c0_4 = arith.constant 0 : index
    %c0_5 = arith.constant 0 : index
    %5 = vector.load %arg2[%c0_3, %c0_4, %c0_5] : memref<35x128x128xbf16, #tpu.memory_space<vmem>>, vector<1x128x128xbf16>
    %6 = vector.shape_cast %5 : vector<1x128x128xbf16> to vector<128x128xbf16>
    %cst = arith.constant dense<0.000000e+00> : vector<160x128xf32>
    %7 = tpu.matmul %4, %6, %cst {dimension_numbers = #tpu.dot_dimension_numbers<[1], [0], [0], [1], [0, 0, 1, 1], [], []>} : vector<160x128xbf16>, vector<128x128xbf16>, vector<160x128xf32> -> vector<160x128xf32>
    %c1 = arith.constant 1 : index
    %c0_6 = arith.constant 0 : index
    %c0_7 = arith.constant 0 : index
    %8 = vector.load %arg2[%c1, %c0_6, %c0_7] : memref<35x128x128xbf16, #tpu.memory_space<vmem>>, vector<1x128x128xbf16>
    %9 = vector.shape_cast %8 : vector<1x128x128xbf16> to vector<128x128xbf16>
    %cst_8 = arith.constant dense<0.000000e+00> : vector<160x128xf32>
    %10 = tpu.matmul %4, %9, %cst_8 {dimension_numbers = #tpu.dot_dimension_numbers<[1], [0], [0], [1], [0, 0, 1, 1], [], []>} : vector<160x128xbf16>, vector<128x128xbf16>, vector<160x128xf32> -> vector<160x128xf32>
    %c2 = arith.constant 2 : index
    %c0_9 = arith.constant 0 : index
    %c0_10 = arith.constant 0 : index
    %11 = vector.load %arg2[%c2, %c0_9, %c0_10] : memref<35x128x128xbf16, #tpu.memory_space<vmem>>, vector<1x128x128xbf16>
    %12 = vector.shape_cast %11 : vector<1x128x128xbf16> to vector<128x128xbf16>
    %cst_11 = arith.constant dense<0.000000e+00> : vector<160x128xf32>
    %13 = tpu.matmul %4, %12, %cst_11 {dimension_numbers = #tpu.dot_dimension_numbers<[1], [0], [0], [1], [0, 0, 1, 1], [], []>} : vector<160x128xbf16>, vector<128x128xbf16>, vector<160x128xf32> -> vector<160x128xf32>
    %c1_i32 = arith.constant 1 : i32
    %14 = tpu.dynamic_rotate %7 by %c1_i32 dim 0 : vector<160x128xf32>, i32 -> vector<160x128xf32>
    %c0_12 = arith.constant 0 : index
    %c0_13 = arith.constant 0 : index
    %c0_14 = arith.constant 0 : index
    %15 = vector.load %arg4[%c0_12, %c0_13, %c0_14] : memref<2x160x1xf32, #tpu.memory_space<vmem>>, vector<1x160x1xf32>
    %16 = vector.shape_cast %15 : vector<1x160x1xf32> to vector<160x1xf32>
    %17 = vector.broadcast %16 : vector<160x1xf32> to vector<160x128xf32>
    %18 = arith.mulf %14, %17 : vector<160x128xf32>
    %c159_i32 = arith.constant 159 : i32
    %19 = tpu.dynamic_rotate %13 by %c159_i32 dim 0 : vector<160x128xf32>, i32 -> vector<160x128xf32>
    %c1_15 = arith.constant 1 : index
    %c0_16 = arith.constant 0 : index
    %c0_17 = arith.constant 0 : index
    %20 = vector.load %arg4[%c1_15, %c0_16, %c0_17] : memref<2x160x1xf32, #tpu.memory_space<vmem>>, vector<1x160x1xf32>
    %21 = vector.shape_cast %20 : vector<1x160x1xf32> to vector<160x1xf32>
    %22 = vector.broadcast %21 : vector<160x1xf32> to vector<160x128xf32>
    %23 = arith.mulf %19, %22 : vector<160x128xf32>
    %24 = arith.addf %18, %10 : vector<160x128xf32>
    %25 = arith.addf %24, %23 : vector<160x128xf32>
    %26 = vector.broadcast %2 : vector<1x128xf32> to vector<160x128xf32>
    %27 = arith.addf %25, %26 : vector<160x128xf32>
    %cst_18 = arith.constant 0.000000e+00 : f32
    %28 = vector.broadcast %cst_18 : f32 to vector<160x128xf32>
    %29 = arith.maximumf %27, %28 : vector<160x128xf32>
    %30 = arith.truncf %29 : vector<160x128xf32> to vector<160x128xbf16>
    %c3 = arith.constant 3 : index
    %c0_19 = arith.constant 0 : index
    %c0_20 = arith.constant 0 : index
    %31 = vector.load %arg2[%c3, %c0_19, %c0_20] : memref<35x128x128xbf16, #tpu.memory_space<vmem>>, vector<1x128x128xbf16>
    %32 = vector.shape_cast %31 : vector<1x128x128xbf16> to vector<128x128xbf16>
    %cst_21 = arith.constant dense<0.000000e+00> : vector<160x128xf32>
    %33 = tpu.matmul %30, %32, %cst_21 {dimension_numbers = #tpu.dot_dimension_numbers<[1], [0], [0], [1], [0, 0, 1, 1], [], []>} : vector<160x128xbf16>, vector<128x128xbf16>, vector<160x128xf32> -> vector<160x128xf32>
    %c4 = arith.constant 4 : index
    %c0_22 = arith.constant 0 : index
    %c0_23 = arith.constant 0 : index
    %34 = vector.load %arg2[%c4, %c0_22, %c0_23] : memref<35x128x128xbf16, #tpu.memory_space<vmem>>, vector<1x128x128xbf16>
    %35 = vector.shape_cast %34 : vector<1x128x128xbf16> to vector<128x128xbf16>
    %cst_24 = arith.constant dense<0.000000e+00> : vector<160x128xf32>
    %36 = tpu.matmul %30, %35, %cst_24 {dimension_numbers = #tpu.dot_dimension_numbers<[1], [0], [0], [1], [0, 0, 1, 1], [], []>} : vector<160x128xbf16>, vector<128x128xbf16>, vector<160x128xf32> -> vector<160x128xf32>
    %c5 = arith.constant 5 : index
    %c0_25 = arith.constant 0 : index
    %c0_26 = arith.constant 0 : index
    %37 = vector.load %arg2[%c5, %c0_25, %c0_26] : memref<35x128x128xbf16, #tpu.memory_space<vmem>>, vector<1x128x128xbf16>
    %38 = vector.shape_cast %37 : vector<1x128x128xbf16> to vector<128x128xbf16>
    %cst_27 = arith.constant dense<0.000000e+00> : vector<160x128xf32>
    %39 = tpu.matmul %30, %38, %cst_27 {dimension_numbers = #tpu.dot_dimension_numbers<[1], [0], [0], [1], [0, 0, 1, 1], [], []>} : vector<160x128xbf16>, vector<128x128xbf16>, vector<160x128xf32> -> vector<160x128xf32>
    %c1_i32_28 = arith.constant 1 : i32
    %40 = tpu.dynamic_rotate %33 by %c1_i32_28 dim 0 : vector<160x128xf32>, i32 -> vector<160x128xf32>
    %c0_29 = arith.constant 0 : index
    %c0_30 = arith.constant 0 : index
    %c0_31 = arith.constant 0 : index
    %41 = vector.load %arg4[%c0_29, %c0_30, %c0_31] : memref<2x160x1xf32, #tpu.memory_space<vmem>>, vector<1x160x1xf32>
    %42 = vector.shape_cast %41 : vector<1x160x1xf32> to vector<160x1xf32>
    %43 = vector.broadcast %42 : vector<160x1xf32> to vector<160x128xf32>
    %44 = arith.mulf %40, %43 : vector<160x128xf32>
    %c159_i32_32 = arith.constant 159 : i32
    %45 = tpu.dynamic_rotate %39 by %c159_i32_32 dim 0 : vector<160x128xf32>, i32 -> vector<160x128xf32>
    %c1_33 = arith.constant 1 : index
    %c0_34 = arith.constant 0 : index
    %c0_35 = arith.constant 0 : index
    %46 = vector.load %arg4[%c1_33, %c0_34, %c0_35] : memref<2x160x1xf32, #tpu.memory_space<vmem>>, vector<1x160x1xf32>
    %47 = vector.shape_cast %46 : vector<1x160x1xf32> to vector<160x1xf32>
    %48 = vector.broadcast %47 : vector<160x1xf32> to vector<160x128xf32>
    %49 = arith.mulf %45, %48 : vector<160x128xf32>
    %50 = arith.addf %44, %36 : vector<160x128xf32>
    %51 = arith.addf %50, %49 : vector<160x128xf32>
    %52 = vector.broadcast %3 : vector<1x128xf32> to vector<160x128xf32>
    %53 = arith.addf %51, %52 : vector<160x128xf32>
    %54 = vector.extract_strided_slice %0 {offsets = [2, 0], sizes = [1, 128], strides = [1, 1]} : vector<15x128xf32> to vector<1x128xf32>
    %55 = arith.truncf %1 : vector<160x128xf32> to vector<160x128xbf16>
    %c6 = arith.constant 6 : index
    %c0_36 = arith.constant 0 : index
    %c0_37 = arith.constant 0 : index
    %56 = vector.load %arg2[%c6, %c0_36, %c0_37] : memref<35x128x128xbf16, #tpu.memory_space<vmem>>, vector<1x128x128xbf16>
    %57 = vector.shape_cast %56 : vector<1x128x128xbf16> to vector<128x128xbf16>
    %cst_38 = arith.constant dense<0.000000e+00> : vector<160x128xf32>
    %58 = tpu.matmul %55, %57, %cst_38 {dimension_numbers = #tpu.dot_dimension_numbers<[1], [0], [0], [1], [0, 0, 1, 1], [], []>} : vector<160x128xbf16>, vector<128x128xbf16>, vector<160x128xf32> -> vector<160x128xf32>
    %59 = vector.broadcast %54 : vector<1x128xf32> to vector<160x128xf32>
    %60 = arith.addf %58, %59 : vector<160x128xf32>
    %61 = arith.addf %53, %60 : vector<160x128xf32>
    %cst_39 = arith.constant 0.000000e+00 : f32
    %62 = vector.broadcast %cst_39 : f32 to vector<160x128xf32>
    %63 = arith.maximumf %61, %62 : vector<160x128xf32>
    %64 = vector.extract_strided_slice %0 {offsets = [3, 0], sizes = [1, 128], strides = [1, 1]} : vector<15x128xf32> to vector<1x128xf32>
    %65 = vector.extract_strided_slice %0 {offsets = [4, 0], sizes = [1, 128], strides = [1, 1]} : vector<15x128xf32> to vector<1x128xf32>
    %66 = arith.truncf %63 : vector<160x128xf32> to vector<160x128xbf16>
    %c7 = arith.constant 7 : index
    %c0_40 = arith.constant 0 : index
    %c0_41 = arith.constant 0 : index
    %67 = vector.load %arg2[%c7, %c0_40, %c0_41] : memref<35x128x128xbf16, #tpu.memory_space<vmem>>, vector<1x128x128xbf16>
    %68 = vector.shape_cast %67 : vector<1x128x128xbf16> to vector<128x128xbf16>
    %cst_42 = arith.constant dense<0.000000e+00> : vector<160x128xf32>
    %69 = tpu.matmul %66, %68, %cst_42 {dimension_numbers = #tpu.dot_dimension_numbers<[1], [0], [0], [1], [0, 0, 1, 1], [], []>} : vector<160x128xbf16>, vector<128x128xbf16>, vector<160x128xf32> -> vector<160x128xf32>
    %c8 = arith.constant 8 : index
    %c0_43 = arith.constant 0 : index
    %c0_44 = arith.constant 0 : index
    %70 = vector.load %arg2[%c8, %c0_43, %c0_44] : memref<35x128x128xbf16, #tpu.memory_space<vmem>>, vector<1x128x128xbf16>
    %71 = vector.shape_cast %70 : vector<1x128x128xbf16> to vector<128x128xbf16>
    %cst_45 = arith.constant dense<0.000000e+00> : vector<160x128xf32>
    %72 = tpu.matmul %66, %71, %cst_45 {dimension_numbers = #tpu.dot_dimension_numbers<[1], [0], [0], [1], [0, 0, 1, 1], [], []>} : vector<160x128xbf16>, vector<128x128xbf16>, vector<160x128xf32> -> vector<160x128xf32>
    %c9 = arith.constant 9 : index
    %c0_46 = arith.constant 0 : index
    %c0_47 = arith.constant 0 : index
    %73 = vector.load %arg2[%c9, %c0_46, %c0_47] : memref<35x128x128xbf16, #tpu.memory_space<vmem>>, vector<1x128x128xbf16>
    %74 = vector.shape_cast %73 : vector<1x128x128xbf16> to vector<128x128xbf16>
    %cst_48 = arith.constant dense<0.000000e+00> : vector<160x128xf32>
    %75 = tpu.matmul %66, %74, %cst_48 {dimension_numbers = #tpu.dot_dimension_numbers<[1], [0], [0], [1], [0, 0, 1, 1], [], []>} : vector<160x128xbf16>, vector<128x128xbf16>, vector<160x128xf32> -> vector<160x128xf32>
    %c1_i32_49 = arith.constant 1 : i32
    %76 = tpu.dynamic_rotate %69 by %c1_i32_49 dim 0 : vector<160x128xf32>, i32 -> vector<160x128xf32>
    %c0_50 = arith.constant 0 : index
    %c0_51 = arith.constant 0 : index
    %c0_52 = arith.constant 0 : index
    %77 = vector.load %arg4[%c0_50, %c0_51, %c0_52] : memref<2x160x1xf32, #tpu.memory_space<vmem>>, vector<1x160x1xf32>
    %78 = vector.shape_cast %77 : vector<1x160x1xf32> to vector<160x1xf32>
    %79 = vector.broadcast %78 : vector<160x1xf32> to vector<160x128xf32>
    %80 = arith.mulf %76, %79 : vector<160x128xf32>
    %c159_i32_53 = arith.constant 159 : i32
    %81 = tpu.dynamic_rotate %75 by %c159_i32_53 dim 0 : vector<160x128xf32>, i32 -> vector<160x128xf32>
    %c1_54 = arith.constant 1 : index
    %c0_55 = arith.constant 0 : index
    %c0_56 = arith.constant 0 : index
    %82 = vector.load %arg4[%c1_54, %c0_55, %c0_56] : memref<2x160x1xf32, #tpu.memory_space<vmem>>, vector<1x160x1xf32>
    %83 = vector.shape_cast %82 : vector<1x160x1xf32> to vector<160x1xf32>
    %84 = vector.broadcast %83 : vector<160x1xf32> to vector<160x128xf32>
    %85 = arith.mulf %81, %84 : vector<160x128xf32>
    %86 = arith.addf %80, %72 : vector<160x128xf32>
    %87 = arith.addf %86, %85 : vector<160x128xf32>
    %88 = vector.broadcast %64 : vector<1x128xf32> to vector<160x128xf32>
    %89 = arith.addf %87, %88 : vector<160x128xf32>
    %c0_57 = arith.constant 0 : index
    %c0_58 = arith.constant 0 : index
    %90 = vector.load %arg7[%c0_57, %c0_58] : memref<80x160xf32, #tpu.memory_space<vmem>>, vector<80x160xf32>
    %cst_59 = arith.constant dense<0.000000e+00> : vector<80x128xf32>
    %91 = tpu.matmul %90, %89, %cst_59 {dimension_numbers = #tpu.dot_dimension_numbers<[1], [0], [0], [1], [0, 0, 1, 1], [], []>} : vector<80x160xf32>, vector<160x128xf32>, vector<80x128xf32> -> vector<80x128xf32>
    %cst_60 = arith.constant dense<0.000000e+00> : vector<80x128xf32>
    %92 = tpu.matmul %90, %63, %cst_60 {dimension_numbers = #tpu.dot_dimension_numbers<[1], [0], [0], [1], [0, 0, 1, 1], [], []>} : vector<80x160xf32>, vector<160x128xf32>, vector<80x128xf32> -> vector<80x128xf32>
    %cst_61 = arith.constant 0.000000e+00 : f32
    %93 = vector.broadcast %cst_61 : f32 to vector<80x128xf32>
    %94 = arith.maximumf %91, %93 : vector<80x128xf32>
    %95 = arith.truncf %94 : vector<80x128xf32> to vector<80x128xbf16>
    %c10 = arith.constant 10 : index
    %c0_62 = arith.constant 0 : index
    %c0_63 = arith.constant 0 : index
    %96 = vector.load %arg2[%c10, %c0_62, %c0_63] : memref<35x128x128xbf16, #tpu.memory_space<vmem>>, vector<1x128x128xbf16>
    %97 = vector.shape_cast %96 : vector<1x128x128xbf16> to vector<128x128xbf16>
    %cst_64 = arith.constant dense<0.000000e+00> : vector<80x128xf32>
    %98 = tpu.matmul %95, %97, %cst_64 {dimension_numbers = #tpu.dot_dimension_numbers<[1], [0], [0], [1], [0, 0, 1, 1], [], []>} : vector<80x128xbf16>, vector<128x128xbf16>, vector<80x128xf32> -> vector<80x128xf32>
    %c11 = arith.constant 11 : index
    %c0_65 = arith.constant 0 : index
    %c0_66 = arith.constant 0 : index
    %99 = vector.load %arg2[%c11, %c0_65, %c0_66] : memref<35x128x128xbf16, #tpu.memory_space<vmem>>, vector<1x128x128xbf16>
    %100 = vector.shape_cast %99 : vector<1x128x128xbf16> to vector<128x128xbf16>
    %cst_67 = arith.constant dense<0.000000e+00> : vector<80x128xf32>
    %101 = tpu.matmul %95, %100, %cst_67 {dimension_numbers = #tpu.dot_dimension_numbers<[1], [0], [0], [1], [0, 0, 1, 1], [], []>} : vector<80x128xbf16>, vector<128x128xbf16>, vector<80x128xf32> -> vector<80x128xf32>
    %c12 = arith.constant 12 : index
    %c0_68 = arith.constant 0 : index
    %c0_69 = arith.constant 0 : index
    %102 = vector.load %arg2[%c12, %c0_68, %c0_69] : memref<35x128x128xbf16, #tpu.memory_space<vmem>>, vector<1x128x128xbf16>
    %103 = vector.shape_cast %102 : vector<1x128x128xbf16> to vector<128x128xbf16>
    %cst_70 = arith.constant dense<0.000000e+00> : vector<80x128xf32>
    %104 = tpu.matmul %95, %103, %cst_70 {dimension_numbers = #tpu.dot_dimension_numbers<[1], [0], [0], [1], [0, 0, 1, 1], [], []>} : vector<80x128xbf16>, vector<128x128xbf16>, vector<80x128xf32> -> vector<80x128xf32>
    %c1_i32_71 = arith.constant 1 : i32
    %105 = tpu.dynamic_rotate %98 by %c1_i32_71 dim 0 : vector<80x128xf32>, i32 -> vector<80x128xf32>
    %c0_72 = arith.constant 0 : index
    %c0_73 = arith.constant 0 : index
    %c0_74 = arith.constant 0 : index
    %106 = vector.load %arg5[%c0_72, %c0_73, %c0_74] : memref<2x80x1xf32, #tpu.memory_space<vmem>>, vector<1x80x1xf32>
    %107 = vector.shape_cast %106 : vector<1x80x1xf32> to vector<80x1xf32>
    %108 = vector.broadcast %107 : vector<80x1xf32> to vector<80x128xf32>
    %109 = arith.mulf %105, %108 : vector<80x128xf32>
    %c79_i32 = arith.constant 79 : i32
    %110 = tpu.dynamic_rotate %104 by %c79_i32 dim 0 : vector<80x128xf32>, i32 -> vector<80x128xf32>
    %c1_75 = arith.constant 1 : index
    %c0_76 = arith.constant 0 : index
    %c0_77 = arith.constant 0 : index
    %111 = vector.load %arg5[%c1_75, %c0_76, %c0_77] : memref<2x80x1xf32, #tpu.memory_space<vmem>>, vector<1x80x1xf32>
    %112 = vector.shape_cast %111 : vector<1x80x1xf32> to vector<80x1xf32>
    %113 = vector.broadcast %112 : vector<80x1xf32> to vector<80x128xf32>
    %114 = arith.mulf %110, %113 : vector<80x128xf32>
    %115 = arith.addf %109, %101 : vector<80x128xf32>
    %116 = arith.addf %115, %114 : vector<80x128xf32>
    %117 = vector.broadcast %65 : vector<1x128xf32> to vector<80x128xf32>
    %118 = arith.addf %116, %117 : vector<80x128xf32>
    %119 = vector.extract_strided_slice %0 {offsets = [5, 0], sizes = [1, 128], strides = [1, 1]} : vector<15x128xf32> to vector<1x128xf32>
    %120 = arith.truncf %92 : vector<80x128xf32> to vector<80x128xbf16>
    %c13 = arith.constant 13 : index
    %c0_78 = arith.constant 0 : index
    %c0_79 = arith.constant 0 : index
    %121 = vector.load %arg2[%c13, %c0_78, %c0_79] : memref<35x128x128xbf16, #tpu.memory_space<vmem>>, vector<1x128x128xbf16>
    %122 = vector.shape_cast %121 : vector<1x128x128xbf16> to vector<128x128xbf16>
    %cst_80 = arith.constant dense<0.000000e+00> : vector<80x128xf32>
    %123 = tpu.matmul %120, %122, %cst_80 {dimension_numbers = #tpu.dot_dimension_numbers<[1], [0], [0], [1], [0, 0, 1, 1], [], []>} : vector<80x128xbf16>, vector<128x128xbf16>, vector<80x128xf32> -> vector<80x128xf32>
    %124 = vector.broadcast %119 : vector<1x128xf32> to vector<80x128xf32>
    %125 = arith.addf %123, %124 : vector<80x128xf32>
    %126 = arith.addf %118, %125 : vector<80x128xf32>
    %cst_81 = arith.constant 0.000000e+00 : f32
    %127 = vector.broadcast %cst_81 : f32 to vector<80x128xf32>
    %128 = arith.maximumf %126, %127 : vector<80x128xf32>
    %129 = vector.extract_strided_slice %0 {offsets = [6, 0], sizes = [1, 128], strides = [1, 1]} : vector<15x128xf32> to vector<1x128xf32>
    %130 = vector.extract_strided_slice %0 {offsets = [7, 0], sizes = [1, 128], strides = [1, 1]} : vector<15x128xf32> to vector<1x128xf32>
    %131 = arith.truncf %128 : vector<80x128xf32> to vector<80x128xbf16>
    %c14 = arith.constant 14 : index
    %c0_82 = arith.constant 0 : index
    %c0_83 = arith.constant 0 : index
    %132 = vector.load %arg2[%c14, %c0_82, %c0_83] : memref<35x128x128xbf16, #tpu.memory_space<vmem>>, vector<1x128x128xbf16>
    %133 = vector.shape_cast %132 : vector<1x128x128xbf16> to vector<128x128xbf16>
    %cst_84 = arith.constant dense<0.000000e+00> : vector<80x128xf32>
    %134 = tpu.matmul %131, %133, %cst_84 {dimension_numbers = #tpu.dot_dimension_numbers<[1], [0], [0], [1], [0, 0, 1, 1], [], []>} : vector<80x128xbf16>, vector<128x128xbf16>, vector<80x128xf32> -> vector<80x128xf32>
    %c15 = arith.constant 15 : index
    %c0_85 = arith.constant 0 : index
    %c0_86 = arith.constant 0 : index
    %135 = vector.load %arg2[%c15, %c0_85, %c0_86] : memref<35x128x128xbf16, #tpu.memory_space<vmem>>, vector<1x128x128xbf16>
    %136 = vector.shape_cast %135 : vector<1x128x128xbf16> to vector<128x128xbf16>
    %cst_87 = arith.constant dense<0.000000e+00> : vector<80x128xf32>
    %137 = tpu.matmul %131, %136, %cst_87 {dimension_numbers = #tpu.dot_dimension_numbers<[1], [0], [0], [1], [0, 0, 1, 1], [], []>} : vector<80x128xbf16>, vector<128x128xbf16>, vector<80x128xf32> -> vector<80x128xf32>
    %c16 = arith.constant 16 : index
    %c0_88 = arith.constant 0 : index
    %c0_89 = arith.constant 0 : index
    %138 = vector.load %arg2[%c16, %c0_88, %c0_89] : memref<35x128x128xbf16, #tpu.memory_space<vmem>>, vector<1x128x128xbf16>
    %139 = vector.shape_cast %138 : vector<1x128x128xbf16> to vector<128x128xbf16>
    %cst_90 = arith.constant dense<0.000000e+00> : vector<80x128xf32>
    %140 = tpu.matmul %131, %139, %cst_90 {dimension_numbers = #tpu.dot_dimension_numbers<[1], [0], [0], [1], [0, 0, 1, 1], [], []>} : vector<80x128xbf16>, vector<128x128xbf16>, vector<80x128xf32> -> vector<80x128xf32>
    %c1_i32_91 = arith.constant 1 : i32
    %141 = tpu.dynamic_rotate %134 by %c1_i32_91 dim 0 : vector<80x128xf32>, i32 -> vector<80x128xf32>
    %c0_92 = arith.constant 0 : index
    %c0_93 = arith.constant 0 : index
    %c0_94 = arith.constant 0 : index
    %142 = vector.load %arg5[%c0_92, %c0_93, %c0_94] : memref<2x80x1xf32, #tpu.memory_space<vmem>>, vector<1x80x1xf32>
    %143 = vector.shape_cast %142 : vector<1x80x1xf32> to vector<80x1xf32>
    %144 = vector.broadcast %143 : vector<80x1xf32> to vector<80x128xf32>
    %145 = arith.mulf %141, %144 : vector<80x128xf32>
    %c79_i32_95 = arith.constant 79 : i32
    %146 = tpu.dynamic_rotate %140 by %c79_i32_95 dim 0 : vector<80x128xf32>, i32 -> vector<80x128xf32>
    %c1_96 = arith.constant 1 : index
    %c0_97 = arith.constant 0 : index
    %c0_98 = arith.constant 0 : index
    %147 = vector.load %arg5[%c1_96, %c0_97, %c0_98] : memref<2x80x1xf32, #tpu.memory_space<vmem>>, vector<1x80x1xf32>
    %148 = vector.shape_cast %147 : vector<1x80x1xf32> to vector<80x1xf32>
    %149 = vector.broadcast %148 : vector<80x1xf32> to vector<80x128xf32>
    %150 = arith.mulf %146, %149 : vector<80x128xf32>
    %151 = arith.addf %145, %137 : vector<80x128xf32>
    %152 = arith.addf %151, %150 : vector<80x128xf32>
    %153 = vector.broadcast %129 : vector<1x128xf32> to vector<80x128xf32>
    %154 = arith.addf %152, %153 : vector<80x128xf32>
    %c0_99 = arith.constant 0 : index
    %c0_100 = arith.constant 0 : index
    %155 = vector.load %arg8[%c0_99, %c0_100] : memref<40x80xf32, #tpu.memory_space<vmem>>, vector<40x80xf32>
    %cst_101 = arith.constant dense<0.000000e+00> : vector<40x128xf32>
    %156 = tpu.matmul %155, %154, %cst_101 {dimension_numbers = #tpu.dot_dimension_numbers<[1], [0], [0], [1], [0, 0, 1, 1], [], []>} : vector<40x80xf32>, vector<80x128xf32>, vector<40x128xf32> -> vector<40x128xf32>
    %cst_102 = arith.constant dense<0.000000e+00> : vector<40x128xf32>
    %157 = tpu.matmul %155, %128, %cst_102 {dimension_numbers = #tpu.dot_dimension_numbers<[1], [0], [0], [1], [0, 0, 1, 1], [], []>} : vector<40x80xf32>, vector<80x128xf32>, vector<40x128xf32> -> vector<40x128xf32>
    %cst_103 = arith.constant 0.000000e+00 : f32
    %158 = vector.broadcast %cst_103 : f32 to vector<40x128xf32>
    %159 = arith.maximumf %156, %158 : vector<40x128xf32>
    %160 = arith.truncf %159 : vector<40x128xf32> to vector<40x128xbf16>
    %c17 = arith.constant 17 : index
    %c0_104 = arith.constant 0 : index
    %c0_105 = arith.constant 0 : index
    %161 = vector.load %arg2[%c17, %c0_104, %c0_105] : memref<35x128x128xbf16, #tpu.memory_space<vmem>>, vector<1x128x128xbf16>
    %162 = vector.shape_cast %161 : vector<1x128x128xbf16> to vector<128x128xbf16>
    %cst_106 = arith.constant dense<0.000000e+00> : vector<40x128xf32>
    %163 = tpu.matmul %160, %162, %cst_106 {dimension_numbers = #tpu.dot_dimension_numbers<[1], [0], [0], [1], [0, 0, 1, 1], [], []>} : vector<40x128xbf16>, vector<128x128xbf16>, vector<40x128xf32> -> vector<40x128xf32>
    %c18 = arith.constant 18 : index
    %c0_107 = arith.constant 0 : index
    %c0_108 = arith.constant 0 : index
    %164 = vector.load %arg2[%c18, %c0_107, %c0_108] : memref<35x128x128xbf16, #tpu.memory_space<vmem>>, vector<1x128x128xbf16>
    %165 = vector.shape_cast %164 : vector<1x128x128xbf16> to vector<128x128xbf16>
    %cst_109 = arith.constant dense<0.000000e+00> : vector<40x128xf32>
    %166 = tpu.matmul %160, %165, %cst_109 {dimension_numbers = #tpu.dot_dimension_numbers<[1], [0], [0], [1], [0, 0, 1, 1], [], []>} : vector<40x128xbf16>, vector<128x128xbf16>, vector<40x128xf32> -> vector<40x128xf32>
    %c19 = arith.constant 19 : index
    %c0_110 = arith.constant 0 : index
    %c0_111 = arith.constant 0 : index
    %167 = vector.load %arg2[%c19, %c0_110, %c0_111] : memref<35x128x128xbf16, #tpu.memory_space<vmem>>, vector<1x128x128xbf16>
    %168 = vector.shape_cast %167 : vector<1x128x128xbf16> to vector<128x128xbf16>
    %cst_112 = arith.constant dense<0.000000e+00> : vector<40x128xf32>
    %169 = tpu.matmul %160, %168, %cst_112 {dimension_numbers = #tpu.dot_dimension_numbers<[1], [0], [0], [1], [0, 0, 1, 1], [], []>} : vector<40x128xbf16>, vector<128x128xbf16>, vector<40x128xf32> -> vector<40x128xf32>
    %c1_i32_113 = arith.constant 1 : i32
    %170 = tpu.dynamic_rotate %163 by %c1_i32_113 dim 0 : vector<40x128xf32>, i32 -> vector<40x128xf32>
    %c0_114 = arith.constant 0 : index
    %c0_115 = arith.constant 0 : index
    %c0_116 = arith.constant 0 : index
    %171 = vector.load %arg6[%c0_114, %c0_115, %c0_116] : memref<2x40x1xf32, #tpu.memory_space<vmem>>, vector<1x40x1xf32>
    %172 = vector.shape_cast %171 : vector<1x40x1xf32> to vector<40x1xf32>
    %173 = vector.broadcast %172 : vector<40x1xf32> to vector<40x128xf32>
    %174 = arith.mulf %170, %173 : vector<40x128xf32>
    %c39_i32 = arith.constant 39 : i32
    %175 = tpu.dynamic_rotate %169 by %c39_i32 dim 0 : vector<40x128xf32>, i32 -> vector<40x128xf32>
    %c1_117 = arith.constant 1 : index
    %c0_118 = arith.constant 0 : index
    %c0_119 = arith.constant 0 : index
    %176 = vector.load %arg6[%c1_117, %c0_118, %c0_119] : memref<2x40x1xf32, #tpu.memory_space<vmem>>, vector<1x40x1xf32>
    %177 = vector.shape_cast %176 : vector<1x40x1xf32> to vector<40x1xf32>
    %178 = vector.broadcast %177 : vector<40x1xf32> to vector<40x128xf32>
    %179 = arith.mulf %175, %178 : vector<40x128xf32>
    %180 = arith.addf %174, %166 : vector<40x128xf32>
    %181 = arith.addf %180, %179 : vector<40x128xf32>
    %182 = vector.broadcast %130 : vector<1x128xf32> to vector<40x128xf32>
    %183 = arith.addf %181, %182 : vector<40x128xf32>
    %184 = vector.extract_strided_slice %0 {offsets = [8, 0], sizes = [1, 128], strides = [1, 1]} : vector<15x128xf32> to vector<1x128xf32>
    %185 = arith.truncf %157 : vector<40x128xf32> to vector<40x128xbf16>
    %c20 = arith.constant 20 : index
    %c0_120 = arith.constant 0 : index
    %c0_121 = arith.constant 0 : index
    %186 = vector.load %arg2[%c20, %c0_120, %c0_121] : memref<35x128x128xbf16, #tpu.memory_space<vmem>>, vector<1x128x128xbf16>
    %187 = vector.shape_cast %186 : vector<1x128x128xbf16> to vector<128x128xbf16>
    %cst_122 = arith.constant dense<0.000000e+00> : vector<40x128xf32>
    %188 = tpu.matmul %185, %187, %cst_122 {dimension_numbers = #tpu.dot_dimension_numbers<[1], [0], [0], [1], [0, 0, 1, 1], [], []>} : vector<40x128xbf16>, vector<128x128xbf16>, vector<40x128xf32> -> vector<40x128xf32>
    %189 = vector.broadcast %184 : vector<1x128xf32> to vector<40x128xf32>
    %190 = arith.addf %188, %189 : vector<40x128xf32>
    %191 = arith.addf %183, %190 : vector<40x128xf32>
    %cst_123 = arith.constant 0.000000e+00 : f32
    %192 = vector.broadcast %cst_123 : f32 to vector<40x128xf32>
    %193 = arith.maximumf %191, %192 : vector<40x128xf32>
    %194 = vector.extract_strided_slice %0 {offsets = [9, 0], sizes = [1, 128], strides = [1, 1]} : vector<15x128xf32> to vector<1x128xf32>
    %195 = vector.extract_strided_slice %0 {offsets = [10, 0], sizes = [1, 128], strides = [1, 1]} : vector<15x128xf32> to vector<1x128xf32>
    %196 = arith.truncf %193 : vector<40x128xf32> to vector<40x128xbf16>
    %c21 = arith.constant 21 : index
    %c0_124 = arith.constant 0 : index
    %c0_125 = arith.constant 0 : index
    %197 = vector.load %arg2[%c21, %c0_124, %c0_125] : memref<35x128x128xbf16, #tpu.memory_space<vmem>>, vector<1x128x128xbf16>
    %198 = vector.shape_cast %197 : vector<1x128x128xbf16> to vector<128x128xbf16>
    %cst_126 = arith.constant dense<0.000000e+00> : vector<40x128xf32>
    %199 = tpu.matmul %196, %198, %cst_126 {dimension_numbers = #tpu.dot_dimension_numbers<[1], [0], [0], [1], [0, 0, 1, 1], [], []>} : vector<40x128xbf16>, vector<128x128xbf16>, vector<40x128xf32> -> vector<40x128xf32>
    %c22 = arith.constant 22 : index
    %c0_127 = arith.constant 0 : index
    %c0_128 = arith.constant 0 : index
    %200 = vector.load %arg2[%c22, %c0_127, %c0_128] : memref<35x128x128xbf16, #tpu.memory_space<vmem>>, vector<1x128x128xbf16>
    %201 = vector.shape_cast %200 : vector<1x128x128xbf16> to vector<128x128xbf16>
    %cst_129 = arith.constant dense<0.000000e+00> : vector<40x128xf32>
    %202 = tpu.matmul %196, %201, %cst_129 {dimension_numbers = #tpu.dot_dimension_numbers<[1], [0], [0], [1], [0, 0, 1, 1], [], []>} : vector<40x128xbf16>, vector<128x128xbf16>, vector<40x128xf32> -> vector<40x128xf32>
    %c23 = arith.constant 23 : index
    %c0_130 = arith.constant 0 : index
    %c0_131 = arith.constant 0 : index
    %203 = vector.load %arg2[%c23, %c0_130, %c0_131] : memref<35x128x128xbf16, #tpu.memory_space<vmem>>, vector<1x128x128xbf16>
    %204 = vector.shape_cast %203 : vector<1x128x128xbf16> to vector<128x128xbf16>
    %cst_132 = arith.constant dense<0.000000e+00> : vector<40x128xf32>
    %205 = tpu.matmul %196, %204, %cst_132 {dimension_numbers = #tpu.dot_dimension_numbers<[1], [0], [0], [1], [0, 0, 1, 1], [], []>} : vector<40x128xbf16>, vector<128x128xbf16>, vector<40x128xf32> -> vector<40x128xf32>
    %c1_i32_133 = arith.constant 1 : i32
    %206 = tpu.dynamic_rotate %199 by %c1_i32_133 dim 0 : vector<40x128xf32>, i32 -> vector<40x128xf32>
    %c0_134 = arith.constant 0 : index
    %c0_135 = arith.constant 0 : index
    %c0_136 = arith.constant 0 : index
    %207 = vector.load %arg6[%c0_134, %c0_135, %c0_136] : memref<2x40x1xf32, #tpu.memory_space<vmem>>, vector<1x40x1xf32>
    %208 = vector.shape_cast %207 : vector<1x40x1xf32> to vector<40x1xf32>
    %209 = vector.broadcast %208 : vector<40x1xf32> to vector<40x128xf32>
    %210 = arith.mulf %206, %209 : vector<40x128xf32>
    %c39_i32_137 = arith.constant 39 : i32
    %211 = tpu.dynamic_rotate %205 by %c39_i32_137 dim 0 : vector<40x128xf32>, i32 -> vector<40x128xf32>
    %c1_138 = arith.constant 1 : index
    %c0_139 = arith.constant 0 : index
    %c0_140 = arith.constant 0 : index
    %212 = vector.load %arg6[%c1_138, %c0_139, %c0_140] : memref<2x40x1xf32, #tpu.memory_space<vmem>>, vector<1x40x1xf32>
    %213 = vector.shape_cast %212 : vector<1x40x1xf32> to vector<40x1xf32>
    %214 = vector.broadcast %213 : vector<40x1xf32> to vector<40x128xf32>
    %215 = arith.mulf %211, %214 : vector<40x128xf32>
    %216 = arith.addf %210, %202 : vector<40x128xf32>
    %217 = arith.addf %216, %215 : vector<40x128xf32>
    %218 = vector.broadcast %194 : vector<1x128xf32> to vector<40x128xf32>
    %219 = arith.addf %217, %218 : vector<40x128xf32>
    %cst_141 = arith.constant 0.000000e+00 : f32
    %220 = vector.broadcast %cst_141 : f32 to vector<40x128xf32>
    %221 = arith.maximumf %219, %220 : vector<40x128xf32>
    %222 = arith.truncf %221 : vector<40x128xf32> to vector<40x128xbf16>
    %c24 = arith.constant 24 : index
    %c0_142 = arith.constant 0 : index
    %c0_143 = arith.constant 0 : index
    %223 = vector.load %arg2[%c24, %c0_142, %c0_143] : memref<35x128x128xbf16, #tpu.memory_space<vmem>>, vector<1x128x128xbf16>
    %224 = vector.shape_cast %223 : vector<1x128x128xbf16> to vector<128x128xbf16>
    %cst_144 = arith.constant dense<0.000000e+00> : vector<40x128xf32>
    %225 = tpu.matmul %222, %224, %cst_144 {dimension_numbers = #tpu.dot_dimension_numbers<[1], [0], [0], [1], [0, 0, 1, 1], [], []>} : vector<40x128xbf16>, vector<128x128xbf16>, vector<40x128xf32> -> vector<40x128xf32>
    %c25 = arith.constant 25 : index
    %c0_145 = arith.constant 0 : index
    %c0_146 = arith.constant 0 : index
    %226 = vector.load %arg2[%c25, %c0_145, %c0_146] : memref<35x128x128xbf16, #tpu.memory_space<vmem>>, vector<1x128x128xbf16>
    %227 = vector.shape_cast %226 : vector<1x128x128xbf16> to vector<128x128xbf16>
    %cst_147 = arith.constant dense<0.000000e+00> : vector<40x128xf32>
    %228 = tpu.matmul %222, %227, %cst_147 {dimension_numbers = #tpu.dot_dimension_numbers<[1], [0], [0], [1], [0, 0, 1, 1], [], []>} : vector<40x128xbf16>, vector<128x128xbf16>, vector<40x128xf32> -> vector<40x128xf32>
    %c26 = arith.constant 26 : index
    %c0_148 = arith.constant 0 : index
    %c0_149 = arith.constant 0 : index
    %229 = vector.load %arg2[%c26, %c0_148, %c0_149] : memref<35x128x128xbf16, #tpu.memory_space<vmem>>, vector<1x128x128xbf16>
    %230 = vector.shape_cast %229 : vector<1x128x128xbf16> to vector<128x128xbf16>
    %cst_150 = arith.constant dense<0.000000e+00> : vector<40x128xf32>
    %231 = tpu.matmul %222, %230, %cst_150 {dimension_numbers = #tpu.dot_dimension_numbers<[1], [0], [0], [1], [0, 0, 1, 1], [], []>} : vector<40x128xbf16>, vector<128x128xbf16>, vector<40x128xf32> -> vector<40x128xf32>
    %c1_i32_151 = arith.constant 1 : i32
    %232 = tpu.dynamic_rotate %225 by %c1_i32_151 dim 0 : vector<40x128xf32>, i32 -> vector<40x128xf32>
    %c0_152 = arith.constant 0 : index
    %c0_153 = arith.constant 0 : index
    %c0_154 = arith.constant 0 : index
    %233 = vector.load %arg6[%c0_152, %c0_153, %c0_154] : memref<2x40x1xf32, #tpu.memory_space<vmem>>, vector<1x40x1xf32>
    %234 = vector.shape_cast %233 : vector<1x40x1xf32> to vector<40x1xf32>
    %235 = vector.broadcast %234 : vector<40x1xf32> to vector<40x128xf32>
    %236 = arith.mulf %232, %235 : vector<40x128xf32>
    %c39_i32_155 = arith.constant 39 : i32
    %237 = tpu.dynamic_rotate %231 by %c39_i32_155 dim 0 : vector<40x128xf32>, i32 -> vector<40x128xf32>
    %c1_156 = arith.constant 1 : index
    %c0_157 = arith.constant 0 : index
    %c0_158 = arith.constant 0 : index
    %238 = vector.load %arg6[%c1_156, %c0_157, %c0_158] : memref<2x40x1xf32, #tpu.memory_space<vmem>>, vector<1x40x1xf32>
    %239 = vector.shape_cast %238 : vector<1x40x1xf32> to vector<40x1xf32>
    %240 = vector.broadcast %239 : vector<40x1xf32> to vector<40x128xf32>
    %241 = arith.mulf %237, %240 : vector<40x128xf32>
    %242 = arith.addf %236, %228 : vector<40x128xf32>
    %243 = arith.addf %242, %241 : vector<40x128xf32>
    %244 = vector.broadcast %195 : vector<1x128xf32> to vector<40x128xf32>
    %245 = arith.addf %243, %244 : vector<40x128xf32>
    %246 = vector.extract_strided_slice %0 {offsets = [11, 0], sizes = [1, 128], strides = [1, 1]} : vector<15x128xf32> to vector<1x128xf32>
    %247 = arith.truncf %193 : vector<40x128xf32> to vector<40x128xbf16>
    %c27 = arith.constant 27 : index
    %c0_159 = arith.constant 0 : index
    %c0_160 = arith.constant 0 : index
    %248 = vector.load %arg2[%c27, %c0_159, %c0_160] : memref<35x128x128xbf16, #tpu.memory_space<vmem>>, vector<1x128x128xbf16>
    %249 = vector.shape_cast %248 : vector<1x128x128xbf16> to vector<128x128xbf16>
    %cst_161 = arith.constant dense<0.000000e+00> : vector<40x128xf32>
    %250 = tpu.matmul %247, %249, %cst_161 {dimension_numbers = #tpu.dot_dimension_numbers<[1], [0], [0], [1], [0, 0, 1, 1], [], []>} : vector<40x128xbf16>, vector<128x128xbf16>, vector<40x128xf32> -> vector<40x128xf32>
    %251 = vector.broadcast %246 : vector<1x128xf32> to vector<40x128xf32>
    %252 = arith.addf %250, %251 : vector<40x128xf32>
    %253 = arith.addf %245, %252 : vector<40x128xf32>
    %cst_162 = arith.constant 0.000000e+00 : f32
    %254 = vector.broadcast %cst_162 : f32 to vector<40x128xf32>
    %255 = arith.maximumf %253, %254 : vector<40x128xf32>
    %256 = vector.extract_strided_slice %0 {offsets = [12, 0], sizes = [1, 128], strides = [1, 1]} : vector<15x128xf32> to vector<1x128xf32>
    %257 = vector.extract_strided_slice %0 {offsets = [13, 0], sizes = [1, 128], strides = [1, 1]} : vector<15x128xf32> to vector<1x128xf32>
    %258 = arith.truncf %255 : vector<40x128xf32> to vector<40x128xbf16>
    %c28 = arith.constant 28 : index
    %c0_163 = arith.constant 0 : index
    %c0_164 = arith.constant 0 : index
    %259 = vector.load %arg2[%c28, %c0_163, %c0_164] : memref<35x128x128xbf16, #tpu.memory_space<vmem>>, vector<1x128x128xbf16>
    %260 = vector.shape_cast %259 : vector<1x128x128xbf16> to vector<128x128xbf16>
    %cst_165 = arith.constant dense<0.000000e+00> : vector<40x128xf32>
    %261 = tpu.matmul %258, %260, %cst_165 {dimension_numbers = #tpu.dot_dimension_numbers<[1], [0], [0], [1], [0, 0, 1, 1], [], []>} : vector<40x128xbf16>, vector<128x128xbf16>, vector<40x128xf32> -> vector<40x128xf32>
    %c29 = arith.constant 29 : index
    %c0_166 = arith.constant 0 : index
    %c0_167 = arith.constant 0 : index
    %262 = vector.load %arg2[%c29, %c0_166, %c0_167] : memref<35x128x128xbf16, #tpu.memory_space<vmem>>, vector<1x128x128xbf16>
    %263 = vector.shape_cast %262 : vector<1x128x128xbf16> to vector<128x128xbf16>
    %cst_168 = arith.constant dense<0.000000e+00> : vector<40x128xf32>
    %264 = tpu.matmul %258, %263, %cst_168 {dimension_numbers = #tpu.dot_dimension_numbers<[1], [0], [0], [1], [0, 0, 1, 1], [], []>} : vector<40x128xbf16>, vector<128x128xbf16>, vector<40x128xf32> -> vector<40x128xf32>
    %c30 = arith.constant 30 : index
    %c0_169 = arith.constant 0 : index
    %c0_170 = arith.constant 0 : index
    %265 = vector.load %arg2[%c30, %c0_169, %c0_170] : memref<35x128x128xbf16, #tpu.memory_space<vmem>>, vector<1x128x128xbf16>
    %266 = vector.shape_cast %265 : vector<1x128x128xbf16> to vector<128x128xbf16>
    %cst_171 = arith.constant dense<0.000000e+00> : vector<40x128xf32>
    %267 = tpu.matmul %258, %266, %cst_171 {dimension_numbers = #tpu.dot_dimension_numbers<[1], [0], [0], [1], [0, 0, 1, 1], [], []>} : vector<40x128xbf16>, vector<128x128xbf16>, vector<40x128xf32> -> vector<40x128xf32>
    %c1_i32_172 = arith.constant 1 : i32
    %268 = tpu.dynamic_rotate %261 by %c1_i32_172 dim 0 : vector<40x128xf32>, i32 -> vector<40x128xf32>
    %c0_173 = arith.constant 0 : index
    %c0_174 = arith.constant 0 : index
    %c0_175 = arith.constant 0 : index
    %269 = vector.load %arg6[%c0_173, %c0_174, %c0_175] : memref<2x40x1xf32, #tpu.memory_space<vmem>>, vector<1x40x1xf32>
    %270 = vector.shape_cast %269 : vector<1x40x1xf32> to vector<40x1xf32>
    %271 = vector.broadcast %270 : vector<40x1xf32> to vector<40x128xf32>
    %272 = arith.mulf %268, %271 : vector<40x128xf32>
    %c39_i32_176 = arith.constant 39 : i32
    %273 = tpu.dynamic_rotate %267 by %c39_i32_176 dim 0 : vector<40x128xf32>, i32 -> vector<40x128xf32>
    %c1_177 = arith.constant 1 : index
    %c0_178 = arith.constant 0 : index
    %c0_179 = arith.constant 0 : index
    %274 = vector.load %arg6[%c1_177, %c0_178, %c0_179] : memref<2x40x1xf32, #tpu.memory_space<vmem>>, vector<1x40x1xf32>
    %275 = vector.shape_cast %274 : vector<1x40x1xf32> to vector<40x1xf32>
    %276 = vector.broadcast %275 : vector<40x1xf32> to vector<40x128xf32>
    %277 = arith.mulf %273, %276 : vector<40x128xf32>
    %278 = arith.addf %272, %264 : vector<40x128xf32>
    %279 = arith.addf %278, %277 : vector<40x128xf32>
    %280 = vector.broadcast %256 : vector<1x128xf32> to vector<40x128xf32>
    %281 = arith.addf %279, %280 : vector<40x128xf32>
    %cst_180 = arith.constant 0.000000e+00 : f32
    %282 = vector.broadcast %cst_180 : f32 to vector<40x128xf32>
    %283 = arith.maximumf %281, %282 : vector<40x128xf32>
    %284 = arith.truncf %283 : vector<40x128xf32> to vector<40x128xbf16>
    %c31 = arith.constant 31 : index
    %c0_181 = arith.constant 0 : index
    %c0_182 = arith.constant 0 : index
    %285 = vector.load %arg2[%c31, %c0_181, %c0_182] : memref<35x128x128xbf16, #tpu.memory_space<vmem>>, vector<1x128x128xbf16>
    %286 = vector.shape_cast %285 : vector<1x128x128xbf16> to vector<128x128xbf16>
    %cst_183 = arith.constant dense<0.000000e+00> : vector<40x128xf32>
    %287 = tpu.matmul %284, %286, %cst_183 {dimension_numbers = #tpu.dot_dimension_numbers<[1], [0], [0], [1], [0, 0, 1, 1], [], []>} : vector<40x128xbf16>, vector<128x128xbf16>, vector<40x128xf32> -> vector<40x128xf32>
    %c32 = arith.constant 32 : index
    %c0_184 = arith.constant 0 : index
    %c0_185 = arith.constant 0 : index
    %288 = vector.load %arg2[%c32, %c0_184, %c0_185] : memref<35x128x128xbf16, #tpu.memory_space<vmem>>, vector<1x128x128xbf16>
    %289 = vector.shape_cast %288 : vector<1x128x128xbf16> to vector<128x128xbf16>
    %cst_186 = arith.constant dense<0.000000e+00> : vector<40x128xf32>
    %290 = tpu.matmul %284, %289, %cst_186 {dimension_numbers = #tpu.dot_dimension_numbers<[1], [0], [0], [1], [0, 0, 1, 1], [], []>} : vector<40x128xbf16>, vector<128x128xbf16>, vector<40x128xf32> -> vector<40x128xf32>
    %c33 = arith.constant 33 : index
    %c0_187 = arith.constant 0 : index
    %c0_188 = arith.constant 0 : index
    %291 = vector.load %arg2[%c33, %c0_187, %c0_188] : memref<35x128x128xbf16, #tpu.memory_space<vmem>>, vector<1x128x128xbf16>
    %292 = vector.shape_cast %291 : vector<1x128x128xbf16> to vector<128x128xbf16>
    %cst_189 = arith.constant dense<0.000000e+00> : vector<40x128xf32>
    %293 = tpu.matmul %284, %292, %cst_189 {dimension_numbers = #tpu.dot_dimension_numbers<[1], [0], [0], [1], [0, 0, 1, 1], [], []>} : vector<40x128xbf16>, vector<128x128xbf16>, vector<40x128xf32> -> vector<40x128xf32>
    %c1_i32_190 = arith.constant 1 : i32
    %294 = tpu.dynamic_rotate %287 by %c1_i32_190 dim 0 : vector<40x128xf32>, i32 -> vector<40x128xf32>
    %c0_191 = arith.constant 0 : index
    %c0_192 = arith.constant 0 : index
    %c0_193 = arith.constant 0 : index
    %295 = vector.load %arg6[%c0_191, %c0_192, %c0_193] : memref<2x40x1xf32, #tpu.memory_space<vmem>>, vector<1x40x1xf32>
    %296 = vector.shape_cast %295 : vector<1x40x1xf32> to vector<40x1xf32>
    %297 = vector.broadcast %296 : vector<40x1xf32> to vector<40x128xf32>
    %298 = arith.mulf %294, %297 : vector<40x128xf32>
    %c39_i32_194 = arith.constant 39 : i32
    %299 = tpu.dynamic_rotate %293 by %c39_i32_194 dim 0 : vector<40x128xf32>, i32 -> vector<40x128xf32>
    %c1_195 = arith.constant 1 : index
    %c0_196 = arith.constant 0 : index
    %c0_197 = arith.constant 0 : index
    %300 = vector.load %arg6[%c1_195, %c0_196, %c0_197] : memref<2x40x1xf32, #tpu.memory_space<vmem>>, vector<1x40x1xf32>
    %301 = vector.shape_cast %300 : vector<1x40x1xf32> to vector<40x1xf32>
    %302 = vector.broadcast %301 : vector<40x1xf32> to vector<40x128xf32>
    %303 = arith.mulf %299, %302 : vector<40x128xf32>
    %304 = arith.addf %298, %290 : vector<40x128xf32>
    %305 = arith.addf %304, %303 : vector<40x128xf32>
    %306 = vector.broadcast %257 : vector<1x128xf32> to vector<40x128xf32>
    %307 = arith.addf %305, %306 : vector<40x128xf32>
    %308 = vector.extract_strided_slice %0 {offsets = [14, 0], sizes = [1, 128], strides = [1, 1]} : vector<15x128xf32> to vector<1x128xf32>
    %309 = arith.truncf %255 : vector<40x128xf32> to vector<40x128xbf16>
    %c34 = arith.constant 34 : index
    %c0_198 = arith.constant 0 : index
    %c0_199 = arith.constant 0 : index
    %310 = vector.load %arg2[%c34, %c0_198, %c0_199] : memref<35x128x128xbf16, #tpu.memory_space<vmem>>, vector<1x128x128xbf16>
    %311 = vector.shape_cast %310 : vector<1x128x128xbf16> to vector<128x128xbf16>
    %cst_200 = arith.constant dense<0.000000e+00> : vector<40x128xf32>
    %312 = tpu.matmul %309, %311, %cst_200 {dimension_numbers = #tpu.dot_dimension_numbers<[1], [0], [0], [1], [0, 0, 1, 1], [], []>} : vector<40x128xbf16>, vector<128x128xbf16>, vector<40x128xf32> -> vector<40x128xf32>
    %313 = vector.broadcast %308 : vector<1x128xf32> to vector<40x128xf32>
    %314 = arith.addf %312, %313 : vector<40x128xf32>
    %315 = arith.addf %307, %314 : vector<40x128xf32>
    %cst_201 = arith.constant 0.000000e+00 : f32
    %316 = vector.broadcast %cst_201 : f32 to vector<40x128xf32>
    %317 = arith.maximumf %315, %316 : vector<40x128xf32>
    %c0_202 = arith.constant 0 : index
    %c0_203 = arith.constant 0 : index
    %318 = vector.load %arg9[%c0_202, %c0_203] : memref<40x128xf32, #tpu.memory_space<vmem>>, vector<40x128xf32>
    %319 = arith.mulf %317, %318 : vector<40x128xf32>
    %c0_204 = arith.constant 0 : index
    %c0_205 = arith.constant 0 : index
    %320 = vector.load %arg10[%c0_204, %c0_205] : memref<8x40xf32, #tpu.memory_space<vmem>>, vector<8x40xf32>
    %cst_206 = arith.constant dense<0.000000e+00> : vector<8x128xf32>
    %321 = tpu.matmul %320, %319, %cst_206 {dimension_numbers = #tpu.dot_dimension_numbers<[1], [0], [0], [1], [0, 0, 1, 1], [], []>} : vector<8x40xf32>, vector<40x128xf32>, vector<8x128xf32> -> vector<8x128xf32>
    %c0_207 = arith.constant 0 : index
    %c0_208 = arith.constant 0 : index
    %322 = vector.load %arg11[%c0_207, %c0_208] : memref<128x1xf32, #tpu.memory_space<vmem>>, vector<128x1xf32>
    %cst_209 = arith.constant dense<0.000000e+00> : vector<8x1xf32>
    %323 = tpu.matmul %321, %322, %cst_209 {dimension_numbers = #tpu.dot_dimension_numbers<[1], [0], [0], [1], [0, 0, 1, 1], [], []>} : vector<8x128xf32>, vector<128x1xf32>, vector<8x1xf32> -> vector<8x1xf32>
    %c0_210 = arith.constant 0 : index
    %c0_211 = arith.constant 0 : index
    %324 = memref.load %arg12[%c0_210, %c0_211] : memref<1x1xf32, #tpu.memory_space<smem>>
    %325 = vector.broadcast %324 : f32 to vector<8x1xf32>
    %326 = arith.addf %323, %325 : vector<8x1xf32>
    %c0_212 = arith.constant 0 : index
    %c0_213 = arith.constant 0 : index
    %327 = vector.load %arg13[%c0_212, %c0_213] : memref<8x1xf32, #tpu.memory_space<vmem>>, vector<8x1xf32>
    tpu.vector_store %arg13[%c0_212, %c0_213], %326 {strides = array<i32>} : memref<8x1xf32, #tpu.memory_space<vmem>>, vector<8x1xf32>,
    return
  }
  func.func @transform_0(%arg0: i32) -> (i32, i32) {
    %c0_i32 = arith.constant 0 : i32
    %c0_i32_0 = arith.constant 0 : i32
    %c0_i32_1 = arith.constant 0 : i32
    return %c0_i32, %c0_i32_0 : i32, i32
  }
  func.func @transform_1(%arg0: i32) -> (i32, i32, i32) {
    %c0_i32 = arith.constant 0 : i32
    %c0_i32_0 = arith.constant 0 : i32
    %c0_i32_1 = arith.constant 0 : i32
    %c0_i32_2 = arith.constant 0 : i32
    return %c0_i32, %c0_i32_0, %c0_i32_1 : i32, i32, i32
  }
  func.func @transform_2(%arg0: i32) -> (i32, i32) {
    %c0_i32 = arith.constant 0 : i32
    %c0_i32_0 = arith.constant 0 : i32
    %c0_i32_1 = arith.constant 0 : i32
    return %c0_i32, %c0_i32_0 : i32, i32
  }
  func.func @transform_3(%arg0: i32) -> (i32, i32, i32) {
    %c0_i32 = arith.constant 0 : i32
    %c0_i32_0 = arith.constant 0 : i32
    %c0_i32_1 = arith.constant 0 : i32
    %c0_i32_2 = arith.constant 0 : i32
    return %c0_i32, %c0_i32_0, %c0_i32_1 : i32, i32, i32
  }
  func.func @transform_4(%arg0: i32) -> (i32, i32, i32) {
    %c0_i32 = arith.constant 0 : i32
    %c0_i32_0 = arith.constant 0 : i32
    %c0_i32_1 = arith.constant 0 : i32
    %c0_i32_2 = arith.constant 0 : i32
    return %c0_i32, %c0_i32_0, %c0_i32_1 : i32, i32, i32
  }
  func.func @transform_5(%arg0: i32) -> (i32, i32, i32) {
    %c0_i32 = arith.constant 0 : i32
    %c0_i32_0 = arith.constant 0 : i32
    %c0_i32_1 = arith.constant 0 : i32
    %c0_i32_2 = arith.constant 0 : i32
    return %c0_i32, %c0_i32_0, %c0_i32_1 : i32, i32, i32
  }
  func.func @transform_6(%arg0: i32) -> (i32, i32) {
    %c0_i32 = arith.constant 0 : i32
    %c0_i32_0 = arith.constant 0 : i32
    %c0_i32_1 = arith.constant 0 : i32
    return %c0_i32, %c0_i32_0 : i32, i32
  }
  func.func @transform_7(%arg0: i32) -> (i32, i32) {
    %c0_i32 = arith.constant 0 : i32
    %c0_i32_0 = arith.constant 0 : i32
    %c0_i32_1 = arith.constant 0 : i32
    return %c0_i32, %c0_i32_0 : i32, i32
  }
  func.func @transform_8(%arg0: i32) -> (i32, i32) {
    %c0_i32 = arith.constant 0 : i32
    %c0_i32_0 = arith.constant 0 : i32
    %c0_i32_1 = arith.constant 0 : i32
    return %c0_i32, %c0_i32_0 : i32, i32
  }
  func.func @transform_9(%arg0: i32) -> (i32, i32) {
    %c0_i32 = arith.constant 0 : i32
    %c0_i32_0 = arith.constant 0 : i32
    %c0_i32_1 = arith.constant 0 : i32
    return %c0_i32, %c0_i32_0 : i32, i32
  }
  func.func @transform_10(%arg0: i32) -> (i32, i32) {
    %c0_i32 = arith.constant 0 : i32
    %c0_i32_0 = arith.constant 0 : i32
    %c0_i32_1 = arith.constant 0 : i32
    return %c0_i32, %c0_i32_0 : i32, i32
  }
  func.func @transform_11(%arg0: i32) -> (i32, i32) {
    %c0_i32 = arith.constant 0 : i32
    %c0_i32_0 = arith.constant 0 : i32
    %c0_i32_1 = arith.constant 0 : i32
    return %c0_i32, %c0_i32_0 : i32, i32
  }
  func.func @transform_12(%arg0: i32) -> (i32, i32) {
    %c0_i32 = arith.constant 0 : i32
    %c0_i32_0 = arith.constant 0 : i32
    %c0_i32_1 = arith.constant 0 : i32
    return %c0_i32, %c0_i32_0 : i32, i32
  }
}

</mosaic_0001>

<llo_original>
// kernel: tpu_custom_call.1
$region0: #{tpu_custom_call.1}
  #allocation0 [shape = 'u32[]', space=smem, size = 0x4, offset = 0x4, fixed_abs, tag = 'smem constant byte address 0x4 - core index']
  #allocation1 [shape = 'u32[72,128]{1,0:T(1,128)}', space=vmem, size = 0x9000, scoped, tag = 'internal scratch']
  #allocation2 [shape = 'f32[1,1]{1,0:T(1,128)S(6)}', space=smem, size = 0x200, scoped, tag = 'scoped memory for tpu_custom_call.1']
  %s0 = inlined_call_operand.hbm [shape: f32[160,128], index: 0, kind: input, shape index: {}]
  %s1 = inlined_call_operand.hbm [shape: bf16[35,128,128], index: 1, kind: input, shape index: {}]
  %s2 = inlined_call_operand.hbm [shape: f32[15,128], index: 2, kind: input, shape index: {}]
  %s3 = inlined_call_operand.vmem [shape: f32[2,160,1], index: 3, kind: input, shape index: {}]
  %s4 = inlined_call_operand.vmem [shape: f32[2,80,1], index: 4, kind: input, shape index: {}]
  %s5 = inlined_call_operand.vmem [shape: f32[2,40,1], index: 5, kind: input, shape index: {}]
  %s6 = inlined_call_operand.hbm [shape: f32[80,160], index: 6, kind: input, shape index: {}]
  %s7 = inlined_call_operand.hbm [shape: f32[40,80], index: 7, kind: input, shape index: {}]
  %s8 = inlined_call_operand.hbm [shape: f32[40,128], index: 8, kind: input, shape index: {}]
  %s9 = inlined_call_operand.hbm [shape: f32[8,40], index: 9, kind: input, shape index: {}]
  %s10 = inlined_call_operand.vmem [shape: f32[128,1], index: 10, kind: input, shape index: {}]
  %s11 = inlined_call_operand.<no memory space> [shape: f32[1,1], index: 11, kind: input, shape index: {}]
  %s12 = inlined_call_operand.vmem [shape: f32[8,1], index: 12, kind: output, shape index: {}]
  %s13 = sld [smem:[#allocation0]]
  $region86: #{tpu_custom_call.1} parent=0
    _
  %s15 = ssub.s32 1, %s13
  %s16 = scalar_select 0, %s15, %s13
  %17 = sst [smem:[#allocation2]] %s11
  $region1: #{tpu_custom_call.1} parent=0
    #allocation3 [shape = 'u8[81920]{0}', space=vmem, size = 0x14000, scoped, tag = 'input window, operand 0, single buffered']
    #allocation4 [shape = 's32[1]{0}', space=sflag, size = 0x4, scoped, tag = 'scoped memory for tpu_custom_call.1']
    #allocation5 [shape = 'u8[1146880]{0}', space=vmem, size = 0x118000, scoped, tag = 'input window, operand 1, single buffered']
    #allocation6 [shape = 's32[1]{0}', space=sflag, size = 0x4, scoped, tag = 'scoped memory for tpu_custom_call.1']
    #allocation7 [shape = 'u8[8192]{0}', space=vmem, size = 0x2000, scoped, tag = 'input window, operand 2, single buffered']
    #allocation8 [shape = 'u8[81920]{0}', space=vmem, size = 0x14000, scoped, tag = 'input window, operand 6, single buffered']
    #allocation9 [shape = 's32[1]{0}', space=sflag, size = 0x4, scoped, tag = 'scoped memory for tpu_custom_call.1']
    #allocation10 [shape = 'u8[20480]{0}', space=vmem, size = 0x5000, scoped, tag = 'input window, operand 7, single buffered']
    #allocation11 [shape = 'u8[20480]{0}', space=vmem, size = 0x5000, scoped, tag = 'input window, operand 8, single buffered']
    #allocation12 [shape = 's32[1]{0}', space=sflag, size = 0x4, scoped, tag = 'scoped memory for tpu_custom_call.1']
    #allocation13 [shape = 'u8[4096]{0}', space=vmem, size = 0x1000, scoped, tag = 'input window, operand 9, single buffered']
    %18 = vsyncpa [#allocation4], 0
    %19 = vsyncpa [#allocation6], 0
    %20 = vsyncpa [#allocation9], 0
    %21 = vsyncpa [#allocation12], 0
    // Predicated region
    $region2: #{tpu_custom_call.1} parent=1 // pred_check
      _
    $region3: #{tpu_custom_call.1} parent=1 // pred_check_branch
      %23 = sbr.rel (0) target = $region5
    $region4: #{tpu_custom_call.1} parent=1 // pred_region
      %25 = vsyncadd [#allocation4], 0
      %s26 = sshll.u32 %s0, 4
      %s27 = int_to_ptr.hbm [resolvable:$true] %s26
      %s28 = sshll.u32 [#allocation3], 4
      %s29 = int_to_ptr.vmem [resolvable:$true] %s28
      %34 = dma.hbm_to_vmem [thread:$0]  %s27, 2560, %s29, [#allocation4], 128, 128, 8
    $region5: #{tpu_custom_call.1} parent=1 // pred_fallthru
      _
    // Predicated region
    $region6: #{tpu_custom_call.1} parent=1 // pred_check
      _
    $region7: #{tpu_custom_call.1} parent=1 // pred_check_branch
      %36 = sbr.rel (0) target = $region9
    $region8: #{tpu_custom_call.1} parent=1 // pred_region
      %38 = vsyncadd [#allocation6], 0
      %s39 = sshll.u32 %s1, 4
      %s40 = int_to_ptr.hbm [resolvable:$true] %s39
      %s41 = sshll.u32 [#allocation5], 4
      %s42 = int_to_ptr.vmem [resolvable:$true] %s41
      %47 = dma.hbm_to_vmem [thread:$0]  %s40, 35840, %s42, [#allocation6], 64, 64, 4
    $region9: #{tpu_custom_call.1} parent=1 // pred_fallthru
      _
    // Predicated region
    $region10: #{tpu_custom_call.1} parent=1 // pred_check
      _
    $region11: #{tpu_custom_call.1} parent=1 // pred_check_branch
      %49 = sbr.rel (0) target = $region13
    $region12: #{tpu_custom_call.1} parent=1 // pred_region
      %51 = vsyncadd [#allocation6], 0
      %s52 = sshll.u32 %s2, 4
      %s53 = int_to_ptr.hbm [resolvable:$true] %s52
      %s54 = sshll.u32 [#allocation7], 4
      %s55 = int_to_ptr.vmem [resolvable:$true] %s54
      %60 = dma.hbm_to_vmem [thread:$0]  %s53, 256, %s55, [#allocation6], 128, 128, 8
    $region13: #{tpu_custom_call.1} parent=1 // pred_fallthru
      _
    // Predicated region
    $region14: #{tpu_custom_call.1} parent=1 // pred_check
      _
    $region15: #{tpu_custom_call.1} parent=1 // pred_check_branch
      %62 = sbr.rel (0) target = $region17
    $region16: #{tpu_custom_call.1} parent=1 // pred_region
      _
    $region17: #{tpu_custom_call.1} parent=1 // pred_fallthru
      _
    // Predicated region
    $region18: #{tpu_custom_call.1} parent=1 // pred_check
      _
    $region19: #{tpu_custom_call.1} parent=1 // pred_check_branch
      %64 = sbr.rel (0) target = $region21
    $region20: #{tpu_custom_call.1} parent=1 // pred_region
      _
    $region21: #{tpu_custom_call.1} parent=1 // pred_fallthru
      _
    // Predicated region
    $region22: #{tpu_custom_call.1} parent=1 // pred_check
      _
    $region23: #{tpu_custom_call.1} parent=1 // pred_check_branch
      %66 = sbr.rel (0) target = $region25
    $region24: #{tpu_custom_call.1} parent=1 // pred_region
      _
    $region25: #{tpu_custom_call.1} parent=1 // pred_fallthru
      _
    // Predicated region
    $region26: #{tpu_custom_call.1} parent=1 // pred_check
      _
    $region27: #{tpu_custom_call.1} parent=1 // pred_check_branch
      %68 = sbr.rel (0) target = $region29
    $region28: #{tpu_custom_call.1} parent=1 // pred_region
      %70 = vsyncadd [#allocation9], 0
      %s71 = sshll.u32 %s6, 4
      %s72 = int_to_ptr.hbm [resolvable:$true] %s71
      %s73 = sshll.u32 [#allocation8], 4
      %s74 = int_to_ptr.vmem [resolvable:$true] %s73
      %79 = dma.hbm_to_vmem [thread:$0]  %s72, 2560, %s74, [#allocation9], 256, 256, 16
    $region29: #{tpu_custom_call.1} parent=1 // pred_fallthru
      _
    // Predicated region
    $region30: #{tpu_custom_call.1} parent=1 // pred_check
      _
    $region31: #{tpu_custom_call.1} parent=1 // pred_check_branch
      %81 = sbr.rel (0) target = $region33
    $region32: #{tpu_custom_call.1} parent=1 // pred_region
      %83 = vsyncadd [#allocation9], 0
      %s84 = sshll.u32 %s7, 4
      %s85 = int_to_ptr.hbm [resolvable:$true] %s84
      %s86 = sshll.u32 [#allocation10], 4
      %s87 = int_to_ptr.vmem [resolvable:$true] %s86
      %92 = dma.hbm_to_vmem [thread:$0]  %s85, 640, %s87, [#allocation9], 128, 128, 8
    $region33: #{tpu_custom_call.1} parent=1 // pred_fallthru
      _
    // Predicated region
    $region34: #{tpu_custom_call.1} parent=1 // pred_check
      _
    $region35: #{tpu_custom_call.1} parent=1 // pred_check_branch
      %94 = sbr.rel (0) target = $region37
    $region36: #{tpu_custom_call.1} parent=1 // pred_region
      %96 = vsyncadd [#allocation12], 0
      %s97 = sshll.u32 %s8, 4
      %s98 = int_to_ptr.hbm [resolvable:$true] %s97
      %s99 = sshll.u32 [#allocation11], 4
      %s100 = int_to_ptr.vmem [resolvable:$true] %s99
      %105 = dma.hbm_to_vmem [thread:$0]  %s98, 640, %s100, [#allocation12], 128, 128, 8
    $region37: #{tpu_custom_call.1} parent=1 // pred_fallthru
      _
    // Predicated region
    $region38: #{tpu_custom_call.1} parent=1 // pred_check
      _
    $region39: #{tpu_custom_call.1} parent=1 // pred_check_branch
      %107 = sbr.rel (0) target = $region41
    $region40: #{tpu_custom_call.1} parent=1 // pred_region
      %109 = vsyncadd [#allocation12], 0
      %s111 = sshll.u32 %s9, 4
      %s112 = int_to_ptr.hbm [resolvable:$true] %s111
      %s113 = sshll.u32 [#allocation13], 4
      %s114 = int_to_ptr.vmem [resolvable:$true] %s113
      %116 = dma.hbm_to_vmem [thread:$0]  %s112, 128, %s114, [#allocation12]
    $region41: #{tpu_custom_call.1} parent=1 // pred_fallthru
      _
    // Predicated region
    $region42: #{tpu_custom_call.1} parent=1 // pred_check
      _
    $region43: #{tpu_custom_call.1} parent=1 // pred_check_branch
      %118 = sbr.rel (0) target = $region45
    $region44: #{tpu_custom_call.1} parent=1 // pred_region
      _
    $region45: #{tpu_custom_call.1} parent=1 // pred_fallthru
      _
    // Predicated region
    $region46: #{tpu_custom_call.1} parent=1 // pred_check
      _
    $region47: #{tpu_custom_call.1} parent=1 // pred_check_branch
      %120 = sbr.rel (0) target = $region49
    $region48: #{tpu_custom_call.1} parent=1 // pred_region
      _
    $region49: #{tpu_custom_call.1} parent=1 // pred_fallthru
      _
    // Predicated region
    $region50: #{tpu_custom_call.1} parent=1 // pred_check
      _
    $region51: #{tpu_custom_call.1} parent=1 // pred_check_branch
      %122 = sbr.rel (0) target = $region53
    $region52: #{tpu_custom_call.1} parent=1 // pred_region
      %124 = dma.done [#allocation4], 2560
    $region53: #{tpu_custom_call.1} parent=1 // pred_fallthru
      _
    // Predicated region
    $region54: #{tpu_custom_call.1} parent=1 // pred_check
      _
    $region55: #{tpu_custom_call.1} parent=1 // pred_check_branch
      %126 = sbr.rel (0) target = $region57
    $region56: #{tpu_custom_call.1} parent=1 // pred_region
      %128 = dma.done [#allocation6], 35840
    $region57: #{tpu_custom_call.1} parent=1 // pred_fallthru
      _
    // Predicated region
    $region58: #{tpu_custom_call.1} parent=1 // pred_check
      _
    $region59: #{tpu_custom_call.1} parent=1 // pred_check_branch
      %130 = sbr.rel (0) target = $region61
    $region60: #{tpu_custom_call.1} parent=1 // pred_region
      %132 = dma.done [#allocation6], 256
    $region61: #{tpu_custom_call.1} parent=1 // pred_fallthru
      _
    // Predicated region
    $region62: #{tpu_custom_call.1} parent=1 // pred_check
      _
    $region63: #{tpu_custom_call.1} parent=1 // pred_check_branch
      %134 = sbr.rel (0) target = $region65
    $region64: #{tpu_custom_call.1} parent=1 // pred_region
      %136 = dma.done [#allocation9], 2560
    $region65: #{tpu_custom_call.1} parent=1 // pred_fallthru
      _
    // Predicated region
    $region66: #{tpu_custom_call.1} parent=1 // pred_check
      _
    $region67: #{tpu_custom_call.1} parent=1 // pred_check_branch
      %138 = sbr.rel (0) target = $region69
    $region68: #{tpu_custom_call.1} parent=1 // pred_region
      %140 = dma.done [#allocation9], 640
    $region69: #{tpu_custom_call.1} parent=1 // pred_fallthru
      _
    // Predicated region
    $region70: #{tpu_custom_call.1} parent=1 // pred_check
      _
    $region71: #{tpu_custom_call.1} parent=1 // pred_check_branch
      %142 = sbr.rel (0) target = $region73
    $region72: #{tpu_custom_call.1} parent=1 // pred_region
      %144 = dma.done [#allocation12], 640
    $region73: #{tpu_custom_call.1} parent=1 // pred_fallthru
      _
    // Predicated region
    $region74: #{tpu_custom_call.1} parent=1 // pred_check
      _
    $region75: #{tpu_custom_call.1} parent=1 // pred_check_branch
      %146 = sbr.rel (0) target = $region77
    $region76: #{tpu_custom_call.1} parent=1 // pred_region
      %148 = dma.done [#allocation12], 128
    $region77: #{tpu_custom_call.1} parent=1 // pred_fallthru
      _
    %v149 = vld [vmem:[#allocation7] sm:$0xff]
    %v150 = vld [vmem:[#allocation7 + $0x8] sm:$0x7f]
    %v151 = vld [vmem:[#allocation3] sm:$0xff]
    %v152 = vld [vmem:[#allocation3 + $0x8] sm:$0xff]
    %v153 = vld [vmem:[#allocation3 + $0x10] sm:$0xff]
    %v154 = vld [vmem:[#allocation3 + $0x18] sm:$0xff]
    %v155 = vld [vmem:[#allocation3 + $0x20] sm:$0xff]
    %v156 = vld [vmem:[#allocation3 + $0x28] sm:$0xff]
    %v157 = vld [vmem:[#allocation3 + $0x30] sm:$0xff]
    %v158 = vld [vmem:[#allocation3 + $0x38] sm:$0xff]
    %v159 = vld [vmem:[#allocation3 + $0x40] sm:$0xff]
    %v160 = vld [vmem:[#allocation3 + $0x48] sm:$0xff]
    %v161 = vld [vmem:[#allocation3 + $0x50] sm:$0xff]
    %v162 = vld [vmem:[#allocation3 + $0x58] sm:$0xff]
    %v163 = vld [vmem:[#allocation3 + $0x60] sm:$0xff]
    %v164 = vld [vmem:[#allocation3 + $0x68] sm:$0xff]
    %v165 = vld [vmem:[#allocation3 + $0x70] sm:$0xff]
    %v166 = vld [vmem:[#allocation3 + $0x78] sm:$0xff]
    %v167 = vld [vmem:[#allocation3 + $0x80] sm:$0xff]
    %v168 = vld [vmem:[#allocation3 + $0x88] sm:$0xff]
    %v169 = vld [vmem:[#allocation3 + $0x90] sm:$0xff]
    %v170 = vld [vmem:[#allocation3 + $0x98] sm:$0xff]
    %v171 = vpack.c.bf16 %v152, %v151
    %v172 = vpack.c.bf16 %v154, %v153
    %v173 = vpack.c.bf16 %v156, %v155
    %v174 = vpack.c.bf16 %v158, %v157
    %v175 = vpack.c.bf16 %v160, %v159
    %v176 = vpack.c.bf16 %v162, %v161
    %v177 = vpack.c.bf16 %v164, %v163
    %v178 = vpack.c.bf16 %v166, %v165
    %v179 = vpack.c.bf16 %v168, %v167
    %v180 = vpack.c.bf16 %v170, %v169
    %v181 = vld [vmem:[#allocation5] sm:$0xf]
    %v182 = vld [vmem:[#allocation5 + $0x4] sm:$0xf]
    %v183 = vld [vmem:[#allocation5 + $0x8] sm:$0xf]
    %v184 = vld [vmem:[#allocation5 + $0xc] sm:$0xf]
    %v185 = vld [vmem:[#allocation5 + $0x10] sm:$0xf]
    %v186 = vld [vmem:[#allocation5 + $0x14] sm:$0xf]
    %v187 = vld [vmem:[#allocation5 + $0x18] sm:$0xf]
    %v188 = vld [vmem:[#allocation5 + $0x1c] sm:$0xf]
    %v189 = vld [vmem:[#allocation5 + $0x20] sm:$0xf]
    %v190 = vld [vmem:[#allocation5 + $0x24] sm:$0xf]
    %v191 = vld [vmem:[#allocation5 + $0x28] sm:$0xf]
    %v192 = vld [vmem:[#allocation5 + $0x2c] sm:$0xf]
    %v193 = vld [vmem:[#allocation5 + $0x30] sm:$0xf]
    %v194 = vld [vmem:[#allocation5 + $0x34] sm:$0xf]
    %v195 = vld [vmem:[#allocation5 + $0x38] sm:$0xf]
    %v196 = vld [vmem:[#allocation5 + $0x3c] sm:$0xf]
    %v213 = vunpack.c.l.b16 %v181
    %v214 = vunpack.c.l.b16 %v182
    %v215 = vunpack.c.l.b16 %v183
    %v216 = vunpack.c.l.b16 %v184
    %v217 = vunpack.c.l.b16 %v185
    %v218 = vunpack.c.l.b16 %v186
    %v219 = vunpack.c.l.b16 %v187
    %v220 = vunpack.c.l.b16 %v188
    %v221 = vunpack.c.l.b16 %v189
    %v222 = vunpack.c.l.b16 %v190
    %v223 = vunpack.c.l.b16 %v191
    %v224 = vunpack.c.l.b16 %v192
    %v225 = vunpack.c.l.b16 %v193
    %v226 = vunpack.c.l.b16 %v194
    %v227 = vunpack.c.l.b16 %v195
    %v228 = vunpack.c.l.b16 %v196
    %v229 = vpack.c.b16 %v214, %v213
    %v230 = vpack.c.b16 %v216, %v215
    %v231 = vpack.c.b16 %v218, %v217
    %v232 = vpack.c.b16 %v220, %v219
    %v233 = vpack.c.b16 %v222, %v221
    %v234 = vpack.c.b16 %v224, %v223
    %v235 = vpack.c.b16 %v226, %v225
    %v236 = vpack.c.b16 %v228, %v227
    %245 = vmatpush.bf16.msra.mxu0 %v236
    %246 = vmatpush.bf16.msra.mxu0 %v235
    %247 = vmatpush.bf16.msra.mxu0 %v234
    %248 = vmatpush.bf16.msra.mxu0 %v233
    %249 = vmatpush.bf16.msra.mxu0 %v232
    %250 = vmatpush.bf16.msra.mxu0 %v231
    %251 = vmatpush.bf16.msra.mxu0 %v230
    %252 = vmatpush.bf16.msra.mxu0 %v229
    %253 = vmatmul.bf16.gmra.mxu0 %v171
    %v254 = vpop.f32.mrf.mxu0
    %v255 = vadd.f32 0.0, %v254
    %v256 = vpop.f32.mrf.mxu0
    %v257 = vadd.f32 0.0, %v256
    %258 = vmatmul.bf16.gmra.mxu0 %v172
    %v259 = vpop.f32.mrf.mxu0
    %v260 = vadd.f32 0.0, %v259
    %v261 = vpop.f32.mrf.mxu0
    %v262 = vadd.f32 0.0, %v261
    %263 = vmatmul.bf16.gmra.mxu0 %v173
    %v264 = vpop.f32.mrf.mxu0
    %v265 = vadd.f32 0.0, %v264
    %v266 = vpop.f32.mrf.mxu0
    %v267 = vadd.f32 0.0, %v266
    %268 = vmatmul.bf16.gmra.mxu0 %v174
    %v269 = vpop.f32.mrf.mxu0
    %v270 = vadd.f32 0.0, %v269
    %v271 = vpop.f32.mrf.mxu0
    %v272 = vadd.f32 0.0, %v271
    %273 = vmatmul.bf16.gmra.mxu0 %v175
    %v274 = vpop.f32.mrf.mxu0
    %v275 = vadd.f32 0.0, %v274
    %v276 = vpop.f32.mrf.mxu0
    %v277 = vadd.f32 0.0, %v276
    %278 = vmatmul.bf16.gmra.mxu0 %v176
    %v279 = vpop.f32.mrf.mxu0
    %v280 = vadd.f32 0.0, %v279
    %v281 = vpop.f32.mrf.mxu0
    %v282 = vadd.f32 0.0, %v281
    %283 = vmatmul.bf16.gmra.mxu0 %v177
    %v284 = vpop.f32.mrf.mxu0
    %v285 = vadd.f32 0.0, %v284
    %v286 = vpop.f32.mrf.mxu0
    %v287 = vadd.f32 0.0, %v286
    %288 = vmatmul.bf16.gmra.mxu0 %v178
    %v289 = vpop.f32.mrf.mxu0
    %v290 = vadd.f32 0.0, %v289
    %v291 = vpop.f32.mrf.mxu0
    %v292 = vadd.f32 0.0, %v291
    %293 = vmatmul.bf16.gmra.mxu0 %v179
    %v294 = vpop.f32.mrf.mxu0
    %v295 = vadd.f32 0.0, %v294
    %v296 = vpop.f32.mrf.mxu0
    %v297 = vadd.f32 0.0, %v296
    %298 = vmatmul.bf16.gmra.mxu0 %v180
    %v299 = vpop.f32.mrf.mxu0
    %v300 = vadd.f32 0.0, %v299
    %v301 = vpop.f32.mrf.mxu0
    %v302 = vadd.f32 0.0, %v301
    %303 = vdwg.mxu0
    %s304 = scalar_lea.vmem [#allocation5], 64
    %v305 = vld [vmem:[%s304] sm:$0xf]
    %v306 = vld [vmem:[%s304 + $0x4] sm:$0xf]
    %v307 = vld [vmem:[%s304 + $0x8] sm:$0xf]
    %v308 = vld [vmem:[%s304 + $0xc] sm:$0xf]
    %v309 = vld [vmem:[%s304 + $0x10] sm:$0xf]
    %v310 = vld [vmem:[%s304 + $0x14] sm:$0xf]
    %v311 = vld [vmem:[%s304 + $0x18] sm:$0xf]
    %v312 = vld [vmem:[%s304 + $0x1c] sm:$0xf]
    %v313 = vld [vmem:[%s304 + $0x20] sm:$0xf]
    %v314 = vld [vmem:[%s304 + $0x24] sm:$0xf]
    %v315 = vld [vmem:[%s304 + $0x28] sm:$0xf]
    %v316 = vld [vmem:[%s304 + $0x2c] sm:$0xf]
    %v317 = vld [vmem:[%s304 + $0x30] sm:$0xf]
    %v318 = vld [vmem:[%s304 + $0x34] sm:$0xf]
    %v319 = vld [vmem:[%s304 + $0x38] sm:$0xf]
    %v320 = vld [vmem:[%s304 + $0x3c] sm:$0xf]
    %v337 = vunpack.c.l.b16 %v305
    %v338 = vunpack.c.l.b16 %v306
    %v339 = vunpack.c.l.b16 %v307
    %v340 = vunpack.c.l.b16 %v308
    %v341 = vunpack.c.l.b16 %v309
    %v342 = vunpack.c.l.b16 %v310
    %v343 = vunpack.c.l.b16 %v311
    %v344 = vunpack.c.l.b16 %v312
    %v345 = vunpack.c.l.b16 %v313
    %v346 = vunpack.c.l.b16 %v314
    %v347 = vunpack.c.l.b16 %v315
    %v348 = vunpack.c.l.b16 %v316
    %v349 = vunpack.c.l.b16 %v317
    %v350 = vunpack.c.l.b16 %v318
    %v351 = vunpack.c.l.b16 %v319
    %v352 = vunpack.c.l.b16 %v320
    %v353 = vpack.c.b16 %v338, %v337
    %v354 = vpack.c.b16 %v340, %v339
    %v355 = vpack.c.b16 %v342, %v341
    %v356 = vpack.c.b16 %v344, %v343
    %v357 = vpack.c.b16 %v346, %v345
    %v358 = vpack.c.b16 %v348, %v347
    %v359 = vpack.c.b16 %v350, %v349
    %v360 = vpack.c.b16 %v352, %v351
    %369 = vmatpush.bf16.msra.mxu0 %v360
    %370 = vmatpush.bf16.msra.mxu0 %v359
    %371 = vmatpush.bf16.msra.mxu0 %v358
    %372 = vmatpush.bf16.msra.mxu0 %v357
    %373 = vmatpush.bf16.msra.mxu0 %v356
    %374 = vmatpush.bf16.msra.mxu0 %v355
    %375 = vmatpush.bf16.msra.mxu0 %v354
    %376 = vmatpush.bf16.msra.mxu0 %v353
    %377 = vmatmul.bf16.gmra.mxu0 %v171
    %v378 = vpop.f32.mrf.mxu0
    %v379 = vadd.f32 0.0, %v378
    %v380 = vpop.f32.mrf.mxu0
    %v381 = vadd.f32 0.0, %v380
    %382 = vmatmul.bf16.gmra.mxu0 %v172
    %v383 = vpop.f32.mrf.mxu0
    %v384 = vadd.f32 0.0, %v383
    %v385 = vpop.f32.mrf.mxu0
    %v386 = vadd.f32 0.0, %v385
    %387 = vmatmul.bf16.gmra.mxu0 %v173
    %v388 = vpop.f32.mrf.mxu0
    %v389 = vadd.f32 0.0, %v388
    %v390 = vpop.f32.mrf.mxu0
    %v391 = vadd.f32 0.0, %v390
    %392 = vmatmul.bf16.gmra.mxu0 %v174
    %v393 = vpop.f32.mrf.mxu0
    %v394 = vadd.f32 0.0, %v393
    %v395 = vpop.f32.mrf.mxu0
    %v396 = vadd.f32 0.0, %v395
    %397 = vmatmul.bf16.gmra.mxu0 %v175
    %v398 = vpop.f32.mrf.mxu0
    %v399 = vadd.f32 0.0, %v398
    %v400 = vpop.f32.mrf.mxu0
    %v401 = vadd.f32 0.0, %v400
    %402 = vmatmul.bf16.gmra.mxu0 %v176
    %v403 = vpop.f32.mrf.mxu0
    %v404 = vadd.f32 0.0, %v403
    %v405 = vpop.f32.mrf.mxu0
    %v406 = vadd.f32 0.0, %v405
    %407 = vmatmul.bf16.gmra.mxu0 %v177
    %v408 = vpop.f32.mrf.mxu0
    %v409 = vadd.f32 0.0, %v408
    %v410 = vpop.f32.mrf.mxu0
    %v411 = vadd.f32 0.0, %v410
    %412 = vmatmul.bf16.gmra.mxu0 %v178
    %v413 = vpop.f32.mrf.mxu0
    %v414 = vadd.f32 0.0, %v413
    %v415 = vpop.f32.mrf.mxu0
    %v416 = vadd.f32 0.0, %v415
    %417 = vmatmul.bf16.gmra.mxu0 %v179
    %v418 = vpop.f32.mrf.mxu0
    %v419 = vadd.f32 0.0, %v418
    %v420 = vpop.f32.mrf.mxu0
    %v421 = vadd.f32 0.0, %v420
    %422 = vmatmul.bf16.gmra.mxu0 %v180
    %v423 = vpop.f32.mrf.mxu0
    %v424 = vadd.f32 0.0, %v423
    %v425 = vpop.f32.mrf.mxu0
    %v426 = vadd.f32 0.0, %v425
    %427 = vdwg.mxu0
    %s428 = scalar_lea.vmem [#allocation5], 128
    %v429 = vld [vmem:[%s428] sm:$0xf]
    %v430 = vld [vmem:[%s428 + $0x4] sm:$0xf]
    %v431 = vld [vmem:[%s428 + $0x8] sm:$0xf]
    %v432 = vld [vmem:[%s428 + $0xc] sm:$0xf]
    %v433 = vld [vmem:[%s428 + $0x10] sm:$0xf]
    %v434 = vld [vmem:[%s428 + $0x14] sm:$0xf]
    %v435 = vld [vmem:[%s428 + $0x18] sm:$0xf]
    %v436 = vld [vmem:[%s428 + $0x1c] sm:$0xf]
    %v437 = vld [vmem:[%s428 + $0x20] sm:$0xf]
    %v438 = vld [vmem:[%s428 + $0x24] sm:$0xf]
    %v439 = vld [vmem:[%s428 + $0x28] sm:$0xf]
    %v440 = vld [vmem:[%s428 + $0x2c] sm:$0xf]
    %v441 = vld [vmem:[%s428 + $0x30] sm:$0xf]
    %v442 = vld [vmem:[%s428 + $0x34] sm:$0xf]
    %v443 = vld [vmem:[%s428 + $0x38] sm:$0xf]
    %v444 = vld [vmem:[%s428 + $0x3c] sm:$0xf]
    %v461 = vunpack.c.l.b16 %v429
    %v462 = vunpack.c.l.b16 %v430
    %v463 = vunpack.c.l.b16 %v431
    %v464 = vunpack.c.l.b16 %v432
    %v465 = vunpack.c.l.b16 %v433
    %v466 = vunpack.c.l.b16 %v434
    %v467 = vunpack.c.l.b16 %v435
    %v468 = vunpack.c.l.b16 %v436
    %v469 = vunpack.c.l.b16 %v437
    %v470 = vunpack.c.l.b16 %v438
    %v471 = vunpack.c.l.b16 %v439
    %v472 = vunpack.c.l.b16 %v440
    %v473 = vunpack.c.l.b16 %v441
    %v474 = vunpack.c.l.b16 %v442
    %v475 = vunpack.c.l.b16 %v443
    %v476 = vunpack.c.l.b16 %v444
    %v477 = vpack.c.b16 %v462, %v461
    %v478 = vpack.c.b16 %v464, %v463
    %v479 = vpack.c.b16 %v466, %v465
    %v480 = vpack.c.b16 %v468, %v467
    %v481 = vpack.c.b16 %v470, %v469
    %v482 = vpack.c.b16 %v472, %v471
    %v483 = vpack.c.b16 %v474, %v473
    %v484 = vpack.c.b16 %v476, %v475
    %493 = vmatpush.bf16.msra.mxu0 %v484
    %494 = vmatpush.bf16.msra.mxu0 %v483
    %495 = vmatpush.bf16.msra.mxu0 %v482
    %496 = vmatpush.bf16.msra.mxu0 %v481
    %497 = vmatpush.bf16.msra.mxu0 %v480
    %498 = vmatpush.bf16.msra.mxu0 %v479
    %499 = vmatpush.bf16.msra.mxu0 %v478
    %500 = vmatpush.bf16.msra.mxu0 %v477
    %501 = vmatmul.bf16.gmra.mxu0 %v171
    %v502 = vpop.f32.mrf.mxu0
    %v503 = vadd.f32 0.0, %v502
    %v504 = vpop.f32.mrf.mxu0
    %v505 = vadd.f32 0.0, %v504
    %506 = vmatmul.bf16.gmra.mxu0 %v172
    %v507 = vpop.f32.mrf.mxu0
    %v508 = vadd.f32 0.0, %v507
    %v509 = vpop.f32.mrf.mxu0
    %v510 = vadd.f32 0.0, %v509
    %511 = vmatmul.bf16.gmra.mxu0 %v173
    %v512 = vpop.f32.mrf.mxu0
    %v513 = vadd.f32 0.0, %v512
    %v514 = vpop.f32.mrf.mxu0
    %v515 = vadd.f32 0.0, %v514
    %516 = vmatmul.bf16.gmra.mxu0 %v174
    %v517 = vpop.f32.mrf.mxu0
    %v518 = vadd.f32 0.0, %v517
    %v519 = vpop.f32.mrf.mxu0
    %v520 = vadd.f32 0.0, %v519
    %521 = vmatmul.bf16.gmra.mxu0 %v175
    %v522 = vpop.f32.mrf.mxu0
    %v523 = vadd.f32 0.0, %v522
    %v524 = vpop.f32.mrf.mxu0
    %v525 = vadd.f32 0.0, %v524
    %526 = vmatmul.bf16.gmra.mxu0 %v176
    %v527 = vpop.f32.mrf.mxu0
    %v528 = vadd.f32 0.0, %v527
    %v529 = vpop.f32.mrf.mxu0
    %v530 = vadd.f32 0.0, %v529
    %531 = vmatmul.bf16.gmra.mxu0 %v177
    %v532 = vpop.f32.mrf.mxu0
    %v533 = vadd.f32 0.0, %v532
    %v534 = vpop.f32.mrf.mxu0
    %v535 = vadd.f32 0.0, %v534
    %536 = vmatmul.bf16.gmra.mxu0 %v178
    %v537 = vpop.f32.mrf.mxu0
    %v538 = vadd.f32 0.0, %v537
    %v539 = vpop.f32.mrf.mxu0
    %v540 = vadd.f32 0.0, %v539
    %541 = vmatmul.bf16.gmra.mxu0 %v179
    %v542 = vpop.f32.mrf.mxu0
    %v543 = vadd.f32 0.0, %v542
    %v544 = vpop.f32.mrf.mxu0
    %v545 = vadd.f32 0.0, %v544
    %546 = vmatmul.bf16.gmra.mxu0 %v180
    %v547 = vpop.f32.mrf.mxu0
    %v548 = vadd.f32 0.0, %v547
    %v549 = vpop.f32.mrf.mxu0
    %v550 = vadd.f32 0.0, %v549
    %551 = vdwg.mxu0
    %v552 = vrot.slane %v255, 7
    %v553 = vrot.slane %v257, 7
    %v554 = vrot.slane %v260, 7
    %v555 = vrot.slane %v262, 7
    %v556 = vrot.slane %v265, 7
    %v557 = vrot.slane %v267, 7
    %v558 = vrot.slane %v270, 7
    %v559 = vrot.slane %v272, 7
    %v560 = vrot.slane %v275, 7
    %v561 = vrot.slane %v277, 7
    %v562 = vrot.slane %v280, 7
    %v563 = vrot.slane %v282, 7
    %v564 = vrot.slane %v285, 7
    %v565 = vrot.slane %v287, 7
    %v566 = vrot.slane %v290, 7
    %v567 = vrot.slane %v292, 7
    %v568 = vrot.slane %v295, 7
    %v569 = vrot.slane %v297, 7
    %v570 = vrot.slane %v300, 7
    %v571 = vrot.slane %v302, 7
    %v572 = vlaneseq
    %v573 = vshrl.u32 %v572, 7
    %vm574 = vcmp.lt.s32.totalorder %v573, 1
    %v575 = vsel %vm574, %v570, %v571
    %v576 = vsel %vm574, %v569, %v570
    %v577 = vsel %vm574, %v568, %v569
    %v578 = vsel %vm574, %v567, %v568
    %v579 = vsel %vm574, %v566, %v567
    %v580 = vsel %vm574, %v565, %v566
    %v581 = vsel %vm574, %v564, %v565
    %v582 = vsel %vm574, %v563, %v564
    %v583 = vsel %vm574, %v562, %v563
    %v584 = vsel %vm574, %v561, %v562
    %v585 = vsel %vm574, %v560, %v561
    %v586 = vsel %vm574, %v559, %v560
    %v587 = vsel %vm574, %v558, %v559
    %v588 = vsel %vm574, %v557, %v558
    %v589 = vsel %vm574, %v556, %v557
    %v590 = vsel %vm574, %v555, %v556
    %v591 = vsel %vm574, %v554, %v555
    %v592 = vsel %vm574, %v553, %v554
    %v593 = vsel %vm574, %v552, %v553
    %v594 = vsel %vm574, %v571, %v552
    %v595 = vld [vmem:[%s3] sm:$0xff]
    %v596 = vld [vmem:[%s3 + $0x8] sm:$0xff]
    %v597 = vld [vmem:[%s3 + $0x10] sm:$0xff]
    %v598 = vld [vmem:[%s3 + $0x18] sm:$0xff]
    %v599 = vld [vmem:[%s3 + $0x20] sm:$0xff]
    %v600 = vld [vmem:[%s3 + $0x28] sm:$0xff]
    %v601 = vld [vmem:[%s3 + $0x30] sm:$0xff]
    %v602 = vld [vmem:[%s3 + $0x38] sm:$0xff]
    %v603 = vld [vmem:[%s3 + $0x40] sm:$0xff]
    %v604 = vld [vmem:[%s3 + $0x48] sm:$0xff]
    %v605 = vld [vmem:[%s3 + $0x50] sm:$0xff]
    %v606 = vld [vmem:[%s3 + $0x58] sm:$0xff]
    %v607 = vld [vmem:[%s3 + $0x60] sm:$0xff]
    %v608 = vld [vmem:[%s3 + $0x68] sm:$0xff]
    %v609 = vld [vmem:[%s3 + $0x70] sm:$0xff]
    %v610 = vld [vmem:[%s3 + $0x78] sm:$0xff]
    %v611 = vld [vmem:[%s3 + $0x80] sm:$0xff]
    %v612 = vld [vmem:[%s3 + $0x88] sm:$0xff]
    %v613 = vld [vmem:[%s3 + $0x90] sm:$0xff]
    %v614 = vld [vmem:[%s3 + $0x98] sm:$0xff]
    %616 = vset.pattern.permute.xlu0 0
    %617 = vperm.xlu0 %616, %v595
    %v618 = vpop.permute.xlu0 %617
    %621 = vset.pattern.permute.xlu0 0
    %622 = vperm.xlu0 %621, %v596
    %v623 = vpop.permute.xlu0 %622
    %626 = vset.pattern.permute.xlu0 0
    %627 = vperm.xlu0 %626, %v597
    %v628 = vpop.permute.xlu0 %627
    %631 = vset.pattern.permute.xlu0 0
    %632 = vperm.xlu0 %631, %v598
    %v633 = vpop.permute.xlu0 %632
    %636 = vset.pattern.permute.xlu0 0
    %637 = vperm.xlu0 %636, %v599
    %v638 = vpop.permute.xlu0 %637
    %641 = vset.pattern.permute.xlu0 0
    %642 = vperm.xlu0 %641, %v600
    %v643 = vpop.permute.xlu0 %642
    %646 = vset.pattern.permute.xlu0 0
    %647 = vperm.xlu0 %646, %v601
    %v648 = vpop.permute.xlu0 %647
    %651 = vset.pattern.permute.xlu0 0
    %652 = vperm.xlu0 %651, %v602
    %v653 = vpop.permute.xlu0 %652
    %656 = vset.pattern.permute.xlu0 0
    %657 = vperm.xlu0 %656, %v603
    %v658 = vpop.permute.xlu0 %657
    %661 = vset.pattern.permute.xlu0 0
    %662 = vperm.xlu0 %661, %v604
    %v663 = vpop.permute.xlu0 %662
    %666 = vset.pattern.permute.xlu0 0
    %667 = vperm.xlu0 %666, %v605
    %v668 = vpop.permute.xlu0 %667
    %671 = vset.pattern.permute.xlu0 0
    %672 = vperm.xlu0 %671, %v606
    %v673 = vpop.permute.xlu0 %672
    %676 = vset.pattern.permute.xlu0 0
    %677 = vperm.xlu0 %676, %v607
    %v678 = vpop.permute.xlu0 %677
    %681 = vset.pattern.permute.xlu0 0
    %682 = vperm.xlu0 %681, %v608
    %v683 = vpop.permute.xlu0 %682
    %686 = vset.pattern.permute.xlu0 0
    %687 = vperm.xlu0 %686, %v609
    %v688 = vpop.permute.xlu0 %687
    %691 = vset.pattern.permute.xlu0 0
    %692 = vperm.xlu0 %691, %v610
    %v693 = vpop.permute.xlu0 %692
    %696 = vset.pattern.permute.xlu0 0
    %697 = vperm.xlu0 %696, %v611
    %v698 = vpop.permute.xlu0 %697
    %701 = vset.pattern.permute.xlu0 0
    %702 = vperm.xlu0 %701, %v612
    %v703 = vpop.permute.xlu0 %702
    %706 = vset.pattern.permute.xlu0 0
    %707 = vperm.xlu0 %706, %v613
    %v708 = vpop.permute.xlu0 %707
    %711 = vset.pattern.permute.xlu0 0
    %712 = vperm.xlu0 %711, %v614
    %v713 = vpop.permute.xlu0 %712
    %v715 = vmul.f32 %v594, %v618
    %v716 = vmul.f32 %v593, %v623
    %v717 = vmul.f32 %v592, %v628
    %v718 = vmul.f32 %v591, %v633
    %v719 = vmul.f32 %v590, %v638
    %v720 = vmul.f32 %v589, %v643
    %v721 = vmul.f32 %v588, %v648
    %v722 = vmul.f32 %v587, %v653
    %v723 = vmul.f32 %v586, %v658
    %v724 = vmul.f32 %v585, %v663
    %v725 = vmul.f32 %v584, %v668
    %v726 = vmul.f32 %v583, %v673
    %v727 = vmul.f32 %v582, %v678
    %v728 = vmul.f32 %v581, %v683
    %v729 = vmul.f32 %v580, %v688
    %v730 = vmul.f32 %v579, %v693
    %v731 = vmul.f32 %v578, %v698
    %v732 = vmul.f32 %v577, %v703
    %v733 = vmul.f32 %v576, %v708
    %v734 = vmul.f32 %v575, %v713
    %v735 = vrot.slane %v503, 1
    %v736 = vrot.slane %v505, 1
    %v737 = vrot.slane %v508, 1
    %v738 = vrot.slane %v510, 1
    %v739 = vrot.slane %v513, 1
    %v740 = vrot.slane %v515, 1
    %v741 = vrot.slane %v518, 1
    %v742 = vrot.slane %v520, 1
    %v743 = vrot.slane %v523, 1
    %v744 = vrot.slane %v525, 1
    %v745 = vrot.slane %v528, 1
    %v746 = vrot.slane %v530, 1
    %v747 = vrot.slane %v533, 1
    %v748 = vrot.slane %v535, 1
    %v749 = vrot.slane %v538, 1
    %v750 = vrot.slane %v540, 1
    %v751 = vrot.slane %v543, 1
    %v752 = vrot.slane %v545, 1
    %v753 = vrot.slane %v548, 1
    %v754 = vrot.slane %v550, 1
    %vm755 = vcmp.lt.s32.totalorder %v573, 7
    %v756 = vsel %vm755, %v753, %v754
    %v757 = vsel %vm755, %v752, %v753
    %v758 = vsel %vm755, %v751, %v752
    %v759 = vsel %vm755, %v750, %v751
    %v760 = vsel %vm755, %v749, %v750
    %v761 = vsel %vm755, %v748, %v749
    %v762 = vsel %vm755, %v747, %v748
    %v763 = vsel %vm755, %v746, %v747
    %v764 = vsel %vm755, %v745, %v746
    %v765 = vsel %vm755, %v744, %v745
    %v766 = vsel %vm755, %v743, %v744
    %v767 = vsel %vm755, %v742, %v743
    %v768 = vsel %vm755, %v741, %v742
    %v769 = vsel %vm755, %v740, %v741
    %v770 = vsel %vm755, %v739, %v740
    %v771 = vsel %vm755, %v738, %v739
    %v772 = vsel %vm755, %v737, %v738
    %v773 = vsel %vm755, %v736, %v737
    %v774 = vsel %vm755, %v735, %v736
    %v775 = vsel %vm755, %v754, %v735
    %s776 = scalar_lea.vmem %s3, 160
    %v777 = vld [vmem:[%s776] sm:$0xff]
    %v778 = vld [vmem:[%s776 + $0x8] sm:$0xff]
    %v779 = vld [vmem:[%s776 + $0x10] sm:$0xff]
    %v780 = vld [vmem:[%s776 + $0x18] sm:$0xff]
    %v781 = vld [vmem:[%s776 + $0x20] sm:$0xff]
    %v782 = vld [vmem:[%s776 + $0x28] sm:$0xff]
    %v783 = vld [vmem:[%s776 + $0x30] sm:$0xff]
    %v784 = vld [vmem:[%s776 + $0x38] sm:$0xff]
    %v785 = vld [vmem:[%s776 + $0x40] sm:$0xff]
    %v786 = vld [vmem:[%s776 + $0x48] sm:$0xff]
    %v787 = vld [vmem:[%s776 + $0x50] sm:$0xff]
    %v788 = vld [vmem:[%s776 + $0x58] sm:$0xff]
    %v789 = vld [vmem:[%s776 + $0x60] sm:$0xff]
    %v790 = vld [vmem:[%s776 + $0x68] sm:$0xff]
    %v791 = vld [vmem:[%s776 + $0x70] sm:$0xff]
    %v792 = vld [vmem:[%s776 + $0x78] sm:$0xff]
    %v793 = vld [vmem:[%s776 + $0x80] sm:$0xff]
    %v794 = vld [vmem:[%s776 + $0x88] sm:$0xff]
    %v795 = vld [vmem:[%s776 + $0x90] sm:$0xff]
    %v796 = vld [vmem:[%s776 + $0x98] sm:$0xff]
    %798 = vset.pattern.permute.xlu0 0
    %799 = vperm.xlu0 %798, %v777
    %v800 = vpop.permute.xlu0 %799
    %803 = vset.pattern.permute.xlu0 0
    %804 = vperm.xlu0 %803, %v778
    %v805 = vpop.permute.xlu0 %804
    %808 = vset.pattern.permute.xlu0 0
    %809 = vperm.xlu0 %808, %v779
    %v810 = vpop.permute.xlu0 %809
    %813 = vset.pattern.permute.xlu0 0
    %814 = vperm.xlu0 %813, %v780
    %v815 = vpop.permute.xlu0 %814
    %818 = vset.pattern.permute.xlu0 0
    %819 = vperm.xlu0 %818, %v781
    %v820 = vpop.permute.xlu0 %819
    %823 = vset.pattern.permute.xlu0 0
    %824 = vperm.xlu0 %823, %v782
    %v825 = vpop.permute.xlu0 %824
    %828 = vset.pattern.permute.xlu0 0
    %829 = vperm.xlu0 %828, %v783
    %v830 = vpop.permute.xlu0 %829
    %833 = vset.pattern.permute.xlu0 0
    %834 = vperm.xlu0 %833, %v784
    %v835 = vpop.permute.xlu0 %834
    %838 = vset.pattern.permute.xlu0 0
    %839 = vperm.xlu0 %838, %v785
    %v840 = vpop.permute.xlu0 %839
    %843 = vset.pattern.permute.xlu0 0
    %844 = vperm.xlu0 %843, %v786
    %v845 = vpop.permute.xlu0 %844
    %848 = vset.pattern.permute.xlu0 0
    %849 = vperm.xlu0 %848, %v787
    %v850 = vpop.permute.xlu0 %849
    %853 = vset.pattern.permute.xlu0 0
    %854 = vperm.xlu0 %853, %v788
    %v855 = vpop.permute.xlu0 %854
    %858 = vset.pattern.permute.xlu0 0
    %859 = vperm.xlu0 %858, %v789
    %v860 = vpop.permute.xlu0 %859
    %863 = vset.pattern.permute.xlu0 0
    %864 = vperm.xlu0 %863, %v790
    %v865 = vpop.permute.xlu0 %864
    %868 = vset.pattern.permute.xlu0 0
    %869 = vperm.xlu0 %868, %v791
    %v870 = vpop.permute.xlu0 %869
    %873 = vset.pattern.permute.xlu0 0
    %874 = vperm.xlu0 %873, %v792
    %v875 = vpop.permute.xlu0 %874
    %878 = vset.pattern.permute.xlu0 0
    %879 = vperm.xlu0 %878, %v793
    %v880 = vpop.permute.xlu0 %879
    %883 = vset.pattern.permute.xlu0 0
    %884 = vperm.xlu0 %883, %v794
    %v885 = vpop.permute.xlu0 %884
    %888 = vset.pattern.permute.xlu0 0
    %889 = vperm.xlu0 %888, %v795
    %v890 = vpop.permute.xlu0 %889
    %893 = vset.pattern.permute.xlu0 0
    %894 = vperm.xlu0 %893, %v796
    %v895 = vpop.permute.xlu0 %894
    %v897 = vmul.f32 %v774, %v800
    %v898 = vmul.f32 %v773, %v805
    %v899 = vmul.f32 %v772, %v810
    %v900 = vmul.f32 %v771, %v815
    %v901 = vmul.f32 %v770, %v820
    %v902 = vmul.f32 %v769, %v825
    %v903 = vmul.f32 %v768, %v830
    %v904 = vmul.f32 %v767, %v835
    %v905 = vmul.f32 %v766, %v840
    %v906 = vmul.f32 %v765, %v845
    %v907 = vmul.f32 %v764, %v850
    %v908 = vmul.f32 %v763, %v855
    %v909 = vmul.f32 %v762, %v860
    %v910 = vmul.f32 %v761, %v865
    %v911 = vmul.f32 %v760, %v870
    %v912 = vmul.f32 %v759, %v875
    %v913 = vmul.f32 %v758, %v880
    %v914 = vmul.f32 %v757, %v885
    %v915 = vmul.f32 %v756, %v890
    %v916 = vmul.f32 %v775, %v895
    %v917 = vadd.f32 %v715, %v379
    %v918 = vadd.f32 %v716, %v381
    %v919 = vadd.f32 %v717, %v384
    %v920 = vadd.f32 %v718, %v386
    %v921 = vadd.f32 %v719, %v389
    %v922 = vadd.f32 %v720, %v391
    %v923 = vadd.f32 %v721, %v394
    %v924 = vadd.f32 %v722, %v396
    %v925 = vadd.f32 %v723, %v399
    %v926 = vadd.f32 %v724, %v401
    %v927 = vadd.f32 %v725, %v404
    %v928 = vadd.f32 %v726, %v406
    %v929 = vadd.f32 %v727, %v409
    %v930 = vadd.f32 %v728, %v411
    %v931 = vadd.f32 %v729, %v414
    %v932 = vadd.f32 %v730, %v416
    %v933 = vadd.f32 %v731, %v419
    %v934 = vadd.f32 %v732, %v421
    %v935 = vadd.f32 %v733, %v424
    %v936 = vadd.f32 %v734, %v426
    %v937 = vadd.f32 %v917, %v897
    %v938 = vadd.f32 %v918, %v898
    %v939 = vadd.f32 %v919, %v899
    %v940 = vadd.f32 %v920, %v900
    %v941 = vadd.f32 %v921, %v901
    %v942 = vadd.f32 %v922, %v902
    %v943 = vadd.f32 %v923, %v903
    %v944 = vadd.f32 %v924, %v904
    %v945 = vadd.f32 %v925, %v905
    %v946 = vadd.f32 %v926, %v906
    %v947 = vadd.f32 %v927, %v907
    %v948 = vadd.f32 %v928, %v908
    %v949 = vadd.f32 %v929, %v909
    %v950 = vadd.f32 %v930, %v910
    %v951 = vadd.f32 %v931, %v911
    %v952 = vadd.f32 %v932, %v912
    %v953 = vadd.f32 %v933, %v913
    %v954 = vadd.f32 %v934, %v914
    %v955 = vadd.f32 %v935, %v915
    %v956 = vadd.f32 %v936, %v916
    %v957 = vperm.slane %v149, 0
    %v958 = vadd.f32 %v937, %v957
    %v959 = vadd.f32 %v938, %v957
    %v960 = vadd.f32 %v939, %v957
    %v961 = vadd.f32 %v940, %v957
    %v962 = vadd.f32 %v941, %v957
    %v963 = vadd.f32 %v942, %v957
    %v964 = vadd.f32 %v943, %v957
    %v965 = vadd.f32 %v944, %v957
    %v966 = vadd.f32 %v945, %v957
    %v967 = vadd.f32 %v946, %v957
    %v968 = vadd.f32 %v947, %v957
    %v969 = vadd.f32 %v948, %v957
    %v970 = vadd.f32 %v949, %v957
    %v971 = vadd.f32 %v950, %v957
    %v972 = vadd.f32 %v951, %v957
    %v973 = vadd.f32 %v952, %v957
    %v974 = vadd.f32 %v953, %v957
    %v975 = vadd.f32 %v954, %v957
    %v976 = vadd.f32 %v955, %v957
    %v977 = vadd.f32 %v956, %v957
    %v978 = vmax.f32 %v958, 0.0
    %v979 = vmax.f32 %v959, 0.0
    %v980 = vmax.f32 %v960, 0.0
    %v981 = vmax.f32 %v961, 0.0
    %v982 = vmax.f32 %v962, 0.0
    %v983 = vmax.f32 %v963, 0.0
    %v984 = vmax.f32 %v964, 0.0
    %v985 = vmax.f32 %v965, 0.0
    %v986 = vmax.f32 %v966, 0.0
    %v987 = vmax.f32 %v967, 0.0
    %v988 = vmax.f32 %v968, 0.0
    %v989 = vmax.f32 %v969, 0.0
    %v990 = vmax.f32 %v970, 0.0
    %v991 = vmax.f32 %v971, 0.0
    %v992 = vmax.f32 %v972, 0.0
    %v993 = vmax.f32 %v973, 0.0
    %v994 = vmax.f32 %v974, 0.0
    %v995 = vmax.f32 %v975, 0.0
    %v996 = vmax.f32 %v976, 0.0
    %v997 = vmax.f32 %v977, 0.0
    %v998 = vpack.c.bf16 %v979, %v978
    %v999 = vpack.c.bf16 %v981, %v980
    %v1000 = vpack.c.bf16 %v983, %v982
    %v1001 = vpack.c.bf16 %v985, %v984
    %v1002 = vpack.c.bf16 %v987, %v986
    %v1003 = vpack.c.bf16 %v989, %v988
    %v1004 = vpack.c.bf16 %v991, %v990
    %v1005 = vpack.c.bf16 %v993, %v992
    %v1006 = vpack.c.bf16 %v995, %v994
    %v1007 = vpack.c.bf16 %v997, %v996
    %s1008 = scalar_lea.vmem [#allocation5], 192
    %v1009 = vld [vmem:[%s1008] sm:$0xf]
    %v1010 = vld [vmem:[%s1008 + $0x4] sm:$0xf]
    %v1011 = vld [vmem:[%s1008 + $0x8] sm:$0xf]
    %v1012 = vld [vmem:[%s1008 + $0xc] sm:$0xf]
    %v1013 = vld [vmem:[%s1008 + $0x10] sm:$0xf]
    %v1014 = vld [vmem:[%s1008 + $0x14] sm:$0xf]
    %v1015 = vld [vmem:[%s1008 + $0x18] sm:$0xf]
    %v1016 = vld [vmem:[%s1008 + $0x1c] sm:$0xf]
    %v1017 = vld [vmem:[%s1008 + $0x20] sm:$0xf]
    %v1018 = vld [vmem:[%s1008 + $0x24] sm:$0xf]
    %v1019 = vld [vmem:[%s1008 + $0x28] sm:$0xf]
    %v1020 = vld [vmem:[%s1008 + $0x2c] sm:$0xf]
    %v1021 = vld [vmem:[%s1008 + $0x30] sm:$0xf]
    %v1022 = vld [vmem:[%s1008 + $0x34] sm:$0xf]
    %v1023 = vld [vmem:[%s1008 + $0x38] sm:$0xf]
    %v1024 = vld [vmem:[%s1008 + $0x3c] sm:$0xf]
    %v1041 = vunpack.c.l.b16 %v1009
    %v1042 = vunpack.c.l.b16 %v1010
    %v1043 = vunpack.c.l.b16 %v1011
    %v1044 = vunpack.c.l.b16 %v1012
    %v1045 = vunpack.c.l.b16 %v1013
    %v1046 = vunpack.c.l.b16 %v1014
    %v1047 = vunpack.c.l.b16 %v1015
    %v1048 = vunpack.c.l.b16 %v1016
    %v1049 = vunpack.c.l.b16 %v1017
    %v1050 = vunpack.c.l.b16 %v1018
    %v1051 = vunpack.c.l.b16 %v1019
    %v1052 = vunpack.c.l.b16 %v1020
    %v1053 = vunpack.c.l.b16 %v1021
    %v1054 = vunpack.c.l.b16 %v1022
    %v1055 = vunpack.c.l.b16 %v1023
    %v1056 = vunpack.c.l.b16 %v1024
    %v1057 = vpack.c.b16 %v1042, %v1041
    %v1058 = vpack.c.b16 %v1044, %v1043
    %v1059 = vpack.c.b16 %v1046, %v1045
    %v1060 = vpack.c.b16 %v1048, %v1047
    %v1061 = vpack.c.b16 %v1050, %v1049
    %v1062 = vpack.c.b16 %v1052, %v1051
    %v1063 = vpack.c.b16 %v1054, %v1053
    %v1064 = vpack.c.b16 %v1056, %v1055
    %1073 = vmatpush.bf16.msra.mxu0 %v1064
    %1074 = vmatpush.bf16.msra.mxu0 %v1063
    %1075 = vmatpush.bf16.msra.mxu0 %v1062
    %1076 = vmatpush.bf16.msra.mxu0 %v1061
    %1077 = vmatpush.bf16.msra.mxu0 %v1060
    %1078 = vmatpush.bf16.msra.mxu0 %v1059
    %1079 = vmatpush.bf16.msra.mxu0 %v1058
    %1080 = vmatpush.bf16.msra.mxu0 %v1057
    %1081 = vmatmul.bf16.gmra.mxu0 %v998
    %v1082 = vpop.f32.mrf.mxu0
    %v1083 = vadd.f32 0.0, %v1082
    %v1084 = vpop.f32.mrf.mxu0
    %v1085 = vadd.f32 0.0, %v1084
    %1086 = vmatmul.bf16.gmra.mxu0 %v999
    %v1087 = vpop.f32.mrf.mxu0
    %v1088 = vadd.f32 0.0, %v1087
    %v1089 = vpop.f32.mrf.mxu0
    %v1090 = vadd.f32 0.0, %v1089
    %1091 = vmatmul.bf16.gmra.mxu0 %v1000
    %v1092 = vpop.f32.mrf.mxu0
    %v1093 = vadd.f32 0.0, %v1092
    %v1094 = vpop.f32.mrf.mxu0
    %v1095 = vadd.f32 0.0, %v1094
    %1096 = vmatmul.bf16.gmra.mxu0 %v1001
    %v1097 = vpop.f32.mrf.mxu0
    %v1098 = vadd.f32 0.0, %v1097
    %v1099 = vpop.f32.mrf.mxu0
    %v1100 = vadd.f32 0.0, %v1099
    %1101 = vmatmul.bf16.gmra.mxu0 %v1002
    %v1102 = vpop.f32.mrf.mxu0
    %v1103 = vadd.f32 0.0, %v1102
    %v1104 = vpop.f32.mrf.mxu0
    %v1105 = vadd.f32 0.0, %v1104
    %1106 = vmatmul.bf16.gmra.mxu0 %v1003
    %v1107 = vpop.f32.mrf.mxu0
    %v1108 = vadd.f32 0.0, %v1107
    %v1109 = vpop.f32.mrf.mxu0
    %v1110 = vadd.f32 0.0, %v1109
    %1111 = vmatmul.bf16.gmra.mxu0 %v1004
    %v1112 = vpop.f32.mrf.mxu0
    %v1113 = vadd.f32 0.0, %v1112
    %v1114 = vpop.f32.mrf.mxu0
    %v1115 = vadd.f32 0.0, %v1114
    %1116 = vmatmul.bf16.gmra.mxu0 %v1005
    %v1117 = vpop.f32.mrf.mxu0
    %v1118 = vadd.f32 0.0, %v1117
    %v1119 = vpop.f32.mrf.mxu0
    %v1120 = vadd.f32 0.0, %v1119
    %1121 = vmatmul.bf16.gmra.mxu0 %v1006
    %v1122 = vpop.f32.mrf.mxu0
    %v1123 = vadd.f32 0.0, %v1122
    %v1124 = vpop.f32.mrf.mxu0
    %v1125 = vadd.f32 0.0, %v1124
    %1126 = vmatmul.bf16.gmra.mxu0 %v1007
    %v1127 = vpop.f32.mrf.mxu0
    %v1128 = vadd.f32 0.0, %v1127
    %v1129 = vpop.f32.mrf.mxu0
    %v1130 = vadd.f32 0.0, %v1129
    %1131 = vdwg.mxu0
    %s1132 = scalar_lea.vmem [#allocation5], 256
    %v1133 = vld [vmem:[%s1132] sm:$0xf]
    %v1134 = vld [vmem:[%s1132 + $0x4] sm:$0xf]
    %v1135 = vld [vmem:[%s1132 + $0x8] sm:$0xf]
    %v1136 = vld [vmem:[%s1132 + $0xc] sm:$0xf]
    %v1137 = vld [vmem:[%s1132 + $0x10] sm:$0xf]
    %v1138 = vld [vmem:[%s1132 + $0x14] sm:$0xf]
    %v1139 = vld [vmem:[%s1132 + $0x18] sm:$0xf]
    %v1140 = vld [vmem:[%s1132 + $0x1c] sm:$0xf]
    %v1141 = vld [vmem:[%s1132 + $0x20] sm:$0xf]
    %v1142 = vld [vmem:[%s1132 + $0x24] sm:$0xf]
    %v1143 = vld [vmem:[%s1132 + $0x28] sm:$0xf]
    %v1144 = vld [vmem:[%s1132 + $0x2c] sm:$0xf]
    %v1145 = vld [vmem:[%s1132 + $0x30] sm:$0xf]
    %v1146 = vld [vmem:[%s1132 + $0x34] sm:$0xf]
    %v1147 = vld [vmem:[%s1132 + $0x38] sm:$0xf]
    %v1148 = vld [vmem:[%s1132 + $0x3c] sm:$0xf]
    %v1165 = vunpack.c.l.b16 %v1133
    %v1166 = vunpack.c.l.b16 %v1134
    %v1167 = vunpack.c.l.b16 %v1135
    %v1168 = vunpack.c.l.b16 %v1136
    %v1169 = vunpack.c.l.b16 %v1137
    %v1170 = vunpack.c.l.b16 %v1138
    %v1171 = vunpack.c.l.b16 %v1139
    %v1172 = vunpack.c.l.b16 %v1140
    %v1173 = vunpack.c.l.b16 %v1141
    %v1174 = vunpack.c.l.b16 %v1142
    %v1175 = vunpack.c.l.b16 %v1143
    %v1176 = vunpack.c.l.b16 %v1144
    %v1177 = vunpack.c.l.b16 %v1145
    %v1178 = vunpack.c.l.b16 %v1146
    %v1179 = vunpack.c.l.b16 %v1147
    %v1180 = vunpack.c.l.b16 %v1148
    %v1181 = vpack.c.b16 %v1166, %v1165
    %v1182 = vpack.c.b16 %v1168, %v1167
    %v1183 = vpack.c.b16 %v1170, %v1169
    %v1184 = vpack.c.b16 %v1172, %v1171
    %v1185 = vpack.c.b16 %v1174, %v1173
    %v1186 = vpack.c.b16 %v1176, %v1175
    %v1187 = vpack.c.b16 %v1178, %v1177
    %v1188 = vpack.c.b16 %v1180, %v1179
    %1197 = vmatpush.bf16.msra.mxu0 %v1188
    %1198 = vmatpush.bf16.msra.mxu0 %v1187
    %1199 = vmatpush.bf16.msra.mxu0 %v1186
    %1200 = vmatpush.bf16.msra.mxu0 %v1185
    %1201 = vmatpush.bf16.msra.mxu0 %v1184
    %1202 = vmatpush.bf16.msra.mxu0 %v1183
    %1203 = vmatpush.bf16.msra.mxu0 %v1182
    %1204 = vmatpush.bf16.msra.mxu0 %v1181
    %1205 = vmatmul.bf16.gmra.mxu0 %v998
    %v1206 = vpop.f32.mrf.mxu0
    %v1207 = vadd.f32 0.0, %v1206
    %v1208 = vpop.f32.mrf.mxu0
    %v1209 = vadd.f32 0.0, %v1208
    %1210 = vmatmul.bf16.gmra.mxu0 %v999
    %v1211 = vpop.f32.mrf.mxu0
    %v1212 = vadd.f32 0.0, %v1211
    %v1213 = vpop.f32.mrf.mxu0
    %v1214 = vadd.f32 0.0, %v1213
    %1215 = vmatmul.bf16.gmra.mxu0 %v1000
    %v1216 = vpop.f32.mrf.mxu0
    %v1217 = vadd.f32 0.0, %v1216
    %v1218 = vpop.f32.mrf.mxu0
    %v1219 = vadd.f32 0.0, %v1218
    %1220 = vmatmul.bf16.gmra.mxu0 %v1001
    %v1221 = vpop.f32.mrf.mxu0
    %v1222 = vadd.f32 0.0, %v1221
    %v1223 = vpop.f32.mrf.mxu0
    %v1224 = vadd.f32 0.0, %v1223
    %1225 = vmatmul.bf16.gmra.mxu0 %v1002
    %v1226 = vpop.f32.mrf.mxu0
    %v1227 = vadd.f32 0.0, %v1226
    %v1228 = vpop.f32.mrf.mxu0
    %v1229 = vadd.f32 0.0, %v1228
    %1230 = vmatmul.bf16.gmra.mxu0 %v1003
    %v1231 = vpop.f32.mrf.mxu0
    %v1232 = vadd.f32 0.0, %v1231
    %v1233 = vpop.f32.mrf.mxu0
    %v1234 = vadd.f32 0.0, %v1233
    %1235 = vmatmul.bf16.gmra.mxu0 %v1004
    %v1236 = vpop.f32.mrf.mxu0
    %v1237 = vadd.f32 0.0, %v1236
    %v1238 = vpop.f32.mrf.mxu0
    %v1239 = vadd.f32 0.0, %v1238
    %1240 = vmatmul.bf16.gmra.mxu0 %v1005
    %v1241 = vpop.f32.mrf.mxu0
    %v1242 = vadd.f32 0.0, %v1241
    %v1243 = vpop.f32.mrf.mxu0
    %v1244 = vadd.f32 0.0, %v1243
    %1245 = vmatmul.bf16.gmra.mxu0 %v1006
    %v1246 = vpop.f32.mrf.mxu0
    %v1247 = vadd.f32 0.0, %v1246
    %v1248 = vpop.f32.mrf.mxu0
    %v1249 = vadd.f32 0.0, %v1248
    %1250 = vmatmul.bf16.gmra.mxu0 %v1007
    %v1251 = vpop.f32.mrf.mxu0
    %v1252 = vadd.f32 0.0, %v1251
    %v1253 = vpop.f32.mrf.mxu0
    %v1254 = vadd.f32 0.0, %v1253
    %1255 = vdwg.mxu0
    %s1256 = scalar_lea.vmem [#allocation5], 320
    %v1257 = vld [vmem:[%s1256] sm:$0xf]
    %v1258 = vld [vmem:[%s1256 + $0x4] sm:$0xf]
    %v1259 = vld [vmem:[%s1256 + $0x8] sm:$0xf]
    %v1260 = vld [vmem:[%s1256 + $0xc] sm:$0xf]
    %v1261 = vld [vmem:[%s1256 + $0x10] sm:$0xf]
    %v1262 = vld [vmem:[%s1256 + $0x14] sm:$0xf]
    %v1263 = vld [vmem:[%s1256 + $0x18] sm:$0xf]
    %v1264 = vld [vmem:[%s1256 + $0x1c] sm:$0xf]
    %v1265 = vld [vmem:[%s1256 + $0x20] sm:$0xf]
    %v1266 = vld [vmem:[%s1256 + $0x24] sm:$0xf]
    %v1267 = vld [vmem:[%s1256 + $0x28] sm:$0xf]
    %v1268 = vld [vmem:[%s1256 + $0x2c] sm:$0xf]
    %v1269 = vld [vmem:[%s1256 + $0x30] sm:$0xf]
    %v1270 = vld [vmem:[%s1256 + $0x34] sm:$0xf]
    %v1271 = vld [vmem:[%s1256 + $0x38] sm:$0xf]
    %v1272 = vld [vmem:[%s1256 + $0x3c] sm:$0xf]
    %v1289 = vunpack.c.l.b16 %v1257
    %v1290 = vunpack.c.l.b16 %v1258
    %v1291 = vunpack.c.l.b16 %v1259
    %v1292 = vunpack.c.l.b16 %v1260
    %v1293 = vunpack.c.l.b16 %v1261
    %v1294 = vunpack.c.l.b16 %v1262
    %v1295 = vunpack.c.l.b16 %v1263
    %v1296 = vunpack.c.l.b16 %v1264
    %v1297 = vunpack.c.l.b16 %v1265
    %v1298 = vunpack.c.l.b16 %v1266
    %v1299 = vunpack.c.l.b16 %v1267
    %v1300 = vunpack.c.l.b16 %v1268
    %v1301 = vunpack.c.l.b16 %v1269
    %v1302 = vunpack.c.l.b16 %v1270
    %v1303 = vunpack.c.l.b16 %v1271
    %v1304 = vunpack.c.l.b16 %v1272
    %v1305 = vpack.c.b16 %v1290, %v1289
    %v1306 = vpack.c.b16 %v1292, %v1291
    %v1307 = vpack.c.b16 %v1294, %v1293
    %v1308 = vpack.c.b16 %v1296, %v1295
    %v1309 = vpack.c.b16 %v1298, %v1297
    %v1310 = vpack.c.b16 %v1300, %v1299
    %v1311 = vpack.c.b16 %v1302, %v1301
    %v1312 = vpack.c.b16 %v1304, %v1303
    %1321 = vmatpush.bf16.msra.mxu0 %v1312
    %1322 = vmatpush.bf16.msra.mxu0 %v1311
    %1323 = vmatpush.bf16.msra.mxu0 %v1310
    %1324 = vmatpush.bf16.msra.mxu0 %v1309
    %1325 = vmatpush.bf16.msra.mxu0 %v1308
    %1326 = vmatpush.bf16.msra.mxu0 %v1307
    %1327 = vmatpush.bf16.msra.mxu0 %v1306
    %1328 = vmatpush.bf16.msra.mxu0 %v1305
    %1329 = vmatmul.bf16.gmra.mxu0 %v998
    %v1330 = vpop.f32.mrf.mxu0
    %v1331 = vadd.f32 0.0, %v1330
    %v1332 = vpop.f32.mrf.mxu0
    %v1333 = vadd.f32 0.0, %v1332
    %1334 = vmatmul.bf16.gmra.mxu0 %v999
    %v1335 = vpop.f32.mrf.mxu0
    %v1336 = vadd.f32 0.0, %v1335
    %v1337 = vpop.f32.mrf.mxu0
    %v1338 = vadd.f32 0.0, %v1337
    %1339 = vmatmul.bf16.gmra.mxu0 %v1000
    %v1340 = vpop.f32.mrf.mxu0
    %v1341 = vadd.f32 0.0, %v1340
    %v1342 = vpop.f32.mrf.mxu0
    %v1343 = vadd.f32 0.0, %v1342
    %1344 = vmatmul.bf16.gmra.mxu0 %v1001
    %v1345 = vpop.f32.mrf.mxu0
    %v1346 = vadd.f32 0.0, %v1345
    %v1347 = vpop.f32.mrf.mxu0
    %v1348 = vadd.f32 0.0, %v1347
    %1349 = vmatmul.bf16.gmra.mxu0 %v1002
    %v1350 = vpop.f32.mrf.mxu0
    %v1351 = vadd.f32 0.0, %v1350
    %v1352 = vpop.f32.mrf.mxu0
    %v1353 = vadd.f32 0.0, %v1352
    %1354 = vmatmul.bf16.gmra.mxu0 %v1003
    %v1355 = vpop.f32.mrf.mxu0
    %v1356 = vadd.f32 0.0, %v1355
    %v1357 = vpop.f32.mrf.mxu0
    %v1358 = vadd.f32 0.0, %v1357
    %1359 = vmatmul.bf16.gmra.mxu0 %v1004
    %v1360 = vpop.f32.mrf.mxu0
    %v1361 = vadd.f32 0.0, %v1360
    %v1362 = vpop.f32.mrf.mxu0
    %v1363 = vadd.f32 0.0, %v1362
    %1364 = vmatmul.bf16.gmra.mxu0 %v1005
    %v1365 = vpop.f32.mrf.mxu0
    %v1366 = vadd.f32 0.0, %v1365
    %v1367 = vpop.f32.mrf.mxu0
    %v1368 = vadd.f32 0.0, %v1367
    %1369 = vmatmul.bf16.gmra.mxu0 %v1006
    %v1370 = vpop.f32.mrf.mxu0
    %v1371 = vadd.f32 0.0, %v1370
    %v1372 = vpop.f32.mrf.mxu0
    %v1373 = vadd.f32 0.0, %v1372
    %1374 = vmatmul.bf16.gmra.mxu0 %v1007
    %v1375 = vpop.f32.mrf.mxu0
    %v1376 = vadd.f32 0.0, %v1375
    %v1377 = vpop.f32.mrf.mxu0
    %v1378 = vadd.f32 0.0, %v1377
    %1379 = vdwg.mxu0
    %v1380 = vrot.slane %v1083, 7
    %v1381 = vrot.slane %v1085, 7
    %v1382 = vrot.slane %v1088, 7
    %v1383 = vrot.slane %v1090, 7
    %v1384 = vrot.slane %v1093, 7
    %v1385 = vrot.slane %v1095, 7
    %v1386 = vrot.slane %v1098, 7
    %v1387 = vrot.slane %v1100, 7
    %v1388 = vrot.slane %v1103, 7
    %v1389 = vrot.slane %v1105, 7
    %v1390 = vrot.slane %v1108, 7
    %v1391 = vrot.slane %v1110, 7
    %v1392 = vrot.slane %v1113, 7
    %v1393 = vrot.slane %v1115, 7
    %v1394 = vrot.slane %v1118, 7
    %v1395 = vrot.slane %v1120, 7
    %v1396 = vrot.slane %v1123, 7
    %v1397 = vrot.slane %v1125, 7
    %v1398 = vrot.slane %v1128, 7
    %v1399 = vrot.slane %v1130, 7
    %v1400 = vsel %vm574, %v1398, %v1399
    %v1401 = vsel %vm574, %v1397, %v1398
    %v1402 = vsel %vm574, %v1396, %v1397
    %v1403 = vsel %vm574, %v1395, %v1396
    %v1404 = vsel %vm574, %v1394, %v1395
    %v1405 = vsel %vm574, %v1393, %v1394
    %v1406 = vsel %vm574, %v1392, %v1393
    %v1407 = vsel %vm574, %v1391, %v1392
    %v1408 = vsel %vm574, %v1390, %v1391
    %v1409 = vsel %vm574, %v1389, %v1390
    %v1410 = vsel %vm574, %v1388, %v1389
    %v1411 = vsel %vm574, %v1387, %v1388
    %v1412 = vsel %vm574, %v1386, %v1387
    %v1413 = vsel %vm574, %v1385, %v1386
    %v1414 = vsel %vm574, %v1384, %v1385
    %v1415 = vsel %vm574, %v1383, %v1384
    %v1416 = vsel %vm574, %v1382, %v1383
    %v1417 = vsel %vm574, %v1381, %v1382
    %v1418 = vsel %vm574, %v1380, %v1381
    %v1419 = vsel %vm574, %v1399, %v1380
    %v1420 = vmul.f32 %v1419, %v618
    %v1421 = vmul.f32 %v1418, %v623
    %v1422 = vmul.f32 %v1417, %v628
    %v1423 = vmul.f32 %v1416, %v633
    %v1424 = vmul.f32 %v1415, %v638
    %v1425 = vmul.f32 %v1414, %v643
    %v1426 = vmul.f32 %v1413, %v648
    %v1427 = vmul.f32 %v1412, %v653
    %v1428 = vmul.f32 %v1411, %v658
    %v1429 = vmul.f32 %v1410, %v663
    %v1430 = vmul.f32 %v1409, %v668
    %v1431 = vmul.f32 %v1408, %v673
    %v1432 = vmul.f32 %v1407, %v678
    %v1433 = vmul.f32 %v1406, %v683
    %v1434 = vmul.f32 %v1405, %v688
    %v1435 = vmul.f32 %v1404, %v693
    %v1436 = vmul.f32 %v1403, %v698
    %v1437 = vmul.f32 %v1402, %v703
    %v1438 = vmul.f32 %v1401, %v708
    %v1439 = vmul.f32 %v1400, %v713
    %v1440 = vrot.slane %v1331, 1
    %v1441 = vrot.slane %v1333, 1
    %v1442 = vrot.slane %v1336, 1
    %v1443 = vrot.slane %v1338, 1
    %v1444 = vrot.slane %v1341, 1
    %v1445 = vrot.slane %v1343, 1
    %v1446 = vrot.slane %v1346, 1
    %v1447 = vrot.slane %v1348, 1
    %v1448 = vrot.slane %v1351, 1
    %v1449 = vrot.slane %v1353, 1
    %v1450 = vrot.slane %v1356, 1
    %v1451 = vrot.slane %v1358, 1
    %v1452 = vrot.slane %v1361, 1
    %v1453 = vrot.slane %v1363, 1
    %v1454 = vrot.slane %v1366, 1
    %v1455 = vrot.slane %v1368, 1
    %v1456 = vrot.slane %v1371, 1
    %v1457 = vrot.slane %v1373, 1
    %v1458 = vrot.slane %v1376, 1
    %v1459 = vrot.slane %v1378, 1
    %v1460 = vsel %vm755, %v1458, %v1459
    %v1461 = vsel %vm755, %v1457, %v1458
    %v1462 = vsel %vm755, %v1456, %v1457
    %v1463 = vsel %vm755, %v1455, %v1456
    %v1464 = vsel %vm755, %v1454, %v1455
    %v1465 = vsel %vm755, %v1453, %v1454
    %v1466 = vsel %vm755, %v1452, %v1453
    %v1467 = vsel %vm755, %v1451, %v1452
    %v1468 = vsel %vm755, %v1450, %v1451
    %v1469 = vsel %vm755, %v1449, %v1450
    %v1470 = vsel %vm755, %v1448, %v1449
    %v1471 = vsel %vm755, %v1447, %v1448
    %v1472 = vsel %vm755, %v1446, %v1447
    %v1473 = vsel %vm755, %v1445, %v1446
    %v1474 = vsel %vm755, %v1444, %v1445
    %v1475 = vsel %vm755, %v1443, %v1444
    %v1476 = vsel %vm755, %v1442, %v1443
    %v1477 = vsel %vm755, %v1441, %v1442
    %v1478 = vsel %vm755, %v1440, %v1441
    %v1479 = vsel %vm755, %v1459, %v1440
    %v1480 = vmul.f32 %v1478, %v800
    %v1481 = vmul.f32 %v1477, %v805
    %v1482 = vmul.f32 %v1476, %v810
    %v1483 = vmul.f32 %v1475, %v815
    %v1484 = vmul.f32 %v1474, %v820
    %v1485 = vmul.f32 %v1473, %v825
    %v1486 = vmul.f32 %v1472, %v830
    %v1487 = vmul.f32 %v1471, %v835
    %v1488 = vmul.f32 %v1470, %v840
    %v1489 = vmul.f32 %v1469, %v845
    %v1490 = vmul.f32 %v1468, %v850
    %v1491 = vmul.f32 %v1467, %v855
    %v1492 = vmul.f32 %v1466, %v860
    %v1493 = vmul.f32 %v1465, %v865
    %v1494 = vmul.f32 %v1464, %v870
    %v1495 = vmul.f32 %v1463, %v875
    %v1496 = vmul.f32 %v1462, %v880
    %v1497 = vmul.f32 %v1461, %v885
    %v1498 = vmul.f32 %v1460, %v890
    %v1499 = vmul.f32 %v1479, %v895
    %v1500 = vadd.f32 %v1420, %v1207
    %v1501 = vadd.f32 %v1421, %v1209
    %v1502 = vadd.f32 %v1422, %v1212
    %v1503 = vadd.f32 %v1423, %v1214
    %v1504 = vadd.f32 %v1424, %v1217
    %v1505 = vadd.f32 %v1425, %v1219
    %v1506 = vadd.f32 %v1426, %v1222
    %v1507 = vadd.f32 %v1427, %v1224
    %v1508 = vadd.f32 %v1428, %v1227
    %v1509 = vadd.f32 %v1429, %v1229
    %v1510 = vadd.f32 %v1430, %v1232
    %v1511 = vadd.f32 %v1431, %v1234
    %v1512 = vadd.f32 %v1432, %v1237
    %v1513 = vadd.f32 %v1433, %v1239
    %v1514 = vadd.f32 %v1434, %v1242
    %v1515 = vadd.f32 %v1435, %v1244
    %v1516 = vadd.f32 %v1436, %v1247
    %v1517 = vadd.f32 %v1437, %v1249
    %v1518 = vadd.f32 %v1438, %v1252
    %v1519 = vadd.f32 %v1439, %v1254
    %v1520 = vadd.f32 %v1500, %v1480
    %v1521 = vadd.f32 %v1501, %v1481
    %v1522 = vadd.f32 %v1502, %v1482
    %v1523 = vadd.f32 %v1503, %v1483
    %v1524 = vadd.f32 %v1504, %v1484
    %v1525 = vadd.f32 %v1505, %v1485
    %v1526 = vadd.f32 %v1506, %v1486
    %v1527 = vadd.f32 %v1507, %v1487
    %v1528 = vadd.f32 %v1508, %v1488
    %v1529 = vadd.f32 %v1509, %v1489
    %v1530 = vadd.f32 %v1510, %v1490
    %v1531 = vadd.f32 %v1511, %v1491
    %v1532 = vadd.f32 %v1512, %v1492
    %v1533 = vadd.f32 %v1513, %v1493
    %v1534 = vadd.f32 %v1514, %v1494
    %v1535 = vadd.f32 %v1515, %v1495
    %v1536 = vadd.f32 %v1516, %v1496
    %v1537 = vadd.f32 %v1517, %v1497
    %v1538 = vadd.f32 %v1518, %v1498
    %v1539 = vadd.f32 %v1519, %v1499
    %v1540 = vperm.slane %v149, 1
    %v1541 = vadd.f32 %v1520, %v1540
    %v1542 = vadd.f32 %v1521, %v1540
    %v1543 = vadd.f32 %v1522, %v1540
    %v1544 = vadd.f32 %v1523, %v1540
    %v1545 = vadd.f32 %v1524, %v1540
    %v1546 = vadd.f32 %v1525, %v1540
    %v1547 = vadd.f32 %v1526, %v1540
    %v1548 = vadd.f32 %v1527, %v1540
    %v1549 = vadd.f32 %v1528, %v1540
    %v1550 = vadd.f32 %v1529, %v1540
    %v1551 = vadd.f32 %v1530, %v1540
    %v1552 = vadd.f32 %v1531, %v1540
    %v1553 = vadd.f32 %v1532, %v1540
    %v1554 = vadd.f32 %v1533, %v1540
    %v1555 = vadd.f32 %v1534, %v1540
    %v1556 = vadd.f32 %v1535, %v1540
    %v1557 = vadd.f32 %v1536, %v1540
    %v1558 = vadd.f32 %v1537, %v1540
    %v1559 = vadd.f32 %v1538, %v1540
    %v1560 = vadd.f32 %v1539, %v1540
    %s1561 = scalar_lea.vmem [#allocation5], 384
    %v1562 = vld [vmem:[%s1561] sm:$0xf]
    %v1563 = vld [vmem:[%s1561 + $0x4] sm:$0xf]
    %v1564 = vld [vmem:[%s1561 + $0x8] sm:$0xf]
    %v1565 = vld [vmem:[%s1561 + $0xc] sm:$0xf]
    %v1566 = vld [vmem:[%s1561 + $0x10] sm:$0xf]
    %v1567 = vld [vmem:[%s1561 + $0x14] sm:$0xf]
    %v1568 = vld [vmem:[%s1561 + $0x18] sm:$0xf]
    %v1569 = vld [vmem:[%s1561 + $0x1c] sm:$0xf]
    %v1570 = vld [vmem:[%s1561 + $0x20] sm:$0xf]
    %v1571 = vld [vmem:[%s1561 + $0x24] sm:$0xf]
    %v1572 = vld [vmem:[%s1561 + $0x28] sm:$0xf]
    %v1573 = vld [vmem:[%s1561 + $0x2c] sm:$0xf]
    %v1574 = vld [vmem:[%s1561 + $0x30] sm:$0xf]
    %v1575 = vld [vmem:[%s1561 + $0x34] sm:$0xf]
    %v1576 = vld [vmem:[%s1561 + $0x38] sm:$0xf]
    %v1577 = vld [vmem:[%s1561 + $0x3c] sm:$0xf]
    %v1578 = vperm.slane %v149, 2
    %v1595 = vunpack.c.l.b16 %v1562
    %v1596 = vunpack.c.l.b16 %v1563
    %v1597 = vunpack.c.l.b16 %v1564
    %v1598 = vunpack.c.l.b16 %v1565
    %v1599 = vunpack.c.l.b16 %v1566
    %v1600 = vunpack.c.l.b16 %v1567
    %v1601 = vunpack.c.l.b16 %v1568
    %v1602 = vunpack.c.l.b16 %v1569
    %v1603 = vunpack.c.l.b16 %v1570
    %v1604 = vunpack.c.l.b16 %v1571
    %v1605 = vunpack.c.l.b16 %v1572
    %v1606 = vunpack.c.l.b16 %v1573
    %v1607 = vunpack.c.l.b16 %v1574
    %v1608 = vunpack.c.l.b16 %v1575
    %v1609 = vunpack.c.l.b16 %v1576
    %v1610 = vunpack.c.l.b16 %v1577
    %v1611 = vpack.c.b16 %v1596, %v1595
    %v1612 = vpack.c.b16 %v1598, %v1597
    %v1613 = vpack.c.b16 %v1600, %v1599
    %v1614 = vpack.c.b16 %v1602, %v1601
    %v1615 = vpack.c.b16 %v1604, %v1603
    %v1616 = vpack.c.b16 %v1606, %v1605
    %v1617 = vpack.c.b16 %v1608, %v1607
    %v1618 = vpack.c.b16 %v1610, %v1609
    %1627 = vmatpush.bf16.msra.mxu0 %v1618
    %1628 = vmatpush.bf16.msra.mxu0 %v1617
    %1629 = vmatpush.bf16.msra.mxu0 %v1616
    %1630 = vmatpush.bf16.msra.mxu0 %v1615
    %1631 = vmatpush.bf16.msra.mxu0 %v1614
    %1632 = vmatpush.bf16.msra.mxu0 %v1613
    %1633 = vmatpush.bf16.msra.mxu0 %v1612
    %1634 = vmatpush.bf16.msra.mxu0 %v1611
    %1635 = vmatmul.bf16.gmra.mxu0 %v171
    %v1636 = vpop.f32.mrf.mxu0
    %v1637 = vadd.f32 %v1578, %v1636
    %v1638 = vpop.f32.mrf.mxu0
    %v1639 = vadd.f32 %v1578, %v1638
    %1640 = vmatmul.bf16.gmra.mxu0 %v172
    %v1641 = vpop.f32.mrf.mxu0
    %v1642 = vadd.f32 %v1578, %v1641
    %v1643 = vpop.f32.mrf.mxu0
    %v1644 = vadd.f32 %v1578, %v1643
    %1645 = vmatmul.bf16.gmra.mxu0 %v173
    %v1646 = vpop.f32.mrf.mxu0
    %v1647 = vadd.f32 %v1578, %v1646
    %v1648 = vpop.f32.mrf.mxu0
    %v1649 = vadd.f32 %v1578, %v1648
    %1650 = vmatmul.bf16.gmra.mxu0 %v174
    %v1651 = vpop.f32.mrf.mxu0
    %v1652 = vadd.f32 %v1578, %v1651
    %v1653 = vpop.f32.mrf.mxu0
    %v1654 = vadd.f32 %v1578, %v1653
    %1655 = vmatmul.bf16.gmra.mxu0 %v175
    %v1656 = vpop.f32.mrf.mxu0
    %v1657 = vadd.f32 %v1578, %v1656
    %v1658 = vpop.f32.mrf.mxu0
    %v1659 = vadd.f32 %v1578, %v1658
    %1660 = vmatmul.bf16.gmra.mxu0 %v176
    %v1661 = vpop.f32.mrf.mxu0
    %v1662 = vadd.f32 %v1578, %v1661
    %v1663 = vpop.f32.mrf.mxu0
    %v1664 = vadd.f32 %v1578, %v1663
    %1665 = vmatmul.bf16.gmra.mxu0 %v177
    %v1666 = vpop.f32.mrf.mxu0
    %v1667 = vadd.f32 %v1578, %v1666
    %v1668 = vpop.f32.mrf.mxu0
    %v1669 = vadd.f32 %v1578, %v1668
    %1670 = vmatmul.bf16.gmra.mxu0 %v178
    %v1671 = vpop.f32.mrf.mxu0
    %v1672 = vadd.f32 %v1578, %v1671
    %v1673 = vpop.f32.mrf.mxu0
    %v1674 = vadd.f32 %v1578, %v1673
    %1675 = vmatmul.bf16.gmra.mxu0 %v179
    %v1676 = vpop.f32.mrf.mxu0
    %v1677 = vadd.f32 %v1578, %v1676
    %v1678 = vpop.f32.mrf.mxu0
    %v1679 = vadd.f32 %v1578, %v1678
    %1680 = vmatmul.bf16.gmra.mxu0 %v180
    %v1681 = vpop.f32.mrf.mxu0
    %v1682 = vadd.f32 %v1578, %v1681
    %v1683 = vpop.f32.mrf.mxu0
    %v1684 = vadd.f32 %v1578, %v1683
    %1685 = vdwg.mxu0
    %v1686 = vadd.f32 %v1541, %v1637
    %v1687 = vadd.f32 %v1542, %v1639
    %v1688 = vadd.f32 %v1543, %v1642
    %v1689 = vadd.f32 %v1544, %v1644
    %v1690 = vadd.f32 %v1545, %v1647
    %v1691 = vadd.f32 %v1546, %v1649
    %v1692 = vadd.f32 %v1547, %v1652
    %v1693 = vadd.f32 %v1548, %v1654
    %v1694 = vadd.f32 %v1549, %v1657
    %v1695 = vadd.f32 %v1550, %v1659
    %v1696 = vadd.f32 %v1551, %v1662
    %v1697 = vadd.f32 %v1552, %v1664
    %v1698 = vadd.f32 %v1553, %v1667
    %v1699 = vadd.f32 %v1554, %v1669
    %v1700 = vadd.f32 %v1555, %v1672
    %v1701 = vadd.f32 %v1556, %v1674
    %v1702 = vadd.f32 %v1557, %v1677
    %v1703 = vadd.f32 %v1558, %v1679
    %v1704 = vadd.f32 %v1559, %v1682
    %v1705 = vadd.f32 %v1560, %v1684
    %v1706 = vmax.f32 %v1686, 0.0
    %v1707 = vmax.f32 %v1687, 0.0
    %v1708 = vmax.f32 %v1688, 0.0
    %v1709 = vmax.f32 %v1689, 0.0
    %v1710 = vmax.f32 %v1690, 0.0
    %v1711 = vmax.f32 %v1691, 0.0
    %v1712 = vmax.f32 %v1692, 0.0
    %v1713 = vmax.f32 %v1693, 0.0
    %v1714 = vmax.f32 %v1694, 0.0
    %v1715 = vmax.f32 %v1695, 0.0
    %v1716 = vmax.f32 %v1696, 0.0
    %v1717 = vmax.f32 %v1697, 0.0
    %v1718 = vmax.f32 %v1698, 0.0
    %v1719 = vmax.f32 %v1699, 0.0
    %v1720 = vmax.f32 %v1700, 0.0
    %v1721 = vmax.f32 %v1701, 0.0
    %v1722 = vmax.f32 %v1702, 0.0
    %v1723 = vmax.f32 %v1703, 0.0
    %v1724 = vmax.f32 %v1704, 0.0
    %v1725 = vmax.f32 %v1705, 0.0
    %v1726 = vpack.c.bf16 %v1707, %v1706
    %v1727 = vpack.c.bf16 %v1709, %v1708
    %v1728 = vpack.c.bf16 %v1711, %v1710
    %v1729 = vpack.c.bf16 %v1713, %v1712
    %v1730 = vpack.c.bf16 %v1715, %v1714
    %v1731 = vpack.c.bf16 %v1717, %v1716
    %v1732 = vpack.c.bf16 %v1719, %v1718
    %v1733 = vpack.c.bf16 %v1721, %v1720
    %v1734 = vpack.c.bf16 %v1723, %v1722
    %v1735 = vpack.c.bf16 %v1725, %v1724
    %s1736 = scalar_lea.vmem [#allocation5], 448
    %v1737 = vld [vmem:[%s1736] sm:$0xf]
    %v1738 = vld [vmem:[%s1736 + $0x4] sm:$0xf]
    %v1739 = vld [vmem:[%s1736 + $0x8] sm:$0xf]
    %v1740 = vld [vmem:[%s1736 + $0xc] sm:$0xf]
    %v1741 = vld [vmem:[%s1736 + $0x10] sm:$0xf]
    %v1742 = vld [vmem:[%s1736 + $0x14] sm:$0xf]
    %v1743 = vld [vmem:[%s1736 + $0x18] sm:$0xf]
    %v1744 = vld [vmem:[%s1736 + $0x1c] sm:$0xf]
    %v1745 = vld [vmem:[%s1736 + $0x20] sm:$0xf]
    %v1746 = vld [vmem:[%s1736 + $0x24] sm:$0xf]
    %v1747 = vld [vmem:[%s1736 + $0x28] sm:$0xf]
    %v1748 = vld [vmem:[%s1736 + $0x2c] sm:$0xf]
    %v1749 = vld [vmem:[%s1736 + $0x30] sm:$0xf]
    %v1750 = vld [vmem:[%s1736 + $0x34] sm:$0xf]
    %v1751 = vld [vmem:[%s1736 + $0x38] sm:$0xf]
    %v1752 = vld [vmem:[%s1736 + $0x3c] sm:$0xf]
    %v1769 = vunpack.c.l.b16 %v1737
    %v1770 = vunpack.c.l.b16 %v1738
    %v1771 = vunpack.c.l.b16 %v1739
    %v1772 = vunpack.c.l.b16 %v1740
    %v1773 = vunpack.c.l.b16 %v1741
    %v1774 = vunpack.c.l.b16 %v1742
    %v1775 = vunpack.c.l.b16 %v1743
    %v1776 = vunpack.c.l.b16 %v1744
    %v1777 = vunpack.c.l.b16 %v1745
    %v1778 = vunpack.c.l.b16 %v1746
    %v1779 = vunpack.c.l.b16 %v1747
    %v1780 = vunpack.c.l.b16 %v1748
    %v1781 = vunpack.c.l.b16 %v1749
    %v1782 = vunpack.c.l.b16 %v1750
    %v1783 = vunpack.c.l.b16 %v1751
    %v1784 = vunpack.c.l.b16 %v1752
    %v1785 = vpack.c.b16 %v1770, %v1769
    %v1786 = vpack.c.b16 %v1772, %v1771
    %v1787 = vpack.c.b16 %v1774, %v1773
    %v1788 = vpack.c.b16 %v1776, %v1775
    %v1789 = vpack.c.b16 %v1778, %v1777
    %v1790 = vpack.c.b16 %v1780, %v1779
    %v1791 = vpack.c.b16 %v1782, %v1781
    %v1792 = vpack.c.b16 %v1784, %v1783
    %1801 = vmatpush.bf16.msra.mxu0 %v1792
    %1802 = vmatpush.bf16.msra.mxu0 %v1791
    %1803 = vmatpush.bf16.msra.mxu0 %v1790
    %1804 = vmatpush.bf16.msra.mxu0 %v1789
    %1805 = vmatpush.bf16.msra.mxu0 %v1788
    %1806 = vmatpush.bf16.msra.mxu0 %v1787
    %1807 = vmatpush.bf16.msra.mxu0 %v1786
    %1808 = vmatpush.bf16.msra.mxu0 %v1785
    %1809 = vmatmul.bf16.gmra.mxu0 %v1726
    %v1810 = vpop.f32.mrf.mxu0
    %v1811 = vadd.f32 0.0, %v1810
    %v1812 = vpop.f32.mrf.mxu0
    %v1813 = vadd.f32 0.0, %v1812
    %1814 = vmatmul.bf16.gmra.mxu0 %v1727
    %v1815 = vpop.f32.mrf.mxu0
    %v1816 = vadd.f32 0.0, %v1815
    %v1817 = vpop.f32.mrf.mxu0
    %v1818 = vadd.f32 0.0, %v1817
    %1819 = vmatmul.bf16.gmra.mxu0 %v1728
    %v1820 = vpop.f32.mrf.mxu0
    %v1821 = vadd.f32 0.0, %v1820
    %v1822 = vpop.f32.mrf.mxu0
    %v1823 = vadd.f32 0.0, %v1822
    %1824 = vmatmul.bf16.gmra.mxu0 %v1729
    %v1825 = vpop.f32.mrf.mxu0
    %v1826 = vadd.f32 0.0, %v1825
    %v1827 = vpop.f32.mrf.mxu0
    %v1828 = vadd.f32 0.0, %v1827
    %1829 = vmatmul.bf16.gmra.mxu0 %v1730
    %v1830 = vpop.f32.mrf.mxu0
    %v1831 = vadd.f32 0.0, %v1830
    %v1832 = vpop.f32.mrf.mxu0
    %v1833 = vadd.f32 0.0, %v1832
    %1834 = vmatmul.bf16.gmra.mxu0 %v1731
    %v1835 = vpop.f32.mrf.mxu0
    %v1836 = vadd.f32 0.0, %v1835
    %v1837 = vpop.f32.mrf.mxu0
    %v1838 = vadd.f32 0.0, %v1837
    %1839 = vmatmul.bf16.gmra.mxu0 %v1732
    %v1840 = vpop.f32.mrf.mxu0
    %v1841 = vadd.f32 0.0, %v1840
    %v1842 = vpop.f32.mrf.mxu0
    %v1843 = vadd.f32 0.0, %v1842
    %1844 = vmatmul.bf16.gmra.mxu0 %v1733
    %v1845 = vpop.f32.mrf.mxu0
    %v1846 = vadd.f32 0.0, %v1845
    %v1847 = vpop.f32.mrf.mxu0
    %v1848 = vadd.f32 0.0, %v1847
    %1849 = vmatmul.bf16.gmra.mxu0 %v1734
    %v1850 = vpop.f32.mrf.mxu0
    %v1851 = vadd.f32 0.0, %v1850
    %v1852 = vpop.f32.mrf.mxu0
    %v1853 = vadd.f32 0.0, %v1852
    %1854 = vmatmul.bf16.gmra.mxu0 %v1735
    %v1855 = vpop.f32.mrf.mxu0
    %v1856 = vadd.f32 0.0, %v1855
    %v1857 = vpop.f32.mrf.mxu0
    %v1858 = vadd.f32 0.0, %v1857
    %1859 = vdwg.mxu0
    %s1860 = scalar_lea.vmem [#allocation5], 512
    %v1861 = vld [vmem:[%s1860] sm:$0xf]
    %v1862 = vld [vmem:[%s1860 + $0x4] sm:$0xf]
    %v1863 = vld [vmem:[%s1860 + $0x8] sm:$0xf]
    %v1864 = vld [vmem:[%s1860 + $0xc] sm:$0xf]
    %v1865 = vld [vmem:[%s1860 + $0x10] sm:$0xf]
    %v1866 = vld [vmem:[%s1860 + $0x14] sm:$0xf]
    %v1867 = vld [vmem:[%s1860 + $0x18] sm:$0xf]
    %v1868 = vld [vmem:[%s1860 + $0x1c] sm:$0xf]
    %v1869 = vld [vmem:[%s1860 + $0x20] sm:$0xf]
    %v1870 = vld [vmem:[%s1860 + $0x24] sm:$0xf]
    %v1871 = vld [vmem:[%s1860 + $0x28] sm:$0xf]
    %v1872 = vld [vmem:[%s1860 + $0x2c] sm:$0xf]
    %v1873 = vld [vmem:[%s1860 + $0x30] sm:$0xf]
    %v1874 = vld [vmem:[%s1860 + $0x34] sm:$0xf]
    %v1875 = vld [vmem:[%s1860 + $0x38] sm:$0xf]
    %v1876 = vld [vmem:[%s1860 + $0x3c] sm:$0xf]
    %v1893 = vunpack.c.l.b16 %v1861
    %v1894 = vunpack.c.l.b16 %v1862
    %v1895 = vunpack.c.l.b16 %v1863
    %v1896 = vunpack.c.l.b16 %v1864
    %v1897 = vunpack.c.l.b16 %v1865
    %v1898 = vunpack.c.l.b16 %v1866
    %v1899 = vunpack.c.l.b16 %v1867
    %v1900 = vunpack.c.l.b16 %v1868
    %v1901 = vunpack.c.l.b16 %v1869
    %v1902 = vunpack.c.l.b16 %v1870
    %v1903 = vunpack.c.l.b16 %v1871
    %v1904 = vunpack.c.l.b16 %v1872
    %v1905 = vunpack.c.l.b16 %v1873
    %v1906 = vunpack.c.l.b16 %v1874
    %v1907 = vunpack.c.l.b16 %v1875
    %v1908 = vunpack.c.l.b16 %v1876
    %v1909 = vpack.c.b16 %v1894, %v1893
    %v1910 = vpack.c.b16 %v1896, %v1895
    %v1911 = vpack.c.b16 %v1898, %v1897
    %v1912 = vpack.c.b16 %v1900, %v1899
    %v1913 = vpack.c.b16 %v1902, %v1901
    %v1914 = vpack.c.b16 %v1904, %v1903
    %v1915 = vpack.c.b16 %v1906, %v1905
    %v1916 = vpack.c.b16 %v1908, %v1907
    %1925 = vmatpush.bf16.msra.mxu0 %v1916
    %1926 = vmatpush.bf16.msra.mxu0 %v1915
    %1927 = vmatpush.bf16.msra.mxu0 %v1914
    %1928 = vmatpush.bf16.msra.mxu0 %v1913
    %1929 = vmatpush.bf16.msra.mxu0 %v1912
    %1930 = vmatpush.bf16.msra.mxu0 %v1911
    %1931 = vmatpush.bf16.msra.mxu0 %v1910
    %1932 = vmatpush.bf16.msra.mxu0 %v1909
    %1933 = vmatmul.bf16.gmra.mxu0 %v1726
    %v1934 = vpop.f32.mrf.mxu0
    %v1935 = vadd.f32 0.0, %v1934
    %v1936 = vpop.f32.mrf.mxu0
    %v1937 = vadd.f32 0.0, %v1936
    %1938 = vmatmul.bf16.gmra.mxu0 %v1727
    %v1939 = vpop.f32.mrf.mxu0
    %v1940 = vadd.f32 0.0, %v1939
    %v1941 = vpop.f32.mrf.mxu0
    %v1942 = vadd.f32 0.0, %v1941
    %1943 = vmatmul.bf16.gmra.mxu0 %v1728
    %v1944 = vpop.f32.mrf.mxu0
    %v1945 = vadd.f32 0.0, %v1944
    %v1946 = vpop.f32.mrf.mxu0
    %v1947 = vadd.f32 0.0, %v1946
    %1948 = vmatmul.bf16.gmra.mxu0 %v1729
    %v1949 = vpop.f32.mrf.mxu0
    %v1950 = vadd.f32 0.0, %v1949
    %v1951 = vpop.f32.mrf.mxu0
    %v1952 = vadd.f32 0.0, %v1951
    %1953 = vmatmul.bf16.gmra.mxu0 %v1730
    %v1954 = vpop.f32.mrf.mxu0
    %v1955 = vadd.f32 0.0, %v1954
    %v1956 = vpop.f32.mrf.mxu0
    %v1957 = vadd.f32 0.0, %v1956
    %1958 = vmatmul.bf16.gmra.mxu0 %v1731
    %v1959 = vpop.f32.mrf.mxu0
    %v1960 = vadd.f32 0.0, %v1959
    %v1961 = vpop.f32.mrf.mxu0
    %v1962 = vadd.f32 0.0, %v1961
    %1963 = vmatmul.bf16.gmra.mxu0 %v1732
    %v1964 = vpop.f32.mrf.mxu0
    %v1965 = vadd.f32 0.0, %v1964
    %v1966 = vpop.f32.mrf.mxu0
    %v1967 = vadd.f32 0.0, %v1966
    %1968 = vmatmul.bf16.gmra.mxu0 %v1733
    %v1969 = vpop.f32.mrf.mxu0
    %v1970 = vadd.f32 0.0, %v1969
    %v1971 = vpop.f32.mrf.mxu0
    %v1972 = vadd.f32 0.0, %v1971
    %1973 = vmatmul.bf16.gmra.mxu0 %v1734
    %v1974 = vpop.f32.mrf.mxu0
    %v1975 = vadd.f32 0.0, %v1974
    %v1976 = vpop.f32.mrf.mxu0
    %v1977 = vadd.f32 0.0, %v1976
    %1978 = vmatmul.bf16.gmra.mxu0 %v1735
    %v1979 = vpop.f32.mrf.mxu0
    %v1980 = vadd.f32 0.0, %v1979
    %v1981 = vpop.f32.mrf.mxu0
    %v1982 = vadd.f32 0.0, %v1981
    %1983 = vdwg.mxu0
    %s1984 = scalar_lea.vmem [#allocation5], 576
    %v1985 = vld [vmem:[%s1984] sm:$0xf]
    %v1986 = vld [vmem:[%s1984 + $0x4] sm:$0xf]
    %v1987 = vld [vmem:[%s1984 + $0x8] sm:$0xf]
    %v1988 = vld [vmem:[%s1984 + $0xc] sm:$0xf]
    %v1989 = vld [vmem:[%s1984 + $0x10] sm:$0xf]
    %v1990 = vld [vmem:[%s1984 + $0x14] sm:$0xf]
    %v1991 = vld [vmem:[%s1984 + $0x18] sm:$0xf]
    %v1992 = vld [vmem:[%s1984 + $0x1c] sm:$0xf]
    %v1993 = vld [vmem:[%s1984 + $0x20] sm:$0xf]
    %v1994 = vld [vmem:[%s1984 + $0x24] sm:$0xf]
    %v1995 = vld [vmem:[%s1984 + $0x28] sm:$0xf]
    %v1996 = vld [vmem:[%s1984 + $0x2c] sm:$0xf]
    %v1997 = vld [vmem:[%s1984 + $0x30] sm:$0xf]
    %v1998 = vld [vmem:[%s1984 + $0x34] sm:$0xf]
    %v1999 = vld [vmem:[%s1984 + $0x38] sm:$0xf]
    %v2000 = vld [vmem:[%s1984 + $0x3c] sm:$0xf]
    %v2017 = vunpack.c.l.b16 %v1985
    %v2018 = vunpack.c.l.b16 %v1986
    %v2019 = vunpack.c.l.b16 %v1987
    %v2020 = vunpack.c.l.b16 %v1988
    %v2021 = vunpack.c.l.b16 %v1989
    %v2022 = vunpack.c.l.b16 %v1990
    %v2023 = vunpack.c.l.b16 %v1991
    %v2024 = vunpack.c.l.b16 %v1992
    %v2025 = vunpack.c.l.b16 %v1993
    %v2026 = vunpack.c.l.b16 %v1994
    %v2027 = vunpack.c.l.b16 %v1995
    %v2028 = vunpack.c.l.b16 %v1996
    %v2029 = vunpack.c.l.b16 %v1997
    %v2030 = vunpack.c.l.b16 %v1998
    %v2031 = vunpack.c.l.b16 %v1999
    %v2032 = vunpack.c.l.b16 %v2000
    %v2033 = vpack.c.b16 %v2018, %v2017
    %v2034 = vpack.c.b16 %v2020, %v2019
    %v2035 = vpack.c.b16 %v2022, %v2021
    %v2036 = vpack.c.b16 %v2024, %v2023
    %v2037 = vpack.c.b16 %v2026, %v2025
    %v2038 = vpack.c.b16 %v2028, %v2027
    %v2039 = vpack.c.b16 %v2030, %v2029
    %v2040 = vpack.c.b16 %v2032, %v2031
    %2049 = vmatpush.bf16.msra.mxu0 %v2040
    %2050 = vmatpush.bf16.msra.mxu0 %v2039
    %2051 = vmatpush.bf16.msra.mxu0 %v2038
    %2052 = vmatpush.bf16.msra.mxu0 %v2037
    %2053 = vmatpush.bf16.msra.mxu0 %v2036
    %2054 = vmatpush.bf16.msra.mxu0 %v2035
    %2055 = vmatpush.bf16.msra.mxu0 %v2034
    %2056 = vmatpush.bf16.msra.mxu0 %v2033
    %2057 = vmatmul.bf16.gmra.mxu0 %v1726
    %v2058 = vpop.f32.mrf.mxu0
    %v2059 = vadd.f32 0.0, %v2058
    %v2060 = vpop.f32.mrf.mxu0
    %v2061 = vadd.f32 0.0, %v2060
    %2062 = vmatmul.bf16.gmra.mxu0 %v1727
    %v2063 = vpop.f32.mrf.mxu0
    %v2064 = vadd.f32 0.0, %v2063
    %v2065 = vpop.f32.mrf.mxu0
    %v2066 = vadd.f32 0.0, %v2065
    %2067 = vmatmul.bf16.gmra.mxu0 %v1728
    %v2068 = vpop.f32.mrf.mxu0
    %v2069 = vadd.f32 0.0, %v2068
    %v2070 = vpop.f32.mrf.mxu0
    %v2071 = vadd.f32 0.0, %v2070
    %2072 = vmatmul.bf16.gmra.mxu0 %v1729
    %v2073 = vpop.f32.mrf.mxu0
    %v2074 = vadd.f32 0.0, %v2073
    %v2075 = vpop.f32.mrf.mxu0
    %v2076 = vadd.f32 0.0, %v2075
    %2077 = vmatmul.bf16.gmra.mxu0 %v1730
    %v2078 = vpop.f32.mrf.mxu0
    %v2079 = vadd.f32 0.0, %v2078
    %v2080 = vpop.f32.mrf.mxu0
    %v2081 = vadd.f32 0.0, %v2080
    %2082 = vmatmul.bf16.gmra.mxu0 %v1731
    %v2083 = vpop.f32.mrf.mxu0
    %v2084 = vadd.f32 0.0, %v2083
    %v2085 = vpop.f32.mrf.mxu0
    %v2086 = vadd.f32 0.0, %v2085
    %2087 = vmatmul.bf16.gmra.mxu0 %v1732
    %v2088 = vpop.f32.mrf.mxu0
    %v2089 = vadd.f32 0.0, %v2088
    %v2090 = vpop.f32.mrf.mxu0
    %v2091 = vadd.f32 0.0, %v2090
    %2092 = vmatmul.bf16.gmra.mxu0 %v1733
    %v2093 = vpop.f32.mrf.mxu0
    %v2094 = vadd.f32 0.0, %v2093
    %v2095 = vpop.f32.mrf.mxu0
    %v2096 = vadd.f32 0.0, %v2095
    %2097 = vmatmul.bf16.gmra.mxu0 %v1734
    %v2098 = vpop.f32.mrf.mxu0
    %v2099 = vadd.f32 0.0, %v2098
    %v2100 = vpop.f32.mrf.mxu0
    %v2101 = vadd.f32 0.0, %v2100
    %2102 = vmatmul.bf16.gmra.mxu0 %v1735
    %v2103 = vpop.f32.mrf.mxu0
    %v2104 = vadd.f32 0.0, %v2103
    %v2105 = vpop.f32.mrf.mxu0
    %v2106 = vadd.f32 0.0, %v2105
    %2107 = vdwg.mxu0
    %v2108 = vrot.slane %v1811, 7
    %v2109 = vrot.slane %v1813, 7
    %v2110 = vrot.slane %v1816, 7
    %v2111 = vrot.slane %v1818, 7
    %v2112 = vrot.slane %v1821, 7
    %v2113 = vrot.slane %v1823, 7
    %v2114 = vrot.slane %v1826, 7
    %v2115 = vrot.slane %v1828, 7
    %v2116 = vrot.slane %v1831, 7
    %v2117 = vrot.slane %v1833, 7
    %v2118 = vrot.slane %v1836, 7
    %v2119 = vrot.slane %v1838, 7
    %v2120 = vrot.slane %v1841, 7
    %v2121 = vrot.slane %v1843, 7
    %v2122 = vrot.slane %v1846, 7
    %v2123 = vrot.slane %v1848, 7
    %v2124 = vrot.slane %v1851, 7
    %v2125 = vrot.slane %v1853, 7
    %v2126 = vrot.slane %v1856, 7
    %v2127 = vrot.slane %v1858, 7
    %v2128 = vsel %vm574, %v2126, %v2127
    %v2129 = vsel %vm574, %v2125, %v2126
    %v2130 = vsel %vm574, %v2124, %v2125
    %v2131 = vsel %vm574, %v2123, %v2124
    %v2132 = vsel %vm574, %v2122, %v2123
    %v2133 = vsel %vm574, %v2121, %v2122
    %v2134 = vsel %vm574, %v2120, %v2121
    %v2135 = vsel %vm574, %v2119, %v2120
    %v2136 = vsel %vm574, %v2118, %v2119
    %v2137 = vsel %vm574, %v2117, %v2118
    %v2138 = vsel %vm574, %v2116, %v2117
    %v2139 = vsel %vm574, %v2115, %v2116
    %v2140 = vsel %vm574, %v2114, %v2115
    %v2141 = vsel %vm574, %v2113, %v2114
    %v2142 = vsel %vm574, %v2112, %v2113
    %v2143 = vsel %vm574, %v2111, %v2112
    %v2144 = vsel %vm574, %v2110, %v2111
    %v2145 = vsel %vm574, %v2109, %v2110
    %v2146 = vsel %vm574, %v2108, %v2109
    %v2147 = vsel %vm574, %v2127, %v2108
    %v2148 = vmul.f32 %v2147, %v618
    %v2149 = vmul.f32 %v2146, %v623
    %v2150 = vmul.f32 %v2145, %v628
    %v2151 = vmul.f32 %v2144, %v633
    %v2152 = vmul.f32 %v2143, %v638
    %v2153 = vmul.f32 %v2142, %v643
    %v2154 = vmul.f32 %v2141, %v648
    %v2155 = vmul.f32 %v2140, %v653
    %v2156 = vmul.f32 %v2139, %v658
    %v2157 = vmul.f32 %v2138, %v663
    %v2158 = vmul.f32 %v2137, %v668
    %v2159 = vmul.f32 %v2136, %v673
    %v2160 = vmul.f32 %v2135, %v678
    %v2161 = vmul.f32 %v2134, %v683
    %v2162 = vmul.f32 %v2133, %v688
    %v2163 = vmul.f32 %v2132, %v693
    %v2164 = vmul.f32 %v2131, %v698
    %v2165 = vmul.f32 %v2130, %v703
    %v2166 = vmul.f32 %v2129, %v708
    %v2167 = vmul.f32 %v2128, %v713
    %v2168 = vrot.slane %v2059, 1
    %v2169 = vrot.slane %v2061, 1
    %v2170 = vrot.slane %v2064, 1
    %v2171 = vrot.slane %v2066, 1
    %v2172 = vrot.slane %v2069, 1
    %v2173 = vrot.slane %v2071, 1
    %v2174 = vrot.slane %v2074, 1
    %v2175 = vrot.slane %v2076, 1
    %v2176 = vrot.slane %v2079, 1
    %v2177 = vrot.slane %v2081, 1
    %v2178 = vrot.slane %v2084, 1
    %v2179 = vrot.slane %v2086, 1
    %v2180 = vrot.slane %v2089, 1
    %v2181 = vrot.slane %v2091, 1
    %v2182 = vrot.slane %v2094, 1
    %v2183 = vrot.slane %v2096, 1
    %v2184 = vrot.slane %v2099, 1
    %v2185 = vrot.slane %v2101, 1
    %v2186 = vrot.slane %v2104, 1
    %v2187 = vrot.slane %v2106, 1
    %v2188 = vsel %vm755, %v2186, %v2187
    %v2189 = vsel %vm755, %v2185, %v2186
    %v2190 = vsel %vm755, %v2184, %v2185
    %v2191 = vsel %vm755, %v2183, %v2184
    %v2192 = vsel %vm755, %v2182, %v2183
    %v2193 = vsel %vm755, %v2181, %v2182
    %v2194 = vsel %vm755, %v2180, %v2181
    %v2195 = vsel %vm755, %v2179, %v2180
    %v2196 = vsel %vm755, %v2178, %v2179
    %v2197 = vsel %vm755, %v2177, %v2178
    %v2198 = vsel %vm755, %v2176, %v2177
    %v2199 = vsel %vm755, %v2175, %v2176
    %v2200 = vsel %vm755, %v2174, %v2175
    %v2201 = vsel %vm755, %v2173, %v2174
    %v2202 = vsel %vm755, %v2172, %v2173
    %v2203 = vsel %vm755, %v2171, %v2172
    %v2204 = vsel %vm755, %v2170, %v2171
    %v2205 = vsel %vm755, %v2169, %v2170
    %v2206 = vsel %vm755, %v2168, %v2169
    %v2207 = vsel %vm755, %v2187, %v2168
    %v2208 = vmul.f32 %v2206, %v800
    %v2209 = vmul.f32 %v2205, %v805
    %v2210 = vmul.f32 %v2204, %v810
    %v2211 = vmul.f32 %v2203, %v815
    %v2212 = vmul.f32 %v2202, %v820
    %v2213 = vmul.f32 %v2201, %v825
    %v2214 = vmul.f32 %v2200, %v830
    %v2215 = vmul.f32 %v2199, %v835
    %v2216 = vmul.f32 %v2198, %v840
    %v2217 = vmul.f32 %v2197, %v845
    %v2218 = vmul.f32 %v2196, %v850
    %v2219 = vmul.f32 %v2195, %v855
    %v2220 = vmul.f32 %v2194, %v860
    %v2221 = vmul.f32 %v2193, %v865
    %v2222 = vmul.f32 %v2192, %v870
    %v2223 = vmul.f32 %v2191, %v875
    %v2224 = vmul.f32 %v2190, %v880
    %v2225 = vmul.f32 %v2189, %v885
    %v2226 = vmul.f32 %v2188, %v890
    %v2227 = vmul.f32 %v2207, %v895
    %v2228 = vadd.f32 %v2148, %v1935
    %v2229 = vadd.f32 %v2149, %v1937
    %v2230 = vadd.f32 %v2150, %v1940
    %v2231 = vadd.f32 %v2151, %v1942
    %v2232 = vadd.f32 %v2152, %v1945
    %v2233 = vadd.f32 %v2153, %v1947
    %v2234 = vadd.f32 %v2154, %v1950
    %v2235 = vadd.f32 %v2155, %v1952
    %v2236 = vadd.f32 %v2156, %v1955
    %v2237 = vadd.f32 %v2157, %v1957
    %v2238 = vadd.f32 %v2158, %v1960
    %v2239 = vadd.f32 %v2159, %v1962
    %v2240 = vadd.f32 %v2160, %v1965
    %v2241 = vadd.f32 %v2161, %v1967
    %v2242 = vadd.f32 %v2162, %v1970
    %v2243 = vadd.f32 %v2163, %v1972
    %v2244 = vadd.f32 %v2164, %v1975
    %v2245 = vadd.f32 %v2165, %v1977
    %v2246 = vadd.f32 %v2166, %v1980
    %v2247 = vadd.f32 %v2167, %v1982
    %v2248 = vadd.f32 %v2228, %v2208
    %v2249 = vadd.f32 %v2229, %v2209
    %v2250 = vadd.f32 %v2230, %v2210
    %v2251 = vadd.f32 %v2231, %v2211
    %v2252 = vadd.f32 %v2232, %v2212
    %v2253 = vadd.f32 %v2233, %v2213
    %v2254 = vadd.f32 %v2234, %v2214
    %v2255 = vadd.f32 %v2235, %v2215
    %v2256 = vadd.f32 %v2236, %v2216
    %v2257 = vadd.f32 %v2237, %v2217
    %v2258 = vadd.f32 %v2238, %v2218
    %v2259 = vadd.f32 %v2239, %v2219
    %v2260 = vadd.f32 %v2240, %v2220
    %v2261 = vadd.f32 %v2241, %v2221
    %v2262 = vadd.f32 %v2242, %v2222
    %v2263 = vadd.f32 %v2243, %v2223
    %v2264 = vadd.f32 %v2244, %v2224
    %v2265 = vadd.f32 %v2245, %v2225
    %v2266 = vadd.f32 %v2246, %v2226
    %v2267 = vadd.f32 %v2247, %v2227
    %v2268 = vperm.slane %v149, 3
    %v2269 = vadd.f32 %v2248, %v2268
    %v2270 = vadd.f32 %v2249, %v2268
    %v2271 = vadd.f32 %v2250, %v2268
    %v2272 = vadd.f32 %v2251, %v2268
    %v2273 = vadd.f32 %v2252, %v2268
    %v2274 = vadd.f32 %v2253, %v2268
    %v2275 = vadd.f32 %v2254, %v2268
    %v2276 = vadd.f32 %v2255, %v2268
    %v2277 = vadd.f32 %v2256, %v2268
    %v2278 = vadd.f32 %v2257, %v2268
    %v2279 = vadd.f32 %v2258, %v2268
    %v2280 = vadd.f32 %v2259, %v2268
    %v2281 = vadd.f32 %v2260, %v2268
    %v2282 = vadd.f32 %v2261, %v2268
    %v2283 = vadd.f32 %v2262, %v2268
    %v2284 = vadd.f32 %v2263, %v2268
    %v2285 = vadd.f32 %v2264, %v2268
    %v2286 = vadd.f32 %v2265, %v2268
    %v2287 = vadd.f32 %v2266, %v2268
    %v2288 = vadd.f32 %v2267, %v2268
    %v2289 = vld [vmem:[#allocation8] sm:$0xff]
    %v2290 = vld [vmem:[#allocation8 + $0x8] sm:$0xff]
    %v2291 = vld [vmem:[#allocation8 + $0x10] sm:$0xff]
    %v2292 = vld [vmem:[#allocation8 + $0x18] sm:$0xff]
    %v2293 = vld [vmem:[#allocation8 + $0x20] sm:$0xff]
    %v2294 = vld [vmem:[#allocation8 + $0x28] sm:$0xff]
    %v2295 = vld [vmem:[#allocation8 + $0x30] sm:$0xff]
    %v2296 = vld [vmem:[#allocation8 + $0x38] sm:$0xff]
    %v2297 = vld [vmem:[#allocation8 + $0x40] sm:$0xff]
    %v2298 = vld [vmem:[#allocation8 + $0x48] sm:$0xff]
    %v2299 = vld [vmem:[#allocation8 + $0x50] sm:$0xff]
    %v2300 = vld [vmem:[#allocation8 + $0x58] sm:$0xff]
    %v2301 = vld [vmem:[#allocation8 + $0x60] sm:$0xff]
    %v2302 = vld [vmem:[#allocation8 + $0x68] sm:$0xff]
    %v2303 = vld [vmem:[#allocation8 + $0x70] sm:$0xff]
    %v2304 = vld [vmem:[#allocation8 + $0x78] sm:$0xff]
    %v2305 = vld [vmem:[#allocation8 + $0x80] sm:$0xff]
    %v2306 = vld [vmem:[#allocation8 + $0x88] sm:$0xff]
    %v2307 = vld [vmem:[#allocation8 + $0x90] sm:$0xff]
    %v2308 = vld [vmem:[#allocation8 + $0x98] sm:$0xff]
    %vm2309 = vcmask 261120
    %v2311 = vsel %vm2309, %v2290, 0
    %v2314 = vsel %vm2309, %v2292, 0
    %v2317 = vsel %vm2309, %v2294, 0
    %v2320 = vsel %vm2309, %v2296, 0
    %v2323 = vsel %vm2309, %v2298, 0
    %v2326 = vsel %vm2309, %v2300, 0
    %v2329 = vsel %vm2309, %v2302, 0
    %v2332 = vsel %vm2309, %v2304, 0
    %v2335 = vsel %vm2309, %v2306, 0
    %v2338 = vsel %vm2309, %v2308, 0
    %2340 = vmatpush.msra.mxu0 %v2284
    %2341 = vmatpush.msra.mxu0 %v2283
    %2342 = vmatpush.msra.mxu0 %v2282
    %2343 = vmatpush.msra.mxu0 %v2281
    %2344 = vmatpush.msra.mxu0 %v2280
    %2345 = vmatpush.msra.mxu0 %v2279
    %2346 = vmatpush.msra.mxu0 %v2278
    %2347 = vmatpush.msra.mxu0 %v2277
    %2348 = vmatpush.msra.mxu0 %v2276
    %2349 = vmatpush.msra.mxu0 %v2275
    %2350 = vmatpush.msra.mxu0 %v2274
    %2351 = vmatpush.msra.mxu0 %v2273
    %2352 = vmatpush.msra.mxu0 %v2272
    %2353 = vmatpush.msra.mxu0 %v2271
    %2354 = vmatpush.msra.mxu0 %v2270
    %2355 = vmatpush.msra.mxu0 %v2269
    %2356 = vmatmul.f32.gmra.mxu0 %v2289
    %v2357 = vpop.f32.mrf.mxu0
    %v2358 = vadd.f32 0.0, %v2357
    %2359 = vmatmul.f32.gmra.mxu0 %v2291
    %v2360 = vpop.f32.mrf.mxu0
    %v2361 = vadd.f32 0.0, %v2360
    %2362 = vmatmul.f32.gmra.mxu0 %v2293
    %v2363 = vpop.f32.mrf.mxu0
    %v2364 = vadd.f32 0.0, %v2363
    %2365 = vmatmul.f32.gmra.mxu0 %v2295
    %v2366 = vpop.f32.mrf.mxu0
    %v2367 = vadd.f32 0.0, %v2366
    %2368 = vmatmul.f32.gmra.mxu0 %v2297
    %v2369 = vpop.f32.mrf.mxu0
    %v2370 = vadd.f32 0.0, %v2369
    %2371 = vmatmul.f32.gmra.mxu0 %v2299
    %v2372 = vpop.f32.mrf.mxu0
    %v2373 = vadd.f32 0.0, %v2372
    %2374 = vmatmul.f32.gmra.mxu0 %v2301
    %v2375 = vpop.f32.mrf.mxu0
    %v2376 = vadd.f32 0.0, %v2375
    %2377 = vmatmul.f32.gmra.mxu0 %v2303
    %v2378 = vpop.f32.mrf.mxu0
    %v2379 = vadd.f32 0.0, %v2378
    %2380 = vmatmul.f32.gmra.mxu0 %v2305
    %v2381 = vpop.f32.mrf.mxu0
    %v2382 = vadd.f32 0.0, %v2381
    %2383 = vmatmul.f32.gmra.mxu0 %v2307
    %v2384 = vpop.f32.mrf.mxu0
    %v2385 = vadd.f32 0.0, %v2384
    %2386 = vdwg.mxu0
    %2387 = vmatpush.msra.mxu0 0.0
    %2388 = vmatpush.msra.mxu0 0.0
    %2389 = vmatpush.msra.mxu0 0.0
    %2390 = vmatpush.msra.mxu0 0.0
    %2391 = vmatpush.msra.mxu0 0.0
    %2392 = vmatpush.msra.mxu0 0.0
    %2393 = vmatpush.msra.mxu0 0.0
    %2394 = vmatpush.msra.mxu0 0.0
    %2395 = vmatpush.msra.mxu0 0.0
    %2396 = vmatpush.msra.mxu0 0.0
    %2397 = vmatpush.msra.mxu0 0.0
    %2398 = vmatpush.msra.mxu0 0.0
    %2399 = vmatpush.msra.mxu0 %v2288
    %2400 = vmatpush.msra.mxu0 %v2287
    %2401 = vmatpush.msra.mxu0 %v2286
    %2402 = vmatpush.msra.mxu0 %v2285
    %2403 = vmatmul.f32.gmra.mxu0 %v2311
    %v2404 = vpop.f32.mrf.mxu0
    %v2405 = vadd.f32 %v2358, %v2404
    %2406 = vmatmul.f32.gmra.mxu0 %v2314
    %v2407 = vpop.f32.mrf.mxu0
    %v2408 = vadd.f32 %v2361, %v2407
    %2409 = vmatmul.f32.gmra.mxu0 %v2317
    %v2410 = vpop.f32.mrf.mxu0
    %v2411 = vadd.f32 %v2364, %v2410
    %2412 = vmatmul.f32.gmra.mxu0 %v2320
    %v2413 = vpop.f32.mrf.mxu0
    %v2414 = vadd.f32 %v2367, %v2413
    %2415 = vmatmul.f32.gmra.mxu0 %v2323
    %v2416 = vpop.f32.mrf.mxu0
    %v2417 = vadd.f32 %v2370, %v2416
    %2418 = vmatmul.f32.gmra.mxu0 %v2326
    %v2419 = vpop.f32.mrf.mxu0
    %v2420 = vadd.f32 %v2373, %v2419
    %2421 = vmatmul.f32.gmra.mxu0 %v2329
    %v2422 = vpop.f32.mrf.mxu0
    %v2423 = vadd.f32 %v2376, %v2422
    %2424 = vmatmul.f32.gmra.mxu0 %v2332
    %v2425 = vpop.f32.mrf.mxu0
    %v2426 = vadd.f32 %v2379, %v2425
    %2427 = vmatmul.f32.gmra.mxu0 %v2335
    %v2428 = vpop.f32.mrf.mxu0
    %v2429 = vadd.f32 %v2382, %v2428
    %2430 = vmatmul.f32.gmra.mxu0 %v2338
    %v2431 = vpop.f32.mrf.mxu0
    %v2432 = vadd.f32 %v2385, %v2431
    %2433 = vdwg.mxu0
    %2434 = vmatpush.msra.mxu0 %v1721
    %2435 = vmatpush.msra.mxu0 %v1720
    %2436 = vmatpush.msra.mxu0 %v1719
    %2437 = vmatpush.msra.mxu0 %v1718
    %2438 = vmatpush.msra.mxu0 %v1717
    %2439 = vmatpush.msra.mxu0 %v1716
    %2440 = vmatpush.msra.mxu0 %v1715
    %2441 = vmatpush.msra.mxu0 %v1714
    %2442 = vmatpush.msra.mxu0 %v1713
    %2443 = vmatpush.msra.mxu0 %v1712
    %2444 = vmatpush.msra.mxu0 %v1711
    %2445 = vmatpush.msra.mxu0 %v1710
    %2446 = vmatpush.msra.mxu0 %v1709
    %2447 = vmatpush.msra.mxu0 %v1708
    %2448 = vmatpush.msra.mxu0 %v1707
    %2449 = vmatpush.msra.mxu0 %v1706
    %2450 = vmatmul.f32.gmra.mxu0 %v2289
    %v2451 = vpop.f32.mrf.mxu0
    %v2452 = vadd.f32 0.0, %v2451
    %2453 = vmatmul.f32.gmra.mxu0 %v2291
    %v2454 = vpop.f32.mrf.mxu0
    %v2455 = vadd.f32 0.0, %v2454
    %2456 = vmatmul.f32.gmra.mxu0 %v2293
    %v2457 = vpop.f32.mrf.mxu0
    %v2458 = vadd.f32 0.0, %v2457
    %2459 = vmatmul.f32.gmra.mxu0 %v2295
    %v2460 = vpop.f32.mrf.mxu0
    %v2461 = vadd.f32 0.0, %v2460
    %2462 = vmatmul.f32.gmra.mxu0 %v2297
    %v2463 = vpop.f32.mrf.mxu0
    %v2464 = vadd.f32 0.0, %v2463
    %2465 = vmatmul.f32.gmra.mxu0 %v2299
    %v2466 = vpop.f32.mrf.mxu0
    %v2467 = vadd.f32 0.0, %v2466
    %2468 = vmatmul.f32.gmra.mxu0 %v2301
    %v2469 = vpop.f32.mrf.mxu0
    %v2470 = vadd.f32 0.0, %v2469
    %2471 = vmatmul.f32.gmra.mxu0 %v2303
    %v2472 = vpop.f32.mrf.mxu0
    %v2473 = vadd.f32 0.0, %v2472
    %2474 = vmatmul.f32.gmra.mxu0 %v2305
    %v2475 = vpop.f32.mrf.mxu0
    %v2476 = vadd.f32 0.0, %v2475
    %2477 = vmatmul.f32.gmra.mxu0 %v2307
    %v2478 = vpop.f32.mrf.mxu0
    %v2479 = vadd.f32 0.0, %v2478
    %2480 = vdwg.mxu0
    %2481 = vmatpush.msra.mxu0 0.0
    %2482 = vmatpush.msra.mxu0 0.0
    %2483 = vmatpush.msra.mxu0 0.0
    %2484 = vmatpush.msra.mxu0 0.0
    %2485 = vmatpush.msra.mxu0 0.0
    %2486 = vmatpush.msra.mxu0 0.0
    %2487 = vmatpush.msra.mxu0 0.0
    %2488 = vmatpush.msra.mxu0 0.0
    %2489 = vmatpush.msra.mxu0 0.0
    %2490 = vmatpush.msra.mxu0 0.0
    %2491 = vmatpush.msra.mxu0 0.0
    %2492 = vmatpush.msra.mxu0 0.0
    %2493 = vmatpush.msra.mxu0 %v1725
    %2494 = vmatpush.msra.mxu0 %v1724
    %2495 = vmatpush.msra.mxu0 %v1723
    %2496 = vmatpush.msra.mxu0 %v1722
    %2497 = vmatmul.f32.gmra.mxu0 %v2311
    %v2498 = vpop.f32.mrf.mxu0
    %v2499 = vadd.f32 %v2452, %v2498
    %2500 = vmatmul.f32.gmra.mxu0 %v2314
    %v2501 = vpop.f32.mrf.mxu0
    %v2502 = vadd.f32 %v2455, %v2501
    %2503 = vmatmul.f32.gmra.mxu0 %v2317
    %v2504 = vpop.f32.mrf.mxu0
    %v2505 = vadd.f32 %v2458, %v2504
    %2506 = vmatmul.f32.gmra.mxu0 %v2320
    %v2507 = vpop.f32.mrf.mxu0
    %v2508 = vadd.f32 %v2461, %v2507
    %2509 = vmatmul.f32.gmra.mxu0 %v2323
    %v2510 = vpop.f32.mrf.mxu0
    %v2511 = vadd.f32 %v2464, %v2510
    %2512 = vmatmul.f32.gmra.mxu0 %v2326
    %v2513 = vpop.f32.mrf.mxu0
    %v2514 = vadd.f32 %v2467, %v2513
    %2515 = vmatmul.f32.gmra.mxu0 %v2329
    %v2516 = vpop.f32.mrf.mxu0
    %v2517 = vadd.f32 %v2470, %v2516
    %2518 = vmatmul.f32.gmra.mxu0 %v2332
    %v2519 = vpop.f32.mrf.mxu0
    %v2520 = vadd.f32 %v2473, %v2519
    %2521 = vmatmul.f32.gmra.mxu0 %v2335
    %v2522 = vpop.f32.mrf.mxu0
    %v2523 = vadd.f32 %v2476, %v2522
    %2524 = vmatmul.f32.gmra.mxu0 %v2338
    %v2525 = vpop.f32.mrf.mxu0
    %v2526 = vadd.f32 %v2479, %v2525
    %2527 = vdwg.mxu0
    %v2528 = vmax.f32 %v2405, 0.0
    %v2529 = vmax.f32 %v2408, 0.0
    %v2530 = vmax.f32 %v2411, 0.0
    %v2531 = vmax.f32 %v2414, 0.0
    %v2532 = vmax.f32 %v2417, 0.0
    %v2533 = vmax.f32 %v2420, 0.0
    %v2534 = vmax.f32 %v2423, 0.0
    %v2535 = vmax.f32 %v2426, 0.0
    %v2536 = vmax.f32 %v2429, 0.0
    %v2537 = vmax.f32 %v2432, 0.0
    %v2538 = vpack.c.bf16 %v2529, %v2528
    %v2539 = vpack.c.bf16 %v2531, %v2530
    %v2540 = vpack.c.bf16 %v2533, %v2532
    %v2541 = vpack.c.bf16 %v2535, %v2534
    %v2542 = vpack.c.bf16 %v2537, %v2536
    %s2543 = scalar_lea.vmem [#allocation5], 640
    %v2544 = vld [vmem:[%s2543] sm:$0xf]
    %v2545 = vld [vmem:[%s2543 + $0x4] sm:$0xf]
    %v2546 = vld [vmem:[%s2543 + $0x8] sm:$0xf]
    %v2547 = vld [vmem:[%s2543 + $0xc] sm:$0xf]
    %v2548 = vld [vmem:[%s2543 + $0x10] sm:$0xf]
    %v2549 = vld [vmem:[%s2543 + $0x14] sm:$0xf]
    %v2550 = vld [vmem:[%s2543 + $0x18] sm:$0xf]
    %v2551 = vld [vmem:[%s2543 + $0x1c] sm:$0xf]
    %v2552 = vld [vmem:[%s2543 + $0x20] sm:$0xf]
    %v2553 = vld [vmem:[%s2543 + $0x24] sm:$0xf]
    %v2554 = vld [vmem:[%s2543 + $0x28] sm:$0xf]
    %v2555 = vld [vmem:[%s2543 + $0x2c] sm:$0xf]
    %v2556 = vld [vmem:[%s2543 + $0x30] sm:$0xf]
    %v2557 = vld [vmem:[%s2543 + $0x34] sm:$0xf]
    %v2558 = vld [vmem:[%s2543 + $0x38] sm:$0xf]
    %v2559 = vld [vmem:[%s2543 + $0x3c] sm:$0xf]
    %v2576 = vunpack.c.l.b16 %v2544
    %v2577 = vunpack.c.l.b16 %v2545
    %v2578 = vunpack.c.l.b16 %v2546
    %v2579 = vunpack.c.l.b16 %v2547
    %v2580 = vunpack.c.l.b16 %v2548
    %v2581 = vunpack.c.l.b16 %v2549
    %v2582 = vunpack.c.l.b16 %v2550
    %v2583 = vunpack.c.l.b16 %v2551
    %v2584 = vunpack.c.l.b16 %v2552
    %v2585 = vunpack.c.l.b16 %v2553
    %v2586 = vunpack.c.l.b16 %v2554
    %v2587 = vunpack.c.l.b16 %v2555
    %v2588 = vunpack.c.l.b16 %v2556
    %v2589 = vunpack.c.l.b16 %v2557
    %v2590 = vunpack.c.l.b16 %v2558
    %v2591 = vunpack.c.l.b16 %v2559
    %v2592 = vpack.c.b16 %v2577, %v2576
    %v2593 = vpack.c.b16 %v2579, %v2578
    %v2594 = vpack.c.b16 %v2581, %v2580
    %v2595 = vpack.c.b16 %v2583, %v2582
    %v2596 = vpack.c.b16 %v2585, %v2584
    %v2597 = vpack.c.b16 %v2587, %v2586
    %v2598 = vpack.c.b16 %v2589, %v2588
    %v2599 = vpack.c.b16 %v2591, %v2590
    %2608 = vmatpush.bf16.msra.mxu0 %v2599
    %2609 = vmatpush.bf16.msra.mxu0 %v2598
    %2610 = vmatpush.bf16.msra.mxu0 %v2597
    %2611 = vmatpush.bf16.msra.mxu0 %v2596
    %2612 = vmatpush.bf16.msra.mxu0 %v2595
    %2613 = vmatpush.bf16.msra.mxu0 %v2594
    %2614 = vmatpush.bf16.msra.mxu0 %v2593
    %2615 = vmatpush.bf16.msra.mxu0 %v2592
    %2616 = vmatmul.bf16.gmra.mxu0 %v2538
    %v2617 = vpop.f32.mrf.mxu0
    %v2618 = vadd.f32 0.0, %v2617
    %v2619 = vpop.f32.mrf.mxu0
    %v2620 = vadd.f32 0.0, %v2619
    %2621 = vmatmul.bf16.gmra.mxu0 %v2539
    %v2622 = vpop.f32.mrf.mxu0
    %v2623 = vadd.f32 0.0, %v2622
    %v2624 = vpop.f32.mrf.mxu0
    %v2625 = vadd.f32 0.0, %v2624
    %2626 = vmatmul.bf16.gmra.mxu0 %v2540
    %v2627 = vpop.f32.mrf.mxu0
    %v2628 = vadd.f32 0.0, %v2627
    %v2629 = vpop.f32.mrf.mxu0
    %v2630 = vadd.f32 0.0, %v2629
    %2631 = vmatmul.bf16.gmra.mxu0 %v2541
    %v2632 = vpop.f32.mrf.mxu0
    %v2633 = vadd.f32 0.0, %v2632
    %v2634 = vpop.f32.mrf.mxu0
    %v2635 = vadd.f32 0.0, %v2634
    %2636 = vmatmul.bf16.gmra.mxu0 %v2542
    %v2637 = vpop.f32.mrf.mxu0
    %v2638 = vadd.f32 0.0, %v2637
    %v2639 = vpop.f32.mrf.mxu0
    %v2640 = vadd.f32 0.0, %v2639
    %2641 = vdwg.mxu0
    %s2642 = scalar_lea.vmem [#allocation5], 704
    %v2643 = vld [vmem:[%s2642] sm:$0xf]
    %v2644 = vld [vmem:[%s2642 + $0x4] sm:$0xf]
    %v2645 = vld [vmem:[%s2642 + $0x8] sm:$0xf]
    %v2646 = vld [vmem:[%s2642 + $0xc] sm:$0xf]
    %v2647 = vld [vmem:[%s2642 + $0x10] sm:$0xf]
    %v2648 = vld [vmem:[%s2642 + $0x14] sm:$0xf]
    %v2649 = vld [vmem:[%s2642 + $0x18] sm:$0xf]
    %v2650 = vld [vmem:[%s2642 + $0x1c] sm:$0xf]
    %v2651 = vld [vmem:[%s2642 + $0x20] sm:$0xf]
    %v2652 = vld [vmem:[%s2642 + $0x24] sm:$0xf]
    %v2653 = vld [vmem:[%s2642 + $0x28] sm:$0xf]
    %v2654 = vld [vmem:[%s2642 + $0x2c] sm:$0xf]
    %v2655 = vld [vmem:[%s2642 + $0x30] sm:$0xf]
    %v2656 = vld [vmem:[%s2642 + $0x34] sm:$0xf]
    %v2657 = vld [vmem:[%s2642 + $0x38] sm:$0xf]
    %v2658 = vld [vmem:[%s2642 + $0x3c] sm:$0xf]
    %v2675 = vunpack.c.l.b16 %v2643
    %v2676 = vunpack.c.l.b16 %v2644
    %v2677 = vunpack.c.l.b16 %v2645
    %v2678 = vunpack.c.l.b16 %v2646
    %v2679 = vunpack.c.l.b16 %v2647
    %v2680 = vunpack.c.l.b16 %v2648
    %v2681 = vunpack.c.l.b16 %v2649
    %v2682 = vunpack.c.l.b16 %v2650
    %v2683 = vunpack.c.l.b16 %v2651
    %v2684 = vunpack.c.l.b16 %v2652
    %v2685 = vunpack.c.l.b16 %v2653
    %v2686 = vunpack.c.l.b16 %v2654
    %v2687 = vunpack.c.l.b16 %v2655
    %v2688 = vunpack.c.l.b16 %v2656
    %v2689 = vunpack.c.l.b16 %v2657
    %v2690 = vunpack.c.l.b16 %v2658
    %v2691 = vpack.c.b16 %v2676, %v2675
    %v2692 = vpack.c.b16 %v2678, %v2677
    %v2693 = vpack.c.b16 %v2680, %v2679
    %v2694 = vpack.c.b16 %v2682, %v2681
    %v2695 = vpack.c.b16 %v2684, %v2683
    %v2696 = vpack.c.b16 %v2686, %v2685
    %v2697 = vpack.c.b16 %v2688, %v2687
    %v2698 = vpack.c.b16 %v2690, %v2689
    %2707 = vmatpush.bf16.msra.mxu0 %v2698
    %2708 = vmatpush.bf16.msra.mxu0 %v2697
    %2709 = vmatpush.bf16.msra.mxu0 %v2696
    %2710 = vmatpush.bf16.msra.mxu0 %v2695
    %2711 = vmatpush.bf16.msra.mxu0 %v2694
    %2712 = vmatpush.bf16.msra.mxu0 %v2693
    %2713 = vmatpush.bf16.msra.mxu0 %v2692
    %2714 = vmatpush.bf16.msra.mxu0 %v2691
    %2715 = vmatmul.bf16.gmra.mxu0 %v2538
    %v2716 = vpop.f32.mrf.mxu0
    %v2717 = vadd.f32 0.0, %v2716
    %v2718 = vpop.f32.mrf.mxu0
    %v2719 = vadd.f32 0.0, %v2718
    %2720 = vmatmul.bf16.gmra.mxu0 %v2539
    %v2721 = vpop.f32.mrf.mxu0
    %v2722 = vadd.f32 0.0, %v2721
    %v2723 = vpop.f32.mrf.mxu0
    %v2724 = vadd.f32 0.0, %v2723
    %2725 = vmatmul.bf16.gmra.mxu0 %v2540
    %v2726 = vpop.f32.mrf.mxu0
    %v2727 = vadd.f32 0.0, %v2726
    %v2728 = vpop.f32.mrf.mxu0
    %v2729 = vadd.f32 0.0, %v2728
    %2730 = vmatmul.bf16.gmra.mxu0 %v2541
    %v2731 = vpop.f32.mrf.mxu0
    %v2732 = vadd.f32 0.0, %v2731
    %v2733 = vpop.f32.mrf.mxu0
    %v2734 = vadd.f32 0.0, %v2733
    %2735 = vmatmul.bf16.gmra.mxu0 %v2542
    %v2736 = vpop.f32.mrf.mxu0
    %v2737 = vadd.f32 0.0, %v2736
    %v2738 = vpop.f32.mrf.mxu0
    %v2739 = vadd.f32 0.0, %v2738
    %2740 = vdwg.mxu0
    %s2741 = scalar_lea.vmem [#allocation5], 768
    %v2742 = vld [vmem:[%s2741] sm:$0xf]
    %v2743 = vld [vmem:[%s2741 + $0x4] sm:$0xf]
    %v2744 = vld [vmem:[%s2741 + $0x8] sm:$0xf]
    %v2745 = vld [vmem:[%s2741 + $0xc] sm:$0xf]
    %v2746 = vld [vmem:[%s2741 + $0x10] sm:$0xf]
    %v2747 = vld [vmem:[%s2741 + $0x14] sm:$0xf]
    %v2748 = vld [vmem:[%s2741 + $0x18] sm:$0xf]
    %v2749 = vld [vmem:[%s2741 + $0x1c] sm:$0xf]
    %v2750 = vld [vmem:[%s2741 + $0x20] sm:$0xf]
    %v2751 = vld [vmem:[%s2741 + $0x24] sm:$0xf]
    %v2752 = vld [vmem:[%s2741 + $0x28] sm:$0xf]
    %v2753 = vld [vmem:[%s2741 + $0x2c] sm:$0xf]
    %v2754 = vld [vmem:[%s2741 + $0x30] sm:$0xf]
    %v2755 = vld [vmem:[%s2741 + $0x34] sm:$0xf]
    %v2756 = vld [vmem:[%s2741 + $0x38] sm:$0xf]
    %v2757 = vld [vmem:[%s2741 + $0x3c] sm:$0xf]
    %v2774 = vunpack.c.l.b16 %v2742
    %v2775 = vunpack.c.l.b16 %v2743
    %v2776 = vunpack.c.l.b16 %v2744
    %v2777 = vunpack.c.l.b16 %v2745
    %v2778 = vunpack.c.l.b16 %v2746
    %v2779 = vunpack.c.l.b16 %v2747
    %v2780 = vunpack.c.l.b16 %v2748
    %v2781 = vunpack.c.l.b16 %v2749
    %v2782 = vunpack.c.l.b16 %v2750
    %v2783 = vunpack.c.l.b16 %v2751
    %v2784 = vunpack.c.l.b16 %v2752
    %v2785 = vunpack.c.l.b16 %v2753
    %v2786 = vunpack.c.l.b16 %v2754
    %v2787 = vunpack.c.l.b16 %v2755
    %v2788 = vunpack.c.l.b16 %v2756
    %v2789 = vunpack.c.l.b16 %v2757
    %v2790 = vpack.c.b16 %v2775, %v2774
    %v2791 = vpack.c.b16 %v2777, %v2776
    %v2792 = vpack.c.b16 %v2779, %v2778
    %v2793 = vpack.c.b16 %v2781, %v2780
    %v2794 = vpack.c.b16 %v2783, %v2782
    %v2795 = vpack.c.b16 %v2785, %v2784
    %v2796 = vpack.c.b16 %v2787, %v2786
    %v2797 = vpack.c.b16 %v2789, %v2788
    %2806 = vmatpush.bf16.msra.mxu0 %v2797
    %2807 = vmatpush.bf16.msra.mxu0 %v2796
    %2808 = vmatpush.bf16.msra.mxu0 %v2795
    %2809 = vmatpush.bf16.msra.mxu0 %v2794
    %2810 = vmatpush.bf16.msra.mxu0 %v2793
    %2811 = vmatpush.bf16.msra.mxu0 %v2792
    %2812 = vmatpush.bf16.msra.mxu0 %v2791
    %2813 = vmatpush.bf16.msra.mxu0 %v2790
    %2814 = vmatmul.bf16.gmra.mxu0 %v2538
    %v2815 = vpop.f32.mrf.mxu0
    %v2816 = vadd.f32 0.0, %v2815
    %v2817 = vpop.f32.mrf.mxu0
    %v2818 = vadd.f32 0.0, %v2817
    %2819 = vmatmul.bf16.gmra.mxu0 %v2539
    %v2820 = vpop.f32.mrf.mxu0
    %v2821 = vadd.f32 0.0, %v2820
    %v2822 = vpop.f32.mrf.mxu0
    %v2823 = vadd.f32 0.0, %v2822
    %2824 = vmatmul.bf16.gmra.mxu0 %v2540
    %v2825 = vpop.f32.mrf.mxu0
    %v2826 = vadd.f32 0.0, %v2825
    %v2827 = vpop.f32.mrf.mxu0
    %v2828 = vadd.f32 0.0, %v2827
    %2829 = vmatmul.bf16.gmra.mxu0 %v2541
    %v2830 = vpop.f32.mrf.mxu0
    %v2831 = vadd.f32 0.0, %v2830
    %v2832 = vpop.f32.mrf.mxu0
    %v2833 = vadd.f32 0.0, %v2832
    %2834 = vmatmul.bf16.gmra.mxu0 %v2542
    %v2835 = vpop.f32.mrf.mxu0
    %v2836 = vadd.f32 0.0, %v2835
    %v2837 = vpop.f32.mrf.mxu0
    %v2838 = vadd.f32 0.0, %v2837
    %2839 = vdwg.mxu0
    %v2840 = vrot.slane %v2618, 7
    %v2841 = vrot.slane %v2620, 7
    %v2842 = vrot.slane %v2623, 7
    %v2843 = vrot.slane %v2625, 7
    %v2844 = vrot.slane %v2628, 7
    %v2845 = vrot.slane %v2630, 7
    %v2846 = vrot.slane %v2633, 7
    %v2847 = vrot.slane %v2635, 7
    %v2848 = vrot.slane %v2638, 7
    %v2849 = vrot.slane %v2640, 7
    %v2850 = vsel %vm574, %v2848, %v2849
    %v2851 = vsel %vm574, %v2847, %v2848
    %v2852 = vsel %vm574, %v2846, %v2847
    %v2853 = vsel %vm574, %v2845, %v2846
    %v2854 = vsel %vm574, %v2844, %v2845
    %v2855 = vsel %vm574, %v2843, %v2844
    %v2856 = vsel %vm574, %v2842, %v2843
    %v2857 = vsel %vm574, %v2841, %v2842
    %v2858 = vsel %vm574, %v2840, %v2841
    %v2859 = vsel %vm574, %v2849, %v2840
    %v2860 = vld [vmem:[%s4] sm:$0xff]
    %v2861 = vld [vmem:[%s4 + $0x8] sm:$0xff]
    %v2862 = vld [vmem:[%s4 + $0x10] sm:$0xff]
    %v2863 = vld [vmem:[%s4 + $0x18] sm:$0xff]
    %v2864 = vld [vmem:[%s4 + $0x20] sm:$0xff]
    %v2865 = vld [vmem:[%s4 + $0x28] sm:$0xff]
    %v2866 = vld [vmem:[%s4 + $0x30] sm:$0xff]
    %v2867 = vld [vmem:[%s4 + $0x38] sm:$0xff]
    %v2868 = vld [vmem:[%s4 + $0x40] sm:$0xff]
    %v2869 = vld [vmem:[%s4 + $0x48] sm:$0xff]
    %2871 = vset.pattern.permute.xlu0 0
    %2872 = vperm.xlu0 %2871, %v2860
    %v2873 = vpop.permute.xlu0 %2872
    %2876 = vset.pattern.permute.xlu0 0
    %2877 = vperm.xlu0 %2876, %v2861
    %v2878 = vpop.permute.xlu0 %2877
    %2881 = vset.pattern.permute.xlu0 0
    %2882 = vperm.xlu0 %2881, %v2862
    %v2883 = vpop.permute.xlu0 %2882
    %2886 = vset.pattern.permute.xlu0 0
    %2887 = vperm.xlu0 %2886, %v2863
    %v2888 = vpop.permute.xlu0 %2887
    %2891 = vset.pattern.permute.xlu0 0
    %2892 = vperm.xlu0 %2891, %v2864
    %v2893 = vpop.permute.xlu0 %2892
    %2896 = vset.pattern.permute.xlu0 0
    %2897 = vperm.xlu0 %2896, %v2865
    %v2898 = vpop.permute.xlu0 %2897
    %2901 = vset.pattern.permute.xlu0 0
    %2902 = vperm.xlu0 %2901, %v2866
    %v2903 = vpop.permute.xlu0 %2902
    %2906 = vset.pattern.permute.xlu0 0
    %2907 = vperm.xlu0 %2906, %v2867
    %v2908 = vpop.permute.xlu0 %2907
    %2911 = vset.pattern.permute.xlu0 0
    %2912 = vperm.xlu0 %2911, %v2868
    %v2913 = vpop.permute.xlu0 %2912
    %2916 = vset.pattern.permute.xlu0 0
    %2917 = vperm.xlu0 %2916, %v2869
    %v2918 = vpop.permute.xlu0 %2917
    %v2920 = vmul.f32 %v2859, %v2873
    %v2921 = vmul.f32 %v2858, %v2878
    %v2922 = vmul.f32 %v2857, %v2883
    %v2923 = vmul.f32 %v2856, %v2888
    %v2924 = vmul.f32 %v2855, %v2893
    %v2925 = vmul.f32 %v2854, %v2898
    %v2926 = vmul.f32 %v2853, %v2903
    %v2927 = vmul.f32 %v2852, %v2908
    %v2928 = vmul.f32 %v2851, %v2913
    %v2929 = vmul.f32 %v2850, %v2918
    %v2930 = vrot.slane %v2816, 1
    %v2931 = vrot.slane %v2818, 1
    %v2932 = vrot.slane %v2821, 1
    %v2933 = vrot.slane %v2823, 1
    %v2934 = vrot.slane %v2826, 1
    %v2935 = vrot.slane %v2828, 1
    %v2936 = vrot.slane %v2831, 1
    %v2937 = vrot.slane %v2833, 1
    %v2938 = vrot.slane %v2836, 1
    %v2939 = vrot.slane %v2838, 1
    %v2940 = vsel %vm755, %v2938, %v2939
    %v2941 = vsel %vm755, %v2937, %v2938
    %v2942 = vsel %vm755, %v2936, %v2937
    %v2943 = vsel %vm755, %v2935, %v2936
    %v2944 = vsel %vm755, %v2934, %v2935
    %v2945 = vsel %vm755, %v2933, %v2934
    %v2946 = vsel %vm755, %v2932, %v2933
    %v2947 = vsel %vm755, %v2931, %v2932
    %v2948 = vsel %vm755, %v2930, %v2931
    %v2949 = vsel %vm755, %v2939, %v2930
    %s2950 = scalar_lea.vmem %s4, 80
    %v2951 = vld [vmem:[%s2950] sm:$0xff]
    %v2952 = vld [vmem:[%s2950 + $0x8] sm:$0xff]
    %v2953 = vld [vmem:[%s2950 + $0x10] sm:$0xff]
    %v2954 = vld [vmem:[%s2950 + $0x18] sm:$0xff]
    %v2955 = vld [vmem:[%s2950 + $0x20] sm:$0xff]
    %v2956 = vld [vmem:[%s2950 + $0x28] sm:$0xff]
    %v2957 = vld [vmem:[%s2950 + $0x30] sm:$0xff]
    %v2958 = vld [vmem:[%s2950 + $0x38] sm:$0xff]
    %v2959 = vld [vmem:[%s2950 + $0x40] sm:$0xff]
    %v2960 = vld [vmem:[%s2950 + $0x48] sm:$0xff]
    %2962 = vset.pattern.permute.xlu0 0
    %2963 = vperm.xlu0 %2962, %v2951
    %v2964 = vpop.permute.xlu0 %2963
    %2967 = vset.pattern.permute.xlu0 0
    %2968 = vperm.xlu0 %2967, %v2952
    %v2969 = vpop.permute.xlu0 %2968
    %2972 = vset.pattern.permute.xlu0 0
    %2973 = vperm.xlu0 %2972, %v2953
    %v2974 = vpop.permute.xlu0 %2973
    %2977 = vset.pattern.permute.xlu0 0
    %2978 = vperm.xlu0 %2977, %v2954
    %v2979 = vpop.permute.xlu0 %2978
    %2982 = vset.pattern.permute.xlu0 0
    %2983 = vperm.xlu0 %2982, %v2955
    %v2984 = vpop.permute.xlu0 %2983
    %2987 = vset.pattern.permute.xlu0 0
    %2988 = vperm.xlu0 %2987, %v2956
    %v2989 = vpop.permute.xlu0 %2988
    %2992 = vset.pattern.permute.xlu0 0
    %2993 = vperm.xlu0 %2992, %v2957
    %v2994 = vpop.permute.xlu0 %2993
    %2997 = vset.pattern.permute.xlu0 0
    %2998 = vperm.xlu0 %2997, %v2958
    %v2999 = vpop.permute.xlu0 %2998
    %3002 = vset.pattern.permute.xlu0 0
    %3003 = vperm.xlu0 %3002, %v2959
    %v3004 = vpop.permute.xlu0 %3003
    %3007 = vset.pattern.permute.xlu0 0
    %3008 = vperm.xlu0 %3007, %v2960
    %v3009 = vpop.permute.xlu0 %3008
    %v3011 = vmul.f32 %v2948, %v2964
    %v3012 = vmul.f32 %v2947, %v2969
    %v3013 = vmul.f32 %v2946, %v2974
    %v3014 = vmul.f32 %v2945, %v2979
    %v3015 = vmul.f32 %v2944, %v2984
    %v3016 = vmul.f32 %v2943, %v2989
    %v3017 = vmul.f32 %v2942, %v2994
    %v3018 = vmul.f32 %v2941, %v2999
    %v3019 = vmul.f32 %v2940, %v3004
    %v3020 = vmul.f32 %v2949, %v3009
    %v3021 = vadd.f32 %v2920, %v2717
    %v3022 = vadd.f32 %v2921, %v2719
    %v3023 = vadd.f32 %v2922, %v2722
    %v3024 = vadd.f32 %v2923, %v2724
    %v3025 = vadd.f32 %v2924, %v2727
    %v3026 = vadd.f32 %v2925, %v2729
    %v3027 = vadd.f32 %v2926, %v2732
    %v3028 = vadd.f32 %v2927, %v2734
    %v3029 = vadd.f32 %v2928, %v2737
    %v3030 = vadd.f32 %v2929, %v2739
    %v3031 = vadd.f32 %v3021, %v3011
    %v3032 = vadd.f32 %v3022, %v3012
    %v3033 = vadd.f32 %v3023, %v3013
    %v3034 = vadd.f32 %v3024, %v3014
    %v3035 = vadd.f32 %v3025, %v3015
    %v3036 = vadd.f32 %v3026, %v3016
    %v3037 = vadd.f32 %v3027, %v3017
    %v3038 = vadd.f32 %v3028, %v3018
    %v3039 = vadd.f32 %v3029, %v3019
    %v3040 = vadd.f32 %v3030, %v3020
    %v3041 = vperm.slane %v149, 4
    %v3042 = vadd.f32 %v3031, %v3041
    %v3043 = vadd.f32 %v3032, %v3041
    %v3044 = vadd.f32 %v3033, %v3041
    %v3045 = vadd.f32 %v3034, %v3041
    %v3046 = vadd.f32 %v3035, %v3041
    %v3047 = vadd.f32 %v3036, %v3041
    %v3048 = vadd.f32 %v3037, %v3041
    %v3049 = vadd.f32 %v3038, %v3041
    %v3050 = vadd.f32 %v3039, %v3041
    %v3051 = vadd.f32 %v3040, %v3041
    %v3052 = vpack.c.bf16 %v2502, %v2499
    %v3053 = vpack.c.bf16 %v2508, %v2505
    %v3054 = vpack.c.bf16 %v2514, %v2511
    %v3055 = vpack.c.bf16 %v2520, %v2517
    %v3056 = vpack.c.bf16 %v2526, %v2523
    %s3057 = scalar_lea.vmem [#allocation5], 832
    %v3058 = vld [vmem:[%s3057] sm:$0xf]
    %v3059 = vld [vmem:[%s3057 + $0x4] sm:$0xf]
    %v3060 = vld [vmem:[%s3057 + $0x8] sm:$0xf]
    %v3061 = vld [vmem:[%s3057 + $0xc] sm:$0xf]
    %v3062 = vld [vmem:[%s3057 + $0x10] sm:$0xf]
    %v3063 = vld [vmem:[%s3057 + $0x14] sm:$0xf]
    %v3064 = vld [vmem:[%s3057 + $0x18] sm:$0xf]
    %v3065 = vld [vmem:[%s3057 + $0x1c] sm:$0xf]
    %v3066 = vld [vmem:[%s3057 + $0x20] sm:$0xf]
    %v3067 = vld [vmem:[%s3057 + $0x24] sm:$0xf]
    %v3068 = vld [vmem:[%s3057 + $0x28] sm:$0xf]
    %v3069 = vld [vmem:[%s3057 + $0x2c] sm:$0xf]
    %v3070 = vld [vmem:[%s3057 + $0x30] sm:$0xf]
    %v3071 = vld [vmem:[%s3057 + $0x34] sm:$0xf]
    %v3072 = vld [vmem:[%s3057 + $0x38] sm:$0xf]
    %v3073 = vld [vmem:[%s3057 + $0x3c] sm:$0xf]
    %v3074 = vperm.slane %v149, 5
    %v3091 = vunpack.c.l.b16 %v3058
    %v3092 = vunpack.c.l.b16 %v3059
    %v3093 = vunpack.c.l.b16 %v3060
    %v3094 = vunpack.c.l.b16 %v3061
    %v3095 = vunpack.c.l.b16 %v3062
    %v3096 = vunpack.c.l.b16 %v3063
    %v3097 = vunpack.c.l.b16 %v3064
    %v3098 = vunpack.c.l.b16 %v3065
    %v3099 = vunpack.c.l.b16 %v3066
    %v3100 = vunpack.c.l.b16 %v3067
    %v3101 = vunpack.c.l.b16 %v3068
    %v3102 = vunpack.c.l.b16 %v3069
    %v3103 = vunpack.c.l.b16 %v3070
    %v3104 = vunpack.c.l.b16 %v3071
    %v3105 = vunpack.c.l.b16 %v3072
    %v3106 = vunpack.c.l.b16 %v3073
    %v3107 = vpack.c.b16 %v3092, %v3091
    %v3108 = vpack.c.b16 %v3094, %v3093
    %v3109 = vpack.c.b16 %v3096, %v3095
    %v3110 = vpack.c.b16 %v3098, %v3097
    %v3111 = vpack.c.b16 %v3100, %v3099
    %v3112 = vpack.c.b16 %v3102, %v3101
    %v3113 = vpack.c.b16 %v3104, %v3103
    %v3114 = vpack.c.b16 %v3106, %v3105
    %3123 = vmatpush.bf16.msra.mxu0 %v3114
    %3124 = vmatpush.bf16.msra.mxu0 %v3113
    %3125 = vmatpush.bf16.msra.mxu0 %v3112
    %3126 = vmatpush.bf16.msra.mxu0 %v3111
    %3127 = vmatpush.bf16.msra.mxu0 %v3110
    %3128 = vmatpush.bf16.msra.mxu0 %v3109
    %3129 = vmatpush.bf16.msra.mxu0 %v3108
    %3130 = vmatpush.bf16.msra.mxu0 %v3107
    %3131 = vmatmul.bf16.gmra.mxu0 %v3052
    %v3132 = vpop.f32.mrf.mxu0
    %v3133 = vadd.f32 %v3074, %v3132
    %v3134 = vpop.f32.mrf.mxu0
    %v3135 = vadd.f32 %v3074, %v3134
    %3136 = vmatmul.bf16.gmra.mxu0 %v3053
    %v3137 = vpop.f32.mrf.mxu0
    %v3138 = vadd.f32 %v3074, %v3137
    %v3139 = vpop.f32.mrf.mxu0
    %v3140 = vadd.f32 %v3074, %v3139
    %3141 = vmatmul.bf16.gmra.mxu0 %v3054
    %v3142 = vpop.f32.mrf.mxu0
    %v3143 = vadd.f32 %v3074, %v3142
    %v3144 = vpop.f32.mrf.mxu0
    %v3145 = vadd.f32 %v3074, %v3144
    %3146 = vmatmul.bf16.gmra.mxu0 %v3055
    %v3147 = vpop.f32.mrf.mxu0
    %v3148 = vadd.f32 %v3074, %v3147
    %v3149 = vpop.f32.mrf.mxu0
    %v3150 = vadd.f32 %v3074, %v3149
    %3151 = vmatmul.bf16.gmra.mxu0 %v3056
    %v3152 = vpop.f32.mrf.mxu0
    %v3153 = vadd.f32 %v3074, %v3152
    %v3154 = vpop.f32.mrf.mxu0
    %v3155 = vadd.f32 %v3074, %v3154
    %3156 = vdwg.mxu0
    %v3157 = vadd.f32 %v3042, %v3133
    %v3158 = vadd.f32 %v3043, %v3135
    %v3159 = vadd.f32 %v3044, %v3138
    %v3160 = vadd.f32 %v3045, %v3140
    %v3161 = vadd.f32 %v3046, %v3143
    %v3162 = vadd.f32 %v3047, %v3145
    %v3163 = vadd.f32 %v3048, %v3148
    %v3164 = vadd.f32 %v3049, %v3150
    %v3165 = vadd.f32 %v3050, %v3153
    %v3166 = vadd.f32 %v3051, %v3155
    %v3167 = vmax.f32 %v3157, 0.0
    %v3168 = vmax.f32 %v3158, 0.0
    %v3169 = vmax.f32 %v3159, 0.0
    %v3170 = vmax.f32 %v3160, 0.0
    %v3171 = vmax.f32 %v3161, 0.0
    %v3172 = vmax.f32 %v3162, 0.0
    %v3173 = vmax.f32 %v3163, 0.0
    %v3174 = vmax.f32 %v3164, 0.0
    %v3175 = vmax.f32 %v3165, 0.0
    %v3176 = vmax.f32 %v3166, 0.0
    %v3177 = vpack.c.bf16 %v3168, %v3167
    %v3178 = vpack.c.bf16 %v3170, %v3169
    %v3179 = vpack.c.bf16 %v3172, %v3171
    %v3180 = vpack.c.bf16 %v3174, %v3173
    %v3181 = vpack.c.bf16 %v3176, %v3175
    %s3182 = scalar_lea.vmem [#allocation5], 896
    %v3183 = vld [vmem:[%s3182] sm:$0xf]
    %v3184 = vld [vmem:[%s3182 + $0x4] sm:$0xf]
    %v3185 = vld [vmem:[%s3182 + $0x8] sm:$0xf]
    %v3186 = vld [vmem:[%s3182 + $0xc] sm:$0xf]
    %v3187 = vld [vmem:[%s3182 + $0x10] sm:$0xf]
    %v3188 = vld [vmem:[%s3182 + $0x14] sm:$0xf]
    %v3189 = vld [vmem:[%s3182 + $0x18] sm:$0xf]
    %v3190 = vld [vmem:[%s3182 + $0x1c] sm:$0xf]
    %v3191 = vld [vmem:[%s3182 + $0x20] sm:$0xf]
    %v3192 = vld [vmem:[%s3182 + $0x24] sm:$0xf]
    %v3193 = vld [vmem:[%s3182 + $0x28] sm:$0xf]
    %v3194 = vld [vmem:[%s3182 + $0x2c] sm:$0xf]
    %v3195 = vld [vmem:[%s3182 + $0x30] sm:$0xf]
    %v3196 = vld [vmem:[%s3182 + $0x34] sm:$0xf]
    %v3197 = vld [vmem:[%s3182 + $0x38] sm:$0xf]
    %v3198 = vld [vmem:[%s3182 + $0x3c] sm:$0xf]
    %v3215 = vunpack.c.l.b16 %v3183
    %v3216 = vunpack.c.l.b16 %v3184
    %v3217 = vunpack.c.l.b16 %v3185
    %v3218 = vunpack.c.l.b16 %v3186
    %v3219 = vunpack.c.l.b16 %v3187
    %v3220 = vunpack.c.l.b16 %v3188
    %v3221 = vunpack.c.l.b16 %v3189
    %v3222 = vunpack.c.l.b16 %v3190
    %v3223 = vunpack.c.l.b16 %v3191
    %v3224 = vunpack.c.l.b16 %v3192
    %v3225 = vunpack.c.l.b16 %v3193
    %v3226 = vunpack.c.l.b16 %v3194
    %v3227 = vunpack.c.l.b16 %v3195
    %v3228 = vunpack.c.l.b16 %v3196
    %v3229 = vunpack.c.l.b16 %v3197
    %v3230 = vunpack.c.l.b16 %v3198
    %v3231 = vpack.c.b16 %v3216, %v3215
    %v3232 = vpack.c.b16 %v3218, %v3217
    %v3233 = vpack.c.b16 %v3220, %v3219
    %v3234 = vpack.c.b16 %v3222, %v3221
    %v3235 = vpack.c.b16 %v3224, %v3223
    %v3236 = vpack.c.b16 %v3226, %v3225
    %v3237 = vpack.c.b16 %v3228, %v3227
    %v3238 = vpack.c.b16 %v3230, %v3229
    %3247 = vmatpush.bf16.msra.mxu0 %v3238
    %3248 = vmatpush.bf16.msra.mxu0 %v3237
    %3249 = vmatpush.bf16.msra.mxu0 %v3236
    %3250 = vmatpush.bf16.msra.mxu0 %v3235
    %3251 = vmatpush.bf16.msra.mxu0 %v3234
    %3252 = vmatpush.bf16.msra.mxu0 %v3233
    %3253 = vmatpush.bf16.msra.mxu0 %v3232
    %3254 = vmatpush.bf16.msra.mxu0 %v3231
    %3255 = vmatmul.bf16.gmra.mxu0 %v3177
    %v3256 = vpop.f32.mrf.mxu0
    %v3257 = vadd.f32 0.0, %v3256
    %v3258 = vpop.f32.mrf.mxu0
    %v3259 = vadd.f32 0.0, %v3258
    %3260 = vmatmul.bf16.gmra.mxu0 %v3178
    %v3261 = vpop.f32.mrf.mxu0
    %v3262 = vadd.f32 0.0, %v3261
    %v3263 = vpop.f32.mrf.mxu0
    %v3264 = vadd.f32 0.0, %v3263
    %3265 = vmatmul.bf16.gmra.mxu0 %v3179
    %v3266 = vpop.f32.mrf.mxu0
    %v3267 = vadd.f32 0.0, %v3266
    %v3268 = vpop.f32.mrf.mxu0
    %v3269 = vadd.f32 0.0, %v3268
    %3270 = vmatmul.bf16.gmra.mxu0 %v3180
    %v3271 = vpop.f32.mrf.mxu0
    %v3272 = vadd.f32 0.0, %v3271
    %v3273 = vpop.f32.mrf.mxu0
    %v3274 = vadd.f32 0.0, %v3273
    %3275 = vmatmul.bf16.gmra.mxu0 %v3181
    %v3276 = vpop.f32.mrf.mxu0
    %v3277 = vadd.f32 0.0, %v3276
    %v3278 = vpop.f32.mrf.mxu0
    %v3279 = vadd.f32 0.0, %v3278
    %3280 = vdwg.mxu0
    %s3281 = scalar_lea.vmem [#allocation5], 960
    %v3282 = vld [vmem:[%s3281] sm:$0xf]
    %v3283 = vld [vmem:[%s3281 + $0x4] sm:$0xf]
    %v3284 = vld [vmem:[%s3281 + $0x8] sm:$0xf]
    %v3285 = vld [vmem:[%s3281 + $0xc] sm:$0xf]
    %v3286 = vld [vmem:[%s3281 + $0x10] sm:$0xf]
    %v3287 = vld [vmem:[%s3281 + $0x14] sm:$0xf]
    %v3288 = vld [vmem:[%s3281 + $0x18] sm:$0xf]
    %v3289 = vld [vmem:[%s3281 + $0x1c] sm:$0xf]
    %v3290 = vld [vmem:[%s3281 + $0x20] sm:$0xf]
    %v3291 = vld [vmem:[%s3281 + $0x24] sm:$0xf]
    %v3292 = vld [vmem:[%s3281 + $0x28] sm:$0xf]
    %v3293 = vld [vmem:[%s3281 + $0x2c] sm:$0xf]
    %v3294 = vld [vmem:[%s3281 + $0x30] sm:$0xf]
    %v3295 = vld [vmem:[%s3281 + $0x34] sm:$0xf]
    %v3296 = vld [vmem:[%s3281 + $0x38] sm:$0xf]
    %v3297 = vld [vmem:[%s3281 + $0x3c] sm:$0xf]
    %v3314 = vunpack.c.l.b16 %v3282
    %v3315 = vunpack.c.l.b16 %v3283
    %v3316 = vunpack.c.l.b16 %v3284
    %v3317 = vunpack.c.l.b16 %v3285
    %v3318 = vunpack.c.l.b16 %v3286
    %v3319 = vunpack.c.l.b16 %v3287
    %v3320 = vunpack.c.l.b16 %v3288
    %v3321 = vunpack.c.l.b16 %v3289
    %v3322 = vunpack.c.l.b16 %v3290
    %v3323 = vunpack.c.l.b16 %v3291
    %v3324 = vunpack.c.l.b16 %v3292
    %v3325 = vunpack.c.l.b16 %v3293
    %v3326 = vunpack.c.l.b16 %v3294
    %v3327 = vunpack.c.l.b16 %v3295
    %v3328 = vunpack.c.l.b16 %v3296
    %v3329 = vunpack.c.l.b16 %v3297
    %v3330 = vpack.c.b16 %v3315, %v3314
    %v3331 = vpack.c.b16 %v3317, %v3316
    %v3332 = vpack.c.b16 %v3319, %v3318
    %v3333 = vpack.c.b16 %v3321, %v3320
    %v3334 = vpack.c.b16 %v3323, %v3322
    %v3335 = vpack.c.b16 %v3325, %v3324
    %v3336 = vpack.c.b16 %v3327, %v3326
    %v3337 = vpack.c.b16 %v3329, %v3328
    %3346 = vmatpush.bf16.msra.mxu0 %v3337
    %3347 = vmatpush.bf16.msra.mxu0 %v3336
    %3348 = vmatpush.bf16.msra.mxu0 %v3335
    %3349 = vmatpush.bf16.msra.mxu0 %v3334
    %3350 = vmatpush.bf16.msra.mxu0 %v3333
    %3351 = vmatpush.bf16.msra.mxu0 %v3332
    %3352 = vmatpush.bf16.msra.mxu0 %v3331
    %3353 = vmatpush.bf16.msra.mxu0 %v3330
    %3354 = vmatmul.bf16.gmra.mxu0 %v3177
    %v3355 = vpop.f32.mrf.mxu0
    %v3356 = vadd.f32 0.0, %v3355
    %v3357 = vpop.f32.mrf.mxu0
    %v3358 = vadd.f32 0.0, %v3357
    %3359 = vmatmul.bf16.gmra.mxu0 %v3178
    %v3360 = vpop.f32.mrf.mxu0
    %v3361 = vadd.f32 0.0, %v3360
    %v3362 = vpop.f32.mrf.mxu0
    %v3363 = vadd.f32 0.0, %v3362
    %3364 = vmatmul.bf16.gmra.mxu0 %v3179
    %v3365 = vpop.f32.mrf.mxu0
    %v3366 = vadd.f32 0.0, %v3365
    %v3367 = vpop.f32.mrf.mxu0
    %v3368 = vadd.f32 0.0, %v3367
    %3369 = vmatmul.bf16.gmra.mxu0 %v3180
    %v3370 = vpop.f32.mrf.mxu0
    %v3371 = vadd.f32 0.0, %v3370
    %v3372 = vpop.f32.mrf.mxu0
    %v3373 = vadd.f32 0.0, %v3372
    %3374 = vmatmul.bf16.gmra.mxu0 %v3181
    %v3375 = vpop.f32.mrf.mxu0
    %v3376 = vadd.f32 0.0, %v3375
    %v3377 = vpop.f32.mrf.mxu0
    %v3378 = vadd.f32 0.0, %v3377
    %3379 = vdwg.mxu0
    %s3380 = scalar_lea.vmem [#allocation5], 1024
    %v3381 = vld [vmem:[%s3380] sm:$0xf]
    %v3382 = vld [vmem:[%s3380 + $0x4] sm:$0xf]
    %v3383 = vld [vmem:[%s3380 + $0x8] sm:$0xf]
    %v3384 = vld [vmem:[%s3380 + $0xc] sm:$0xf]
    %v3385 = vld [vmem:[%s3380 + $0x10] sm:$0xf]
    %v3386 = vld [vmem:[%s3380 + $0x14] sm:$0xf]
    %v3387 = vld [vmem:[%s3380 + $0x18] sm:$0xf]
    %v3388 = vld [vmem:[%s3380 + $0x1c] sm:$0xf]
    %v3389 = vld [vmem:[%s3380 + $0x20] sm:$0xf]
    %v3390 = vld [vmem:[%s3380 + $0x24] sm:$0xf]
    %v3391 = vld [vmem:[%s3380 + $0x28] sm:$0xf]
    %v3392 = vld [vmem:[%s3380 + $0x2c] sm:$0xf]
    %v3393 = vld [vmem:[%s3380 + $0x30] sm:$0xf]
    %v3394 = vld [vmem:[%s3380 + $0x34] sm:$0xf]
    %v3395 = vld [vmem:[%s3380 + $0x38] sm:$0xf]
    %v3396 = vld [vmem:[%s3380 + $0x3c] sm:$0xf]
    %v3413 = vunpack.c.l.b16 %v3381
    %v3414 = vunpack.c.l.b16 %v3382
    %v3415 = vunpack.c.l.b16 %v3383
    %v3416 = vunpack.c.l.b16 %v3384
    %v3417 = vunpack.c.l.b16 %v3385
    %v3418 = vunpack.c.l.b16 %v3386
    %v3419 = vunpack.c.l.b16 %v3387
    %v3420 = vunpack.c.l.b16 %v3388
    %v3421 = vunpack.c.l.b16 %v3389
    %v3422 = vunpack.c.l.b16 %v3390
    %v3423 = vunpack.c.l.b16 %v3391
    %v3424 = vunpack.c.l.b16 %v3392
    %v3425 = vunpack.c.l.b16 %v3393
    %v3426 = vunpack.c.l.b16 %v3394
    %v3427 = vunpack.c.l.b16 %v3395
    %v3428 = vunpack.c.l.b16 %v3396
    %v3429 = vpack.c.b16 %v3414, %v3413
    %v3430 = vpack.c.b16 %v3416, %v3415
    %v3431 = vpack.c.b16 %v3418, %v3417
    %v3432 = vpack.c.b16 %v3420, %v3419
    %v3433 = vpack.c.b16 %v3422, %v3421
    %v3434 = vpack.c.b16 %v3424, %v3423
    %v3435 = vpack.c.b16 %v3426, %v3425
    %v3436 = vpack.c.b16 %v3428, %v3427
    %3445 = vmatpush.bf16.msra.mxu0 %v3436
    %3446 = vmatpush.bf16.msra.mxu0 %v3435
    %3447 = vmatpush.bf16.msra.mxu0 %v3434
    %3448 = vmatpush.bf16.msra.mxu0 %v3433
    %3449 = vmatpush.bf16.msra.mxu0 %v3432
    %3450 = vmatpush.bf16.msra.mxu0 %v3431
    %3451 = vmatpush.bf16.msra.mxu0 %v3430
    %3452 = vmatpush.bf16.msra.mxu0 %v3429
    %3453 = vmatmul.bf16.gmra.mxu0 %v3177
    %v3454 = vpop.f32.mrf.mxu0
    %v3455 = vadd.f32 0.0, %v3454
    %v3456 = vpop.f32.mrf.mxu0
    %v3457 = vadd.f32 0.0, %v3456
    %3458 = vmatmul.bf16.gmra.mxu0 %v3178
    %v3459 = vpop.f32.mrf.mxu0
    %v3460 = vadd.f32 0.0, %v3459
    %v3461 = vpop.f32.mrf.mxu0
    %v3462 = vadd.f32 0.0, %v3461
    %3463 = vmatmul.bf16.gmra.mxu0 %v3179
    %v3464 = vpop.f32.mrf.mxu0
    %v3465 = vadd.f32 0.0, %v3464
    %v3466 = vpop.f32.mrf.mxu0
    %v3467 = vadd.f32 0.0, %v3466
    %3468 = vmatmul.bf16.gmra.mxu0 %v3180
    %v3469 = vpop.f32.mrf.mxu0
    %v3470 = vadd.f32 0.0, %v3469
    %v3471 = vpop.f32.mrf.mxu0
    %v3472 = vadd.f32 0.0, %v3471
    %3473 = vmatmul.bf16.gmra.mxu0 %v3181
    %v3474 = vpop.f32.mrf.mxu0
    %v3475 = vadd.f32 0.0, %v3474
    %v3476 = vpop.f32.mrf.mxu0
    %v3477 = vadd.f32 0.0, %v3476
    %3478 = vdwg.mxu0
    %v3479 = vrot.slane %v3257, 7
    %v3480 = vrot.slane %v3259, 7
    %v3481 = vrot.slane %v3262, 7
    %v3482 = vrot.slane %v3264, 7
    %v3483 = vrot.slane %v3267, 7
    %v3484 = vrot.slane %v3269, 7
    %v3485 = vrot.slane %v3272, 7
    %v3486 = vrot.slane %v3274, 7
    %v3487 = vrot.slane %v3277, 7
    %v3488 = vrot.slane %v3279, 7
    %v3489 = vsel %vm574, %v3487, %v3488
    %v3490 = vsel %vm574, %v3486, %v3487
    %v3491 = vsel %vm574, %v3485, %v3486
    %v3492 = vsel %vm574, %v3484, %v3485
    %v3493 = vsel %vm574, %v3483, %v3484
    %v3494 = vsel %vm574, %v3482, %v3483
    %v3495 = vsel %vm574, %v3481, %v3482
    %v3496 = vsel %vm574, %v3480, %v3481
    %v3497 = vsel %vm574, %v3479, %v3480
    %v3498 = vsel %vm574, %v3488, %v3479
    %v3499 = vmul.f32 %v3498, %v2873
    %v3500 = vmul.f32 %v3497, %v2878
    %v3501 = vmul.f32 %v3496, %v2883
    %v3502 = vmul.f32 %v3495, %v2888
    %v3503 = vmul.f32 %v3494, %v2893
    %v3504 = vmul.f32 %v3493, %v2898
    %v3505 = vmul.f32 %v3492, %v2903
    %v3506 = vmul.f32 %v3491, %v2908
    %v3507 = vmul.f32 %v3490, %v2913
    %v3508 = vmul.f32 %v3489, %v2918
    %v3509 = vrot.slane %v3455, 1
    %v3510 = vrot.slane %v3457, 1
    %v3511 = vrot.slane %v3460, 1
    %v3512 = vrot.slane %v3462, 1
    %v3513 = vrot.slane %v3465, 1
    %v3514 = vrot.slane %v3467, 1
    %v3515 = vrot.slane %v3470, 1
    %v3516 = vrot.slane %v3472, 1
    %v3517 = vrot.slane %v3475, 1
    %v3518 = vrot.slane %v3477, 1
    %v3519 = vsel %vm755, %v3517, %v3518
    %v3520 = vsel %vm755, %v3516, %v3517
    %v3521 = vsel %vm755, %v3515, %v3516
    %v3522 = vsel %vm755, %v3514, %v3515
    %v3523 = vsel %vm755, %v3513, %v3514
    %v3524 = vsel %vm755, %v3512, %v3513
    %v3525 = vsel %vm755, %v3511, %v3512
    %v3526 = vsel %vm755, %v3510, %v3511
    %v3527 = vsel %vm755, %v3509, %v3510
    %v3528 = vsel %vm755, %v3518, %v3509
    %v3529 = vmul.f32 %v3527, %v2964
    %v3530 = vmul.f32 %v3526, %v2969
    %v3531 = vmul.f32 %v3525, %v2974
    %v3532 = vmul.f32 %v3524, %v2979
    %v3533 = vmul.f32 %v3523, %v2984
    %v3534 = vmul.f32 %v3522, %v2989
    %v3535 = vmul.f32 %v3521, %v2994
    %v3536 = vmul.f32 %v3520, %v2999
    %v3537 = vmul.f32 %v3519, %v3004
    %v3538 = vmul.f32 %v3528, %v3009
    %v3539 = vadd.f32 %v3499, %v3356
    %v3540 = vadd.f32 %v3500, %v3358
    %v3541 = vadd.f32 %v3501, %v3361
    %v3542 = vadd.f32 %v3502, %v3363
    %v3543 = vadd.f32 %v3503, %v3366
    %v3544 = vadd.f32 %v3504, %v3368
    %v3545 = vadd.f32 %v3505, %v3371
    %v3546 = vadd.f32 %v3506, %v3373
    %v3547 = vadd.f32 %v3507, %v3376
    %v3548 = vadd.f32 %v3508, %v3378
    %v3549 = vadd.f32 %v3539, %v3529
    %v3550 = vadd.f32 %v3540, %v3530
    %v3551 = vadd.f32 %v3541, %v3531
    %v3552 = vadd.f32 %v3542, %v3532
    %v3553 = vadd.f32 %v3543, %v3533
    %v3554 = vadd.f32 %v3544, %v3534
    %v3555 = vadd.f32 %v3545, %v3535
    %v3556 = vadd.f32 %v3546, %v3536
    %v3557 = vadd.f32 %v3547, %v3537
    %v3558 = vadd.f32 %v3548, %v3538
    %v3559 = vperm.slane %v149, 6
    %v3560 = vadd.f32 %v3549, %v3559
    %v3561 = vadd.f32 %v3550, %v3559
    %v3562 = vadd.f32 %v3551, %v3559
    %v3563 = vadd.f32 %v3552, %v3559
    %v3564 = vadd.f32 %v3553, %v3559
    %v3565 = vadd.f32 %v3554, %v3559
    %v3566 = vadd.f32 %v3555, %v3559
    %v3567 = vadd.f32 %v3556, %v3559
    %v3568 = vadd.f32 %v3557, %v3559
    %v3569 = vadd.f32 %v3558, %v3559
    %v3570 = vld [vmem:[#allocation10] sm:$0xff]
    %v3571 = vld [vmem:[#allocation10 + $0x8] sm:$0xff]
    %v3572 = vld [vmem:[#allocation10 + $0x10] sm:$0xff]
    %v3573 = vld [vmem:[#allocation10 + $0x18] sm:$0xff]
    %v3574 = vld [vmem:[#allocation10 + $0x20] sm:$0xff]
    %vm3575 = vcmask 654336
    %v3577 = vsel %vm3575, %v3570, 0
    %v3580 = vsel %vm3575, %v3571, 0
    %v3583 = vsel %vm3575, %v3572, 0
    %v3586 = vsel %vm3575, %v3573, 0
    %v3589 = vsel %vm3575, %v3574, 0
    %3591 = vmatpush.msra.mxu0 0.0
    %3592 = vmatpush.msra.mxu0 0.0
    %3593 = vmatpush.msra.mxu0 0.0
    %3594 = vmatpush.msra.mxu0 0.0
    %3595 = vmatpush.msra.mxu0 0.0
    %3596 = vmatpush.msra.mxu0 0.0
    %3597 = vmatpush.msra.mxu0 %v3569
    %3598 = vmatpush.msra.mxu0 %v3568
    %3599 = vmatpush.msra.mxu0 %v3567
    %3600 = vmatpush.msra.mxu0 %v3566
    %3601 = vmatpush.msra.mxu0 %v3565
    %3602 = vmatpush.msra.mxu0 %v3564
    %3603 = vmatpush.msra.mxu0 %v3563
    %3604 = vmatpush.msra.mxu0 %v3562
    %3605 = vmatpush.msra.mxu0 %v3561
    %3606 = vmatpush.msra.mxu0 %v3560
    %3607 = vmatmul.f32.gmra.mxu0 %v3577
    %v3608 = vpop.f32.mrf.mxu0
    %v3609 = vadd.f32 0.0, %v3608
    %3610 = vmatmul.f32.gmra.mxu0 %v3580
    %v3611 = vpop.f32.mrf.mxu0
    %v3612 = vadd.f32 0.0, %v3611
    %3613 = vmatmul.f32.gmra.mxu0 %v3583
    %v3614 = vpop.f32.mrf.mxu0
    %v3615 = vadd.f32 0.0, %v3614
    %3616 = vmatmul.f32.gmra.mxu0 %v3586
    %v3617 = vpop.f32.mrf.mxu0
    %v3618 = vadd.f32 0.0, %v3617
    %3619 = vmatmul.f32.gmra.mxu0 %v3589
    %v3620 = vpop.f32.mrf.mxu0
    %v3621 = vadd.f32 0.0, %v3620
    %3622 = vdwg.mxu0
    %3623 = vmatpush.msra.mxu0 0.0
    %3624 = vmatpush.msra.mxu0 0.0
    %3625 = vmatpush.msra.mxu0 0.0
    %3626 = vmatpush.msra.mxu0 0.0
    %3627 = vmatpush.msra.mxu0 0.0
    %3628 = vmatpush.msra.mxu0 0.0
    %3629 = vmatpush.msra.mxu0 %v3176
    %3630 = vmatpush.msra.mxu0 %v3175
    %3631 = vmatpush.msra.mxu0 %v3174
    %3632 = vmatpush.msra.mxu0 %v3173
    %3633 = vmatpush.msra.mxu0 %v3172
    %3634 = vmatpush.msra.mxu0 %v3171
    %3635 = vmatpush.msra.mxu0 %v3170
    %3636 = vmatpush.msra.mxu0 %v3169
    %3637 = vmatpush.msra.mxu0 %v3168
    %3638 = vmatpush.msra.mxu0 %v3167
    %3639 = vmatmul.f32.gmra.mxu0 %v3577
    %v3640 = vpop.f32.mrf.mxu0
    %v3641 = vadd.f32 0.0, %v3640
    %3642 = vmatmul.f32.gmra.mxu0 %v3580
    %v3643 = vpop.f32.mrf.mxu0
    %v3644 = vadd.f32 0.0, %v3643
    %3645 = vmatmul.f32.gmra.mxu0 %v3583
    %v3646 = vpop.f32.mrf.mxu0
    %v3647 = vadd.f32 0.0, %v3646
    %3648 = vmatmul.f32.gmra.mxu0 %v3586
    %v3649 = vpop.f32.mrf.mxu0
    %v3650 = vadd.f32 0.0, %v3649
    %3651 = vmatmul.f32.gmra.mxu0 %v3589
    %v3652 = vpop.f32.mrf.mxu0
    %v3653 = vadd.f32 0.0, %v3652
    %3654 = vdwg.mxu0
    %v3655 = vmax.f32 %v3609, 0.0
    %v3656 = vmax.f32 %v3612, 0.0
    %v3657 = vmax.f32 %v3615, 0.0
    %v3658 = vmax.f32 %v3618, 0.0
    %v3659 = vmax.f32 %v3621, 0.0
    %v3660 = vpack.c.bf16 %v3656, %v3655
    %v3661 = vpack.c.bf16 %v3658, %v3657
    %v3662 = vpack.c.bf16 %v3659, %v3659
    %s3663 = scalar_lea.vmem [#allocation5], 1088
    %v3664 = vld [vmem:[%s3663] sm:$0xf]
    %v3665 = vld [vmem:[%s3663 + $0x4] sm:$0xf]
    %v3666 = vld [vmem:[%s3663 + $0x8] sm:$0xf]
    %v3667 = vld [vmem:[%s3663 + $0xc] sm:$0xf]
    %v3668 = vld [vmem:[%s3663 + $0x10] sm:$0xf]
    %v3669 = vld [vmem:[%s3663 + $0x14] sm:$0xf]
    %v3670 = vld [vmem:[%s3663 + $0x18] sm:$0xf]
    %v3671 = vld [vmem:[%s3663 + $0x1c] sm:$0xf]
    %v3672 = vld [vmem:[%s3663 + $0x20] sm:$0xf]
    %v3673 = vld [vmem:[%s3663 + $0x24] sm:$0xf]
    %v3674 = vld [vmem:[%s3663 + $0x28] sm:$0xf]
    %v3675 = vld [vmem:[%s3663 + $0x2c] sm:$0xf]
    %v3676 = vld [vmem:[%s3663 + $0x30] sm:$0xf]
    %v3677 = vld [vmem:[%s3663 + $0x34] sm:$0xf]
    %v3678 = vld [vmem:[%s3663 + $0x38] sm:$0xf]
    %v3679 = vld [vmem:[%s3663 + $0x3c] sm:$0xf]
    %v3696 = vunpack.c.l.b16 %v3664
    %v3697 = vunpack.c.l.b16 %v3665
    %v3698 = vunpack.c.l.b16 %v3666
    %v3699 = vunpack.c.l.b16 %v3667
    %v3700 = vunpack.c.l.b16 %v3668
    %v3701 = vunpack.c.l.b16 %v3669
    %v3702 = vunpack.c.l.b16 %v3670
    %v3703 = vunpack.c.l.b16 %v3671
    %v3704 = vunpack.c.l.b16 %v3672
    %v3705 = vunpack.c.l.b16 %v3673
    %v3706 = vunpack.c.l.b16 %v3674
    %v3707 = vunpack.c.l.b16 %v3675
    %v3708 = vunpack.c.l.b16 %v3676
    %v3709 = vunpack.c.l.b16 %v3677
    %v3710 = vunpack.c.l.b16 %v3678
    %v3711 = vunpack.c.l.b16 %v3679
    %v3712 = vpack.c.b16 %v3697, %v3696
    %v3713 = vpack.c.b16 %v3699, %v3698
    %v3714 = vpack.c.b16 %v3701, %v3700
    %v3715 = vpack.c.b16 %v3703, %v3702
    %v3716 = vpack.c.b16 %v3705, %v3704
    %v3717 = vpack.c.b16 %v3707, %v3706
    %v3718 = vpack.c.b16 %v3709, %v3708
    %v3719 = vpack.c.b16 %v3711, %v3710
    %3728 = vmatpush.bf16.msra.mxu0 %v3719
    %3729 = vmatpush.bf16.msra.mxu0 %v3718
    %3730 = vmatpush.bf16.msra.mxu0 %v3717
    %3731 = vmatpush.bf16.msra.mxu0 %v3716
    %3732 = vmatpush.bf16.msra.mxu0 %v3715
    %3733 = vmatpush.bf16.msra.mxu0 %v3714
    %3734 = vmatpush.bf16.msra.mxu0 %v3713
    %3735 = vmatpush.bf16.msra.mxu0 %v3712
    %3736 = vmatmul.bf16.gmra.mxu0 %v3660
    %v3737 = vpop.f32.mrf.mxu0
    %v3738 = vadd.f32 0.0, %v3737
    %v3739 = vpop.f32.mrf.mxu0
    %v3740 = vadd.f32 0.0, %v3739
    %3741 = vmatmul.bf16.gmra.mxu0 %v3661
    %v3742 = vpop.f32.mrf.mxu0
    %v3743 = vadd.f32 0.0, %v3742
    %v3744 = vpop.f32.mrf.mxu0
    %v3745 = vadd.f32 0.0, %v3744
    %3746 = vmatmul.bf16.gmra.mxu0 %v3662
    %v3747 = vpop.f32.mrf.mxu0
    %v3748 = vadd.f32 0.0, %v3747
    %v3749 = vpop.f32.mrf.mxu0
    %3750 = vdwg.mxu0
    %s3751 = scalar_lea.vmem [#allocation5], 1152
    %v3752 = vld [vmem:[%s3751] sm:$0xf]
    %v3753 = vld [vmem:[%s3751 + $0x4] sm:$0xf]
    %v3754 = vld [vmem:[%s3751 + $0x8] sm:$0xf]
    %v3755 = vld [vmem:[%s3751 + $0xc] sm:$0xf]
    %v3756 = vld [vmem:[%s3751 + $0x10] sm:$0xf]
    %v3757 = vld [vmem:[%s3751 + $0x14] sm:$0xf]
    %v3758 = vld [vmem:[%s3751 + $0x18] sm:$0xf]
    %v3759 = vld [vmem:[%s3751 + $0x1c] sm:$0xf]
    %v3760 = vld [vmem:[%s3751 + $0x20] sm:$0xf]
    %v3761 = vld [vmem:[%s3751 + $0x24] sm:$0xf]
    %v3762 = vld [vmem:[%s3751 + $0x28] sm:$0xf]
    %v3763 = vld [vmem:[%s3751 + $0x2c] sm:$0xf]
    %v3764 = vld [vmem:[%s3751 + $0x30] sm:$0xf]
    %v3765 = vld [vmem:[%s3751 + $0x34] sm:$0xf]
    %v3766 = vld [vmem:[%s3751 + $0x38] sm:$0xf]
    %v3767 = vld [vmem:[%s3751 + $0x3c] sm:$0xf]
    %v3784 = vunpack.c.l.b16 %v3752
    %v3785 = vunpack.c.l.b16 %v3753
    %v3786 = vunpack.c.l.b16 %v3754
    %v3787 = vunpack.c.l.b16 %v3755
    %v3788 = vunpack.c.l.b16 %v3756
    %v3789 = vunpack.c.l.b16 %v3757
    %v3790 = vunpack.c.l.b16 %v3758
    %v3791 = vunpack.c.l.b16 %v3759
    %v3792 = vunpack.c.l.b16 %v3760
    %v3793 = vunpack.c.l.b16 %v3761
    %v3794 = vunpack.c.l.b16 %v3762
    %v3795 = vunpack.c.l.b16 %v3763
    %v3796 = vunpack.c.l.b16 %v3764
    %v3797 = vunpack.c.l.b16 %v3765
    %v3798 = vunpack.c.l.b16 %v3766
    %v3799 = vunpack.c.l.b16 %v3767
    %v3800 = vpack.c.b16 %v3785, %v3784
    %v3801 = vpack.c.b16 %v3787, %v3786
    %v3802 = vpack.c.b16 %v3789, %v3788
    %v3803 = vpack.c.b16 %v3791, %v3790
    %v3804 = vpack.c.b16 %v3793, %v3792
    %v3805 = vpack.c.b16 %v3795, %v3794
    %v3806 = vpack.c.b16 %v3797, %v3796
    %v3807 = vpack.c.b16 %v3799, %v3798
    %3816 = vmatpush.bf16.msra.mxu0 %v3807
    %3817 = vmatpush.bf16.msra.mxu0 %v3806
    %3818 = vmatpush.bf16.msra.mxu0 %v3805
    %3819 = vmatpush.bf16.msra.mxu0 %v3804
    %3820 = vmatpush.bf16.msra.mxu0 %v3803
    %3821 = vmatpush.bf16.msra.mxu0 %v3802
    %3822 = vmatpush.bf16.msra.mxu0 %v3801
    %3823 = vmatpush.bf16.msra.mxu0 %v3800
    %3824 = vmatmul.bf16.gmra.mxu0 %v3660
    %v3825 = vpop.f32.mrf.mxu0
    %v3826 = vadd.f32 0.0, %v3825
    %v3827 = vpop.f32.mrf.mxu0
    %v3828 = vadd.f32 0.0, %v3827
    %3829 = vmatmul.bf16.gmra.mxu0 %v3661
    %v3830 = vpop.f32.mrf.mxu0
    %v3831 = vadd.f32 0.0, %v3830
    %v3832 = vpop.f32.mrf.mxu0
    %v3833 = vadd.f32 0.0, %v3832
    %3834 = vmatmul.bf16.gmra.mxu0 %v3662
    %v3835 = vpop.f32.mrf.mxu0
    %v3836 = vadd.f32 0.0, %v3835
    %v3837 = vpop.f32.mrf.mxu0
    %3838 = vdwg.mxu0
    %s3839 = scalar_lea.vmem [#allocation5], 1216
    %v3840 = vld [vmem:[%s3839] sm:$0xf]
    %v3841 = vld [vmem:[%s3839 + $0x4] sm:$0xf]
    %v3842 = vld [vmem:[%s3839 + $0x8] sm:$0xf]
    %v3843 = vld [vmem:[%s3839 + $0xc] sm:$0xf]
    %v3844 = vld [vmem:[%s3839 + $0x10] sm:$0xf]
    %v3845 = vld [vmem:[%s3839 + $0x14] sm:$0xf]
    %v3846 = vld [vmem:[%s3839 + $0x18] sm:$0xf]
    %v3847 = vld [vmem:[%s3839 + $0x1c] sm:$0xf]
    %v3848 = vld [vmem:[%s3839 + $0x20] sm:$0xf]
    %v3849 = vld [vmem:[%s3839 + $0x24] sm:$0xf]
    %v3850 = vld [vmem:[%s3839 + $0x28] sm:$0xf]
    %v3851 = vld [vmem:[%s3839 + $0x2c] sm:$0xf]
    %v3852 = vld [vmem:[%s3839 + $0x30] sm:$0xf]
    %v3853 = vld [vmem:[%s3839 + $0x34] sm:$0xf]
    %v3854 = vld [vmem:[%s3839 + $0x38] sm:$0xf]
    %v3855 = vld [vmem:[%s3839 + $0x3c] sm:$0xf]
    %v3872 = vunpack.c.l.b16 %v3840
    %v3873 = vunpack.c.l.b16 %v3841
    %v3874 = vunpack.c.l.b16 %v3842
    %v3875 = vunpack.c.l.b16 %v3843
    %v3876 = vunpack.c.l.b16 %v3844
    %v3877 = vunpack.c.l.b16 %v3845
    %v3878 = vunpack.c.l.b16 %v3846
    %v3879 = vunpack.c.l.b16 %v3847
    %v3880 = vunpack.c.l.b16 %v3848
    %v3881 = vunpack.c.l.b16 %v3849
    %v3882 = vunpack.c.l.b16 %v3850
    %v3883 = vunpack.c.l.b16 %v3851
    %v3884 = vunpack.c.l.b16 %v3852
    %v3885 = vunpack.c.l.b16 %v3853
    %v3886 = vunpack.c.l.b16 %v3854
    %v3887 = vunpack.c.l.b16 %v3855
    %v3888 = vpack.c.b16 %v3873, %v3872
    %v3889 = vpack.c.b16 %v3875, %v3874
    %v3890 = vpack.c.b16 %v3877, %v3876
    %v3891 = vpack.c.b16 %v3879, %v3878
    %v3892 = vpack.c.b16 %v3881, %v3880
    %v3893 = vpack.c.b16 %v3883, %v3882
    %v3894 = vpack.c.b16 %v3885, %v3884
    %v3895 = vpack.c.b16 %v3887, %v3886
    %3904 = vmatpush.bf16.msra.mxu0 %v3895
    %3905 = vmatpush.bf16.msra.mxu0 %v3894
    %3906 = vmatpush.bf16.msra.mxu0 %v3893
    %3907 = vmatpush.bf16.msra.mxu0 %v3892
    %3908 = vmatpush.bf16.msra.mxu0 %v3891
    %3909 = vmatpush.bf16.msra.mxu0 %v3890
    %3910 = vmatpush.bf16.msra.mxu0 %v3889
    %3911 = vmatpush.bf16.msra.mxu0 %v3888
    %3912 = vmatmul.bf16.gmra.mxu0 %v3660
    %v3913 = vpop.f32.mrf.mxu0
    %v3914 = vadd.f32 0.0, %v3913
    %v3915 = vpop.f32.mrf.mxu0
    %v3916 = vadd.f32 0.0, %v3915
    %3917 = vmatmul.bf16.gmra.mxu0 %v3661
    %v3918 = vpop.f32.mrf.mxu0
    %v3919 = vadd.f32 0.0, %v3918
    %v3920 = vpop.f32.mrf.mxu0
    %v3921 = vadd.f32 0.0, %v3920
    %3922 = vmatmul.bf16.gmra.mxu0 %v3662
    %v3923 = vpop.f32.mrf.mxu0
    %v3924 = vadd.f32 0.0, %v3923
    %v3925 = vpop.f32.mrf.mxu0
    %3926 = vdwg.mxu0
    %v3927 = vrot.slane %v3738, 7
    %v3928 = vrot.slane %v3740, 7
    %v3929 = vrot.slane %v3743, 7
    %v3930 = vrot.slane %v3745, 7
    %v3931 = vrot.slane %v3748, 7
    %v3932 = vsel %vm574, %v3930, %v3931
    %v3933 = vsel %vm574, %v3929, %v3930
    %v3934 = vsel %vm574, %v3928, %v3929
    %v3935 = vsel %vm574, %v3927, %v3928
    %v3936 = vsel %vm574, %v3931, %v3927
    %v3937 = vld [vmem:[%s5] sm:$0xff]
    %v3938 = vld [vmem:[%s5 + $0x8] sm:$0xff]
    %v3939 = vld [vmem:[%s5 + $0x10] sm:$0xff]
    %v3940 = vld [vmem:[%s5 + $0x18] sm:$0xff]
    %v3941 = vld [vmem:[%s5 + $0x20] sm:$0xff]
    %3943 = vset.pattern.permute.xlu0 0
    %3944 = vperm.xlu0 %3943, %v3937
    %v3945 = vpop.permute.xlu0 %3944
    %3948 = vset.pattern.permute.xlu0 0
    %3949 = vperm.xlu0 %3948, %v3938
    %v3950 = vpop.permute.xlu0 %3949
    %3953 = vset.pattern.permute.xlu0 0
    %3954 = vperm.xlu0 %3953, %v3939
    %v3955 = vpop.permute.xlu0 %3954
    %3958 = vset.pattern.permute.xlu0 0
    %3959 = vperm.xlu0 %3958, %v3940
    %v3960 = vpop.permute.xlu0 %3959
    %3963 = vset.pattern.permute.xlu0 0
    %3964 = vperm.xlu0 %3963, %v3941
    %v3965 = vpop.permute.xlu0 %3964
    %v3967 = vmul.f32 %v3936, %v3945
    %v3968 = vmul.f32 %v3935, %v3950
    %v3969 = vmul.f32 %v3934, %v3955
    %v3970 = vmul.f32 %v3933, %v3960
    %v3971 = vmul.f32 %v3932, %v3965
    %v3972 = vrot.slane %v3914, 1
    %v3973 = vrot.slane %v3916, 1
    %v3974 = vrot.slane %v3919, 1
    %v3975 = vrot.slane %v3921, 1
    %v3976 = vrot.slane %v3924, 1
    %v3977 = vsel %vm755, %v3975, %v3976
    %v3978 = vsel %vm755, %v3974, %v3975
    %v3979 = vsel %vm755, %v3973, %v3974
    %v3980 = vsel %vm755, %v3972, %v3973
    %v3981 = vsel %vm755, %v3976, %v3972
    %s3982 = scalar_lea.vmem %s5, 40
    %v3983 = vld [vmem:[%s3982] sm:$0xff]
    %v3984 = vld [vmem:[%s3982 + $0x8] sm:$0xff]
    %v3985 = vld [vmem:[%s3982 + $0x10] sm:$0xff]
    %v3986 = vld [vmem:[%s3982 + $0x18] sm:$0xff]
    %v3987 = vld [vmem:[%s3982 + $0x20] sm:$0xff]
    %3989 = vset.pattern.permute.xlu0 0
    %3990 = vperm.xlu0 %3989, %v3983
    %v3991 = vpop.permute.xlu0 %3990
    %3994 = vset.pattern.permute.xlu0 0
    %3995 = vperm.xlu0 %3994, %v3984
    %v3996 = vpop.permute.xlu0 %3995
    %3999 = vset.pattern.permute.xlu0 0
    %4000 = vperm.xlu0 %3999, %v3985
    %v4001 = vpop.permute.xlu0 %4000
    %4004 = vset.pattern.permute.xlu0 0
    %4005 = vperm.xlu0 %4004, %v3986
    %v4006 = vpop.permute.xlu0 %4005
    %4009 = vset.pattern.permute.xlu0 0
    %4010 = vperm.xlu0 %4009, %v3987
    %v4011 = vpop.permute.xlu0 %4010
    %v4013 = vmul.f32 %v3980, %v3991
    %v4014 = vmul.f32 %v3979, %v3996
    %v4015 = vmul.f32 %v3978, %v4001
    %v4016 = vmul.f32 %v3977, %v4006
    %v4017 = vmul.f32 %v3981, %v4011
    %v4018 = vadd.f32 %v3967, %v3826
    %v4019 = vadd.f32 %v3968, %v3828
    %v4020 = vadd.f32 %v3969, %v3831
    %v4021 = vadd.f32 %v3970, %v3833
    %v4022 = vadd.f32 %v3971, %v3836
    %v4023 = vadd.f32 %v4018, %v4013
    %v4024 = vadd.f32 %v4019, %v4014
    %v4025 = vadd.f32 %v4020, %v4015
    %v4026 = vadd.f32 %v4021, %v4016
    %v4027 = vadd.f32 %v4022, %v4017
    %v4028 = vperm.slane %v149, 7
    %v4029 = vadd.f32 %v4023, %v4028
    %v4030 = vadd.f32 %v4024, %v4028
    %v4031 = vadd.f32 %v4025, %v4028
    %v4032 = vadd.f32 %v4026, %v4028
    %v4033 = vadd.f32 %v4027, %v4028
    %v4034 = vpack.c.bf16 %v3644, %v3641
    %v4035 = vpack.c.bf16 %v3650, %v3647
    %v4036 = vpack.c.bf16 %v3653, %v3653
    %s4037 = scalar_lea.vmem [#allocation5], 1280
    %v4038 = vld [vmem:[%s4037] sm:$0xf]
    %v4039 = vld [vmem:[%s4037 + $0x4] sm:$0xf]
    %v4040 = vld [vmem:[%s4037 + $0x8] sm:$0xf]
    %v4041 = vld [vmem:[%s4037 + $0xc] sm:$0xf]
    %v4042 = vld [vmem:[%s4037 + $0x10] sm:$0xf]
    %v4043 = vld [vmem:[%s4037 + $0x14] sm:$0xf]
    %v4044 = vld [vmem:[%s4037 + $0x18] sm:$0xf]
    %v4045 = vld [vmem:[%s4037 + $0x1c] sm:$0xf]
    %v4046 = vld [vmem:[%s4037 + $0x20] sm:$0xf]
    %v4047 = vld [vmem:[%s4037 + $0x24] sm:$0xf]
    %v4048 = vld [vmem:[%s4037 + $0x28] sm:$0xf]
    %v4049 = vld [vmem:[%s4037 + $0x2c] sm:$0xf]
    %v4050 = vld [vmem:[%s4037 + $0x30] sm:$0xf]
    %v4051 = vld [vmem:[%s4037 + $0x34] sm:$0xf]
    %v4052 = vld [vmem:[%s4037 + $0x38] sm:$0xf]
    %v4053 = vld [vmem:[%s4037 + $0x3c] sm:$0xf]
    %v4054 = vperm.slane %v150, 0
    %v4071 = vunpack.c.l.b16 %v4038
    %v4072 = vunpack.c.l.b16 %v4039
    %v4073 = vunpack.c.l.b16 %v4040
    %v4074 = vunpack.c.l.b16 %v4041
    %v4075 = vunpack.c.l.b16 %v4042
    %v4076 = vunpack.c.l.b16 %v4043
    %v4077 = vunpack.c.l.b16 %v4044
    %v4078 = vunpack.c.l.b16 %v4045
    %v4079 = vunpack.c.l.b16 %v4046
    %v4080 = vunpack.c.l.b16 %v4047
    %v4081 = vunpack.c.l.b16 %v4048
    %v4082 = vunpack.c.l.b16 %v4049
    %v4083 = vunpack.c.l.b16 %v4050
    %v4084 = vunpack.c.l.b16 %v4051
    %v4085 = vunpack.c.l.b16 %v4052
    %v4086 = vunpack.c.l.b16 %v4053
    %v4087 = vpack.c.b16 %v4072, %v4071
    %v4088 = vpack.c.b16 %v4074, %v4073
    %v4089 = vpack.c.b16 %v4076, %v4075
    %v4090 = vpack.c.b16 %v4078, %v4077
    %v4091 = vpack.c.b16 %v4080, %v4079
    %v4092 = vpack.c.b16 %v4082, %v4081
    %v4093 = vpack.c.b16 %v4084, %v4083
    %v4094 = vpack.c.b16 %v4086, %v4085
    %4103 = vmatpush.bf16.msra.mxu0 %v4094
    %4104 = vmatpush.bf16.msra.mxu0 %v4093
    %4105 = vmatpush.bf16.msra.mxu0 %v4092
    %4106 = vmatpush.bf16.msra.mxu0 %v4091
    %4107 = vmatpush.bf16.msra.mxu0 %v4090
    %4108 = vmatpush.bf16.msra.mxu0 %v4089
    %4109 = vmatpush.bf16.msra.mxu0 %v4088
    %4110 = vmatpush.bf16.msra.mxu0 %v4087
    %4111 = vmatmul.bf16.gmra.mxu0 %v4034
    %v4112 = vpop.f32.mrf.mxu0
    %v4113 = vadd.f32 %v4054, %v4112
    %v4114 = vpop.f32.mrf.mxu0
    %v4115 = vadd.f32 %v4054, %v4114
    %4116 = vmatmul.bf16.gmra.mxu0 %v4035
    %v4117 = vpop.f32.mrf.mxu0
    %v4118 = vadd.f32 %v4054, %v4117
    %v4119 = vpop.f32.mrf.mxu0
    %v4120 = vadd.f32 %v4054, %v4119
    %4121 = vmatmul.bf16.gmra.mxu0 %v4036
    %v4122 = vpop.f32.mrf.mxu0
    %v4123 = vadd.f32 %v4054, %v4122
    %v4124 = vpop.f32.mrf.mxu0
    %4125 = vdwg.mxu0
    %v4126 = vadd.f32 %v4029, %v4113
    %v4127 = vadd.f32 %v4030, %v4115
    %v4128 = vadd.f32 %v4031, %v4118
    %v4129 = vadd.f32 %v4032, %v4120
    %v4130 = vadd.f32 %v4033, %v4123
    %v4131 = vmax.f32 %v4126, 0.0
    %v4132 = vmax.f32 %v4127, 0.0
    %v4133 = vmax.f32 %v4128, 0.0
    %v4134 = vmax.f32 %v4129, 0.0
    %v4135 = vmax.f32 %v4130, 0.0
    %v4136 = vpack.c.bf16 %v4132, %v4131
    %v4137 = vpack.c.bf16 %v4134, %v4133
    %v4138 = vpack.c.bf16 %v4135, %v4135
    %s4139 = scalar_lea.vmem [#allocation5], 1344
    %v4140 = vld [vmem:[%s4139] sm:$0xf]
    %v4141 = vld [vmem:[%s4139 + $0x4] sm:$0xf]
    %v4142 = vld [vmem:[%s4139 + $0x8] sm:$0xf]
    %v4143 = vld [vmem:[%s4139 + $0xc] sm:$0xf]
    %v4144 = vld [vmem:[%s4139 + $0x10] sm:$0xf]
    %v4145 = vld [vmem:[%s4139 + $0x14] sm:$0xf]
    %v4146 = vld [vmem:[%s4139 + $0x18] sm:$0xf]
    %v4147 = vld [vmem:[%s4139 + $0x1c] sm:$0xf]
    %v4148 = vld [vmem:[%s4139 + $0x20] sm:$0xf]
    %v4149 = vld [vmem:[%s4139 + $0x24] sm:$0xf]
    %v4150 = vld [vmem:[%s4139 + $0x28] sm:$0xf]
    %v4151 = vld [vmem:[%s4139 + $0x2c] sm:$0xf]
    %v4152 = vld [vmem:[%s4139 + $0x30] sm:$0xf]
    %v4153 = vld [vmem:[%s4139 + $0x34] sm:$0xf]
    %v4154 = vld [vmem:[%s4139 + $0x38] sm:$0xf]
    %v4155 = vld [vmem:[%s4139 + $0x3c] sm:$0xf]
    %v4172 = vunpack.c.l.b16 %v4140
    %v4173 = vunpack.c.l.b16 %v4141
    %v4174 = vunpack.c.l.b16 %v4142
    %v4175 = vunpack.c.l.b16 %v4143
    %v4176 = vunpack.c.l.b16 %v4144
    %v4177 = vunpack.c.l.b16 %v4145
    %v4178 = vunpack.c.l.b16 %v4146
    %v4179 = vunpack.c.l.b16 %v4147
    %v4180 = vunpack.c.l.b16 %v4148
    %v4181 = vunpack.c.l.b16 %v4149
    %v4182 = vunpack.c.l.b16 %v4150
    %v4183 = vunpack.c.l.b16 %v4151
    %v4184 = vunpack.c.l.b16 %v4152
    %v4185 = vunpack.c.l.b16 %v4153
    %v4186 = vunpack.c.l.b16 %v4154
    %v4187 = vunpack.c.l.b16 %v4155
    %v4188 = vpack.c.b16 %v4173, %v4172
    %v4189 = vpack.c.b16 %v4175, %v4174
    %v4190 = vpack.c.b16 %v4177, %v4176
    %v4191 = vpack.c.b16 %v4179, %v4178
    %v4192 = vpack.c.b16 %v4181, %v4180
    %v4193 = vpack.c.b16 %v4183, %v4182
    %v4194 = vpack.c.b16 %v4185, %v4184
    %v4195 = vpack.c.b16 %v4187, %v4186
    %4204 = vmatpush.bf16.msra.mxu0 %v4195
    %4205 = vmatpush.bf16.msra.mxu0 %v4194
    %4206 = vmatpush.bf16.msra.mxu0 %v4193
    %4207 = vmatpush.bf16.msra.mxu0 %v4192
    %4208 = vmatpush.bf16.msra.mxu0 %v4191
    %4209 = vmatpush.bf16.msra.mxu0 %v4190
    %4210 = vmatpush.bf16.msra.mxu0 %v4189
    %4211 = vmatpush.bf16.msra.mxu0 %v4188
    %4212 = vmatmul.bf16.gmra.mxu0 %v4136
    %v4213 = vpop.f32.mrf.mxu0
    %v4214 = vadd.f32 0.0, %v4213
    %v4215 = vpop.f32.mrf.mxu0
    %v4216 = vadd.f32 0.0, %v4215
    %4217 = vmatmul.bf16.gmra.mxu0 %v4137
    %v4218 = vpop.f32.mrf.mxu0
    %v4219 = vadd.f32 0.0, %v4218
    %v4220 = vpop.f32.mrf.mxu0
    %v4221 = vadd.f32 0.0, %v4220
    %4222 = vmatmul.bf16.gmra.mxu0 %v4138
    %v4223 = vpop.f32.mrf.mxu0
    %v4224 = vadd.f32 0.0, %v4223
    %v4225 = vpop.f32.mrf.mxu0
    %4226 = vdwg.mxu0
    %s4227 = scalar_lea.vmem [#allocation5], 1408
    %v4228 = vld [vmem:[%s4227] sm:$0xf]
    %v4229 = vld [vmem:[%s4227 + $0x4] sm:$0xf]
    %v4230 = vld [vmem:[%s4227 + $0x8] sm:$0xf]
    %v4231 = vld [vmem:[%s4227 + $0xc] sm:$0xf]
    %v4232 = vld [vmem:[%s4227 + $0x10] sm:$0xf]
    %v4233 = vld [vmem:[%s4227 + $0x14] sm:$0xf]
    %v4234 = vld [vmem:[%s4227 + $0x18] sm:$0xf]
    %v4235 = vld [vmem:[%s4227 + $0x1c] sm:$0xf]
    %v4236 = vld [vmem:[%s4227 + $0x20] sm:$0xf]
    %v4237 = vld [vmem:[%s4227 + $0x24] sm:$0xf]
    %v4238 = vld [vmem:[%s4227 + $0x28] sm:$0xf]
    %v4239 = vld [vmem:[%s4227 + $0x2c] sm:$0xf]
    %v4240 = vld [vmem:[%s4227 + $0x30] sm:$0xf]
    %v4241 = vld [vmem:[%s4227 + $0x34] sm:$0xf]
    %v4242 = vld [vmem:[%s4227 + $0x38] sm:$0xf]
    %v4243 = vld [vmem:[%s4227 + $0x3c] sm:$0xf]
    %v4260 = vunpack.c.l.b16 %v4228
    %v4261 = vunpack.c.l.b16 %v4229
    %v4262 = vunpack.c.l.b16 %v4230
    %v4263 = vunpack.c.l.b16 %v4231
    %v4264 = vunpack.c.l.b16 %v4232
    %v4265 = vunpack.c.l.b16 %v4233
    %v4266 = vunpack.c.l.b16 %v4234
    %v4267 = vunpack.c.l.b16 %v4235
    %v4268 = vunpack.c.l.b16 %v4236
    %v4269 = vunpack.c.l.b16 %v4237
    %v4270 = vunpack.c.l.b16 %v4238
    %v4271 = vunpack.c.l.b16 %v4239
    %v4272 = vunpack.c.l.b16 %v4240
    %v4273 = vunpack.c.l.b16 %v4241
    %v4274 = vunpack.c.l.b16 %v4242
    %v4275 = vunpack.c.l.b16 %v4243
    %v4276 = vpack.c.b16 %v4261, %v4260
    %v4277 = vpack.c.b16 %v4263, %v4262
    %v4278 = vpack.c.b16 %v4265, %v4264
    %v4279 = vpack.c.b16 %v4267, %v4266
    %v4280 = vpack.c.b16 %v4269, %v4268
    %v4281 = vpack.c.b16 %v4271, %v4270
    %v4282 = vpack.c.b16 %v4273, %v4272
    %v4283 = vpack.c.b16 %v4275, %v4274
    %4292 = vmatpush.bf16.msra.mxu0 %v4283
    %4293 = vmatpush.bf16.msra.mxu0 %v4282
    %4294 = vmatpush.bf16.msra.mxu0 %v4281
    %4295 = vmatpush.bf16.msra.mxu0 %v4280
    %4296 = vmatpush.bf16.msra.mxu0 %v4279
    %4297 = vmatpush.bf16.msra.mxu0 %v4278
    %4298 = vmatpush.bf16.msra.mxu0 %v4277
    %4299 = vmatpush.bf16.msra.mxu0 %v4276
    %4300 = vmatmul.bf16.gmra.mxu0 %v4136
    %v4301 = vpop.f32.mrf.mxu0
    %v4302 = vadd.f32 0.0, %v4301
    %v4303 = vpop.f32.mrf.mxu0
    %v4304 = vadd.f32 0.0, %v4303
    %4305 = vmatmul.bf16.gmra.mxu0 %v4137
    %v4306 = vpop.f32.mrf.mxu0
    %v4307 = vadd.f32 0.0, %v4306
    %v4308 = vpop.f32.mrf.mxu0
    %v4309 = vadd.f32 0.0, %v4308
    %4310 = vmatmul.bf16.gmra.mxu0 %v4138
    %v4311 = vpop.f32.mrf.mxu0
    %v4312 = vadd.f32 0.0, %v4311
    %v4313 = vpop.f32.mrf.mxu0
    %4314 = vdwg.mxu0
    %s4315 = scalar_lea.vmem [#allocation5], 1472
    %v4316 = vld [vmem:[%s4315] sm:$0xf]
    %v4317 = vld [vmem:[%s4315 + $0x4] sm:$0xf]
    %v4318 = vld [vmem:[%s4315 + $0x8] sm:$0xf]
    %v4319 = vld [vmem:[%s4315 + $0xc] sm:$0xf]
    %v4320 = vld [vmem:[%s4315 + $0x10] sm:$0xf]
    %v4321 = vld [vmem:[%s4315 + $0x14] sm:$0xf]
    %v4322 = vld [vmem:[%s4315 + $0x18] sm:$0xf]
    %v4323 = vld [vmem:[%s4315 + $0x1c] sm:$0xf]
    %v4324 = vld [vmem:[%s4315 + $0x20] sm:$0xf]
    %v4325 = vld [vmem:[%s4315 + $0x24] sm:$0xf]
    %v4326 = vld [vmem:[%s4315 + $0x28] sm:$0xf]
    %v4327 = vld [vmem:[%s4315 + $0x2c] sm:$0xf]
    %v4328 = vld [vmem:[%s4315 + $0x30] sm:$0xf]
    %v4329 = vld [vmem:[%s4315 + $0x34] sm:$0xf]
    %v4330 = vld [vmem:[%s4315 + $0x38] sm:$0xf]
    %v4331 = vld [vmem:[%s4315 + $0x3c] sm:$0xf]
    %v4348 = vunpack.c.l.b16 %v4316
    %v4349 = vunpack.c.l.b16 %v4317
    %v4350 = vunpack.c.l.b16 %v4318
    %v4351 = vunpack.c.l.b16 %v4319
    %v4352 = vunpack.c.l.b16 %v4320
    %v4353 = vunpack.c.l.b16 %v4321
    %v4354 = vunpack.c.l.b16 %v4322
    %v4355 = vunpack.c.l.b16 %v4323
    %v4356 = vunpack.c.l.b16 %v4324
    %v4357 = vunpack.c.l.b16 %v4325
    %v4358 = vunpack.c.l.b16 %v4326
    %v4359 = vunpack.c.l.b16 %v4327
    %v4360 = vunpack.c.l.b16 %v4328
    %v4361 = vunpack.c.l.b16 %v4329
    %v4362 = vunpack.c.l.b16 %v4330
    %v4363 = vunpack.c.l.b16 %v4331
    %v4364 = vpack.c.b16 %v4349, %v4348
    %v4365 = vpack.c.b16 %v4351, %v4350
    %v4366 = vpack.c.b16 %v4353, %v4352
    %v4367 = vpack.c.b16 %v4355, %v4354
    %v4368 = vpack.c.b16 %v4357, %v4356
    %v4369 = vpack.c.b16 %v4359, %v4358
    %v4370 = vpack.c.b16 %v4361, %v4360
    %v4371 = vpack.c.b16 %v4363, %v4362
    %4380 = vmatpush.bf16.msra.mxu0 %v4371
    %4381 = vmatpush.bf16.msra.mxu0 %v4370
    %4382 = vmatpush.bf16.msra.mxu0 %v4369
    %4383 = vmatpush.bf16.msra.mxu0 %v4368
    %4384 = vmatpush.bf16.msra.mxu0 %v4367
    %4385 = vmatpush.bf16.msra.mxu0 %v4366
    %4386 = vmatpush.bf16.msra.mxu0 %v4365
    %4387 = vmatpush.bf16.msra.mxu0 %v4364
    %4388 = vmatmul.bf16.gmra.mxu0 %v4136
    %v4389 = vpop.f32.mrf.mxu0
    %v4390 = vadd.f32 0.0, %v4389
    %v4391 = vpop.f32.mrf.mxu0
    %v4392 = vadd.f32 0.0, %v4391
    %4393 = vmatmul.bf16.gmra.mxu0 %v4137
    %v4394 = vpop.f32.mrf.mxu0
    %v4395 = vadd.f32 0.0, %v4394
    %v4396 = vpop.f32.mrf.mxu0
    %v4397 = vadd.f32 0.0, %v4396
    %4398 = vmatmul.bf16.gmra.mxu0 %v4138
    %v4399 = vpop.f32.mrf.mxu0
    %v4400 = vadd.f32 0.0, %v4399
    %v4401 = vpop.f32.mrf.mxu0
    %4402 = vdwg.mxu0
    %v4403 = vrot.slane %v4214, 7
    %v4404 = vrot.slane %v4216, 7
    %v4405 = vrot.slane %v4219, 7
    %v4406 = vrot.slane %v4221, 7
    %v4407 = vrot.slane %v4224, 7
    %v4408 = vsel %vm574, %v4406, %v4407
    %v4409 = vsel %vm574, %v4405, %v4406
    %v4410 = vsel %vm574, %v4404, %v4405
    %v4411 = vsel %vm574, %v4403, %v4404
    %v4412 = vsel %vm574, %v4407, %v4403
    %v4413 = vmul.f32 %v4412, %v3945
    %v4414 = vmul.f32 %v4411, %v3950
    %v4415 = vmul.f32 %v4410, %v3955
    %v4416 = vmul.f32 %v4409, %v3960
    %v4417 = vmul.f32 %v4408, %v3965
    %v4418 = vrot.slane %v4390, 1
    %v4419 = vrot.slane %v4392, 1
    %v4420 = vrot.slane %v4395, 1
    %v4421 = vrot.slane %v4397, 1
    %v4422 = vrot.slane %v4400, 1
    %v4423 = vsel %vm755, %v4421, %v4422
    %v4424 = vsel %vm755, %v4420, %v4421
    %v4425 = vsel %vm755, %v4419, %v4420
    %v4426 = vsel %vm755, %v4418, %v4419
    %v4427 = vsel %vm755, %v4422, %v4418
    %v4428 = vmul.f32 %v4426, %v3991
    %v4429 = vmul.f32 %v4425, %v3996
    %v4430 = vmul.f32 %v4424, %v4001
    %v4431 = vmul.f32 %v4423, %v4006
    %v4432 = vmul.f32 %v4427, %v4011
    %v4433 = vadd.f32 %v4413, %v4302
    %v4434 = vadd.f32 %v4414, %v4304
    %v4435 = vadd.f32 %v4415, %v4307
    %v4436 = vadd.f32 %v4416, %v4309
    %v4437 = vadd.f32 %v4417, %v4312
    %v4438 = vadd.f32 %v4433, %v4428
    %v4439 = vadd.f32 %v4434, %v4429
    %v4440 = vadd.f32 %v4435, %v4430
    %v4441 = vadd.f32 %v4436, %v4431
    %v4442 = vadd.f32 %v4437, %v4432
    %v4443 = vperm.slane %v150, 1
    %v4444 = vadd.f32 %v4438, %v4443
    %v4445 = vadd.f32 %v4439, %v4443
    %v4446 = vadd.f32 %v4440, %v4443
    %v4447 = vadd.f32 %v4441, %v4443
    %v4448 = vadd.f32 %v4442, %v4443
    %v4449 = vmax.f32 %v4444, 0.0
    %v4450 = vmax.f32 %v4445, 0.0
    %v4451 = vmax.f32 %v4446, 0.0
    %v4452 = vmax.f32 %v4447, 0.0
    %v4453 = vmax.f32 %v4448, 0.0
    %v4454 = vpack.c.bf16 %v4450, %v4449
    %v4455 = vpack.c.bf16 %v4452, %v4451
    %v4456 = vpack.c.bf16 %v4453, %v4453
    %s4457 = scalar_lea.vmem [#allocation5], 1536
    %v4458 = vld [vmem:[%s4457] sm:$0xf]
    %v4459 = vld [vmem:[%s4457 + $0x4] sm:$0xf]
    %v4460 = vld [vmem:[%s4457 + $0x8] sm:$0xf]
    %v4461 = vld [vmem:[%s4457 + $0xc] sm:$0xf]
    %v4462 = vld [vmem:[%s4457 + $0x10] sm:$0xf]
    %v4463 = vld [vmem:[%s4457 + $0x14] sm:$0xf]
    %v4464 = vld [vmem:[%s4457 + $0x18] sm:$0xf]
    %v4465 = vld [vmem:[%s4457 + $0x1c] sm:$0xf]
    %v4466 = vld [vmem:[%s4457 + $0x20] sm:$0xf]
    %v4467 = vld [vmem:[%s4457 + $0x24] sm:$0xf]
    %v4468 = vld [vmem:[%s4457 + $0x28] sm:$0xf]
    %v4469 = vld [vmem:[%s4457 + $0x2c] sm:$0xf]
    %v4470 = vld [vmem:[%s4457 + $0x30] sm:$0xf]
    %v4471 = vld [vmem:[%s4457 + $0x34] sm:$0xf]
    %v4472 = vld [vmem:[%s4457 + $0x38] sm:$0xf]
    %v4473 = vld [vmem:[%s4457 + $0x3c] sm:$0xf]
    %v4490 = vunpack.c.l.b16 %v4458
    %v4491 = vunpack.c.l.b16 %v4459
    %v4492 = vunpack.c.l.b16 %v4460
    %v4493 = vunpack.c.l.b16 %v4461
    %v4494 = vunpack.c.l.b16 %v4462
    %v4495 = vunpack.c.l.b16 %v4463
    %v4496 = vunpack.c.l.b16 %v4464
    %v4497 = vunpack.c.l.b16 %v4465
    %v4498 = vunpack.c.l.b16 %v4466
    %v4499 = vunpack.c.l.b16 %v4467
    %v4500 = vunpack.c.l.b16 %v4468
    %v4501 = vunpack.c.l.b16 %v4469
    %v4502 = vunpack.c.l.b16 %v4470
    %v4503 = vunpack.c.l.b16 %v4471
    %v4504 = vunpack.c.l.b16 %v4472
    %v4505 = vunpack.c.l.b16 %v4473
    %v4506 = vpack.c.b16 %v4491, %v4490
    %v4507 = vpack.c.b16 %v4493, %v4492
    %v4508 = vpack.c.b16 %v4495, %v4494
    %v4509 = vpack.c.b16 %v4497, %v4496
    %v4510 = vpack.c.b16 %v4499, %v4498
    %v4511 = vpack.c.b16 %v4501, %v4500
    %v4512 = vpack.c.b16 %v4503, %v4502
    %v4513 = vpack.c.b16 %v4505, %v4504
    %4522 = vmatpush.bf16.msra.mxu0 %v4513
    %4523 = vmatpush.bf16.msra.mxu0 %v4512
    %4524 = vmatpush.bf16.msra.mxu0 %v4511
    %4525 = vmatpush.bf16.msra.mxu0 %v4510
    %4526 = vmatpush.bf16.msra.mxu0 %v4509
    %4527 = vmatpush.bf16.msra.mxu0 %v4508
    %4528 = vmatpush.bf16.msra.mxu0 %v4507
    %4529 = vmatpush.bf16.msra.mxu0 %v4506
    %4530 = vmatmul.bf16.gmra.mxu0 %v4454
    %v4531 = vpop.f32.mrf.mxu0
    %v4532 = vadd.f32 0.0, %v4531
    %v4533 = vpop.f32.mrf.mxu0
    %v4534 = vadd.f32 0.0, %v4533
    %4535 = vmatmul.bf16.gmra.mxu0 %v4455
    %v4536 = vpop.f32.mrf.mxu0
    %v4537 = vadd.f32 0.0, %v4536
    %v4538 = vpop.f32.mrf.mxu0
    %v4539 = vadd.f32 0.0, %v4538
    %4540 = vmatmul.bf16.gmra.mxu0 %v4456
    %v4541 = vpop.f32.mrf.mxu0
    %v4542 = vadd.f32 0.0, %v4541
    %v4543 = vpop.f32.mrf.mxu0
    %4544 = vdwg.mxu0
    %s4545 = scalar_lea.vmem [#allocation5], 1600
    %v4546 = vld [vmem:[%s4545] sm:$0xf]
    %v4547 = vld [vmem:[%s4545 + $0x4] sm:$0xf]
    %v4548 = vld [vmem:[%s4545 + $0x8] sm:$0xf]
    %v4549 = vld [vmem:[%s4545 + $0xc] sm:$0xf]
    %v4550 = vld [vmem:[%s4545 + $0x10] sm:$0xf]
    %v4551 = vld [vmem:[%s4545 + $0x14] sm:$0xf]
    %v4552 = vld [vmem:[%s4545 + $0x18] sm:$0xf]
    %v4553 = vld [vmem:[%s4545 + $0x1c] sm:$0xf]
    %v4554 = vld [vmem:[%s4545 + $0x20] sm:$0xf]
    %v4555 = vld [vmem:[%s4545 + $0x24] sm:$0xf]
    %v4556 = vld [vmem:[%s4545 + $0x28] sm:$0xf]
    %v4557 = vld [vmem:[%s4545 + $0x2c] sm:$0xf]
    %v4558 = vld [vmem:[%s4545 + $0x30] sm:$0xf]
    %v4559 = vld [vmem:[%s4545 + $0x34] sm:$0xf]
    %v4560 = vld [vmem:[%s4545 + $0x38] sm:$0xf]
    %v4561 = vld [vmem:[%s4545 + $0x3c] sm:$0xf]
    %v4578 = vunpack.c.l.b16 %v4546
    %v4579 = vunpack.c.l.b16 %v4547
    %v4580 = vunpack.c.l.b16 %v4548
    %v4581 = vunpack.c.l.b16 %v4549
    %v4582 = vunpack.c.l.b16 %v4550
    %v4583 = vunpack.c.l.b16 %v4551
    %v4584 = vunpack.c.l.b16 %v4552
    %v4585 = vunpack.c.l.b16 %v4553
    %v4586 = vunpack.c.l.b16 %v4554
    %v4587 = vunpack.c.l.b16 %v4555
    %v4588 = vunpack.c.l.b16 %v4556
    %v4589 = vunpack.c.l.b16 %v4557
    %v4590 = vunpack.c.l.b16 %v4558
    %v4591 = vunpack.c.l.b16 %v4559
    %v4592 = vunpack.c.l.b16 %v4560
    %v4593 = vunpack.c.l.b16 %v4561
    %v4594 = vpack.c.b16 %v4579, %v4578
    %v4595 = vpack.c.b16 %v4581, %v4580
    %v4596 = vpack.c.b16 %v4583, %v4582
    %v4597 = vpack.c.b16 %v4585, %v4584
    %v4598 = vpack.c.b16 %v4587, %v4586
    %v4599 = vpack.c.b16 %v4589, %v4588
    %v4600 = vpack.c.b16 %v4591, %v4590
    %v4601 = vpack.c.b16 %v4593, %v4592
    %4610 = vmatpush.bf16.msra.mxu0 %v4601
    %4611 = vmatpush.bf16.msra.mxu0 %v4600
    %4612 = vmatpush.bf16.msra.mxu0 %v4599
    %4613 = vmatpush.bf16.msra.mxu0 %v4598
    %4614 = vmatpush.bf16.msra.mxu0 %v4597
    %4615 = vmatpush.bf16.msra.mxu0 %v4596
    %4616 = vmatpush.bf16.msra.mxu0 %v4595
    %4617 = vmatpush.bf16.msra.mxu0 %v4594
    %4618 = vmatmul.bf16.gmra.mxu0 %v4454
    %v4619 = vpop.f32.mrf.mxu0
    %v4620 = vadd.f32 0.0, %v4619
    %v4621 = vpop.f32.mrf.mxu0
    %v4622 = vadd.f32 0.0, %v4621
    %4623 = vmatmul.bf16.gmra.mxu0 %v4455
    %v4624 = vpop.f32.mrf.mxu0
    %v4625 = vadd.f32 0.0, %v4624
    %v4626 = vpop.f32.mrf.mxu0
    %v4627 = vadd.f32 0.0, %v4626
    %4628 = vmatmul.bf16.gmra.mxu0 %v4456
    %v4629 = vpop.f32.mrf.mxu0
    %v4630 = vadd.f32 0.0, %v4629
    %v4631 = vpop.f32.mrf.mxu0
    %4632 = vdwg.mxu0
    %s4633 = scalar_lea.vmem [#allocation5], 1664
    %v4634 = vld [vmem:[%s4633] sm:$0xf]
    %v4635 = vld [vmem:[%s4633 + $0x4] sm:$0xf]
    %v4636 = vld [vmem:[%s4633 + $0x8] sm:$0xf]
    %v4637 = vld [vmem:[%s4633 + $0xc] sm:$0xf]
    %v4638 = vld [vmem:[%s4633 + $0x10] sm:$0xf]
    %v4639 = vld [vmem:[%s4633 + $0x14] sm:$0xf]
    %v4640 = vld [vmem:[%s4633 + $0x18] sm:$0xf]
    %v4641 = vld [vmem:[%s4633 + $0x1c] sm:$0xf]
    %v4642 = vld [vmem:[%s4633 + $0x20] sm:$0xf]
    %v4643 = vld [vmem:[%s4633 + $0x24] sm:$0xf]
    %v4644 = vld [vmem:[%s4633 + $0x28] sm:$0xf]
    %v4645 = vld [vmem:[%s4633 + $0x2c] sm:$0xf]
    %v4646 = vld [vmem:[%s4633 + $0x30] sm:$0xf]
    %v4647 = vld [vmem:[%s4633 + $0x34] sm:$0xf]
    %v4648 = vld [vmem:[%s4633 + $0x38] sm:$0xf]
    %v4649 = vld [vmem:[%s4633 + $0x3c] sm:$0xf]
    %v4666 = vunpack.c.l.b16 %v4634
    %v4667 = vunpack.c.l.b16 %v4635
    %v4668 = vunpack.c.l.b16 %v4636
    %v4669 = vunpack.c.l.b16 %v4637
    %v4670 = vunpack.c.l.b16 %v4638
    %v4671 = vunpack.c.l.b16 %v4639
    %v4672 = vunpack.c.l.b16 %v4640
    %v4673 = vunpack.c.l.b16 %v4641
    %v4674 = vunpack.c.l.b16 %v4642
    %v4675 = vunpack.c.l.b16 %v4643
    %v4676 = vunpack.c.l.b16 %v4644
    %v4677 = vunpack.c.l.b16 %v4645
    %v4678 = vunpack.c.l.b16 %v4646
    %v4679 = vunpack.c.l.b16 %v4647
    %v4680 = vunpack.c.l.b16 %v4648
    %v4681 = vunpack.c.l.b16 %v4649
    %v4682 = vpack.c.b16 %v4667, %v4666
    %v4683 = vpack.c.b16 %v4669, %v4668
    %v4684 = vpack.c.b16 %v4671, %v4670
    %v4685 = vpack.c.b16 %v4673, %v4672
    %v4686 = vpack.c.b16 %v4675, %v4674
    %v4687 = vpack.c.b16 %v4677, %v4676
    %v4688 = vpack.c.b16 %v4679, %v4678
    %v4689 = vpack.c.b16 %v4681, %v4680
    %4698 = vmatpush.bf16.msra.mxu0 %v4689
    %4699 = vmatpush.bf16.msra.mxu0 %v4688
    %4700 = vmatpush.bf16.msra.mxu0 %v4687
    %4701 = vmatpush.bf16.msra.mxu0 %v4686
    %4702 = vmatpush.bf16.msra.mxu0 %v4685
    %4703 = vmatpush.bf16.msra.mxu0 %v4684
    %4704 = vmatpush.bf16.msra.mxu0 %v4683
    %4705 = vmatpush.bf16.msra.mxu0 %v4682
    %4706 = vmatmul.bf16.gmra.mxu0 %v4454
    %v4707 = vpop.f32.mrf.mxu0
    %v4708 = vadd.f32 0.0, %v4707
    %v4709 = vpop.f32.mrf.mxu0
    %v4710 = vadd.f32 0.0, %v4709
    %4711 = vmatmul.bf16.gmra.mxu0 %v4455
    %v4712 = vpop.f32.mrf.mxu0
    %v4713 = vadd.f32 0.0, %v4712
    %v4714 = vpop.f32.mrf.mxu0
    %v4715 = vadd.f32 0.0, %v4714
    %4716 = vmatmul.bf16.gmra.mxu0 %v4456
    %v4717 = vpop.f32.mrf.mxu0
    %v4718 = vadd.f32 0.0, %v4717
    %v4719 = vpop.f32.mrf.mxu0
    %4720 = vdwg.mxu0
    %v4721 = vrot.slane %v4532, 7
    %v4722 = vrot.slane %v4534, 7
    %v4723 = vrot.slane %v4537, 7
    %v4724 = vrot.slane %v4539, 7
    %v4725 = vrot.slane %v4542, 7
    %v4726 = vsel %vm574, %v4724, %v4725
    %v4727 = vsel %vm574, %v4723, %v4724
    %v4728 = vsel %vm574, %v4722, %v4723
    %v4729 = vsel %vm574, %v4721, %v4722
    %v4730 = vsel %vm574, %v4725, %v4721
    %v4731 = vmul.f32 %v4730, %v3945
    %v4732 = vmul.f32 %v4729, %v3950
    %v4733 = vmul.f32 %v4728, %v3955
    %v4734 = vmul.f32 %v4727, %v3960
    %v4735 = vmul.f32 %v4726, %v3965
    %v4736 = vrot.slane %v4708, 1
    %v4737 = vrot.slane %v4710, 1
    %v4738 = vrot.slane %v4713, 1
    %v4739 = vrot.slane %v4715, 1
    %v4740 = vrot.slane %v4718, 1
    %v4741 = vsel %vm755, %v4739, %v4740
    %v4742 = vsel %vm755, %v4738, %v4739
    %v4743 = vsel %vm755, %v4737, %v4738
    %v4744 = vsel %vm755, %v4736, %v4737
    %v4745 = vsel %vm755, %v4740, %v4736
    %v4746 = vmul.f32 %v4744, %v3991
    %v4747 = vmul.f32 %v4743, %v3996
    %v4748 = vmul.f32 %v4742, %v4001
    %v4749 = vmul.f32 %v4741, %v4006
    %v4750 = vmul.f32 %v4745, %v4011
    %v4751 = vadd.f32 %v4731, %v4620
    %v4752 = vadd.f32 %v4732, %v4622
    %v4753 = vadd.f32 %v4733, %v4625
    %v4754 = vadd.f32 %v4734, %v4627
    %v4755 = vadd.f32 %v4735, %v4630
    %v4756 = vadd.f32 %v4751, %v4746
    %v4757 = vadd.f32 %v4752, %v4747
    %v4758 = vadd.f32 %v4753, %v4748
    %v4759 = vadd.f32 %v4754, %v4749
    %v4760 = vadd.f32 %v4755, %v4750
    %v4761 = vperm.slane %v150, 2
    %v4762 = vadd.f32 %v4756, %v4761
    %v4763 = vadd.f32 %v4757, %v4761
    %v4764 = vadd.f32 %v4758, %v4761
    %v4765 = vadd.f32 %v4759, %v4761
    %v4766 = vadd.f32 %v4760, %v4761
    %s4767 = scalar_lea.vmem [#allocation5], 1728
    %v4768 = vld [vmem:[%s4767] sm:$0xf]
    %v4769 = vld [vmem:[%s4767 + $0x4] sm:$0xf]
    %v4770 = vld [vmem:[%s4767 + $0x8] sm:$0xf]
    %v4771 = vld [vmem:[%s4767 + $0xc] sm:$0xf]
    %v4772 = vld [vmem:[%s4767 + $0x10] sm:$0xf]
    %v4773 = vld [vmem:[%s4767 + $0x14] sm:$0xf]
    %v4774 = vld [vmem:[%s4767 + $0x18] sm:$0xf]
    %v4775 = vld [vmem:[%s4767 + $0x1c] sm:$0xf]
    %v4776 = vld [vmem:[%s4767 + $0x20] sm:$0xf]
    %v4777 = vld [vmem:[%s4767 + $0x24] sm:$0xf]
    %v4778 = vld [vmem:[%s4767 + $0x28] sm:$0xf]
    %v4779 = vld [vmem:[%s4767 + $0x2c] sm:$0xf]
    %v4780 = vld [vmem:[%s4767 + $0x30] sm:$0xf]
    %v4781 = vld [vmem:[%s4767 + $0x34] sm:$0xf]
    %v4782 = vld [vmem:[%s4767 + $0x38] sm:$0xf]
    %v4783 = vld [vmem:[%s4767 + $0x3c] sm:$0xf]
    %v4784 = vperm.slane %v150, 3
    %v4801 = vunpack.c.l.b16 %v4768
    %v4802 = vunpack.c.l.b16 %v4769
    %v4803 = vunpack.c.l.b16 %v4770
    %v4804 = vunpack.c.l.b16 %v4771
    %v4805 = vunpack.c.l.b16 %v4772
    %v4806 = vunpack.c.l.b16 %v4773
    %v4807 = vunpack.c.l.b16 %v4774
    %v4808 = vunpack.c.l.b16 %v4775
    %v4809 = vunpack.c.l.b16 %v4776
    %v4810 = vunpack.c.l.b16 %v4777
    %v4811 = vunpack.c.l.b16 %v4778
    %v4812 = vunpack.c.l.b16 %v4779
    %v4813 = vunpack.c.l.b16 %v4780
    %v4814 = vunpack.c.l.b16 %v4781
    %v4815 = vunpack.c.l.b16 %v4782
    %v4816 = vunpack.c.l.b16 %v4783
    %v4817 = vpack.c.b16 %v4802, %v4801
    %v4818 = vpack.c.b16 %v4804, %v4803
    %v4819 = vpack.c.b16 %v4806, %v4805
    %v4820 = vpack.c.b16 %v4808, %v4807
    %v4821 = vpack.c.b16 %v4810, %v4809
    %v4822 = vpack.c.b16 %v4812, %v4811
    %v4823 = vpack.c.b16 %v4814, %v4813
    %v4824 = vpack.c.b16 %v4816, %v4815
    %4833 = vmatpush.bf16.msra.mxu0 %v4824
    %4834 = vmatpush.bf16.msra.mxu0 %v4823
    %4835 = vmatpush.bf16.msra.mxu0 %v4822
    %4836 = vmatpush.bf16.msra.mxu0 %v4821
    %4837 = vmatpush.bf16.msra.mxu0 %v4820
    %4838 = vmatpush.bf16.msra.mxu0 %v4819
    %4839 = vmatpush.bf16.msra.mxu0 %v4818
    %4840 = vmatpush.bf16.msra.mxu0 %v4817
    %4841 = vmatmul.bf16.gmra.mxu0 %v4136
    %v4842 = vpop.f32.mrf.mxu0
    %v4843 = vadd.f32 %v4784, %v4842
    %v4844 = vpop.f32.mrf.mxu0
    %v4845 = vadd.f32 %v4784, %v4844
    %4846 = vmatmul.bf16.gmra.mxu0 %v4137
    %v4847 = vpop.f32.mrf.mxu0
    %v4848 = vadd.f32 %v4784, %v4847
    %v4849 = vpop.f32.mrf.mxu0
    %v4850 = vadd.f32 %v4784, %v4849
    %4851 = vmatmul.bf16.gmra.mxu0 %v4138
    %v4852 = vpop.f32.mrf.mxu0
    %v4853 = vadd.f32 %v4784, %v4852
    %v4854 = vpop.f32.mrf.mxu0
    %4855 = vdwg.mxu0
    %v4856 = vadd.f32 %v4762, %v4843
    %v4857 = vadd.f32 %v4763, %v4845
    %v4858 = vadd.f32 %v4764, %v4848
    %v4859 = vadd.f32 %v4765, %v4850
    %v4860 = vadd.f32 %v4766, %v4853
    %v4861 = vmax.f32 %v4856, 0.0
    %v4862 = vmax.f32 %v4857, 0.0
    %v4863 = vmax.f32 %v4858, 0.0
    %v4864 = vmax.f32 %v4859, 0.0
    %v4865 = vmax.f32 %v4860, 0.0
    %v4866 = vpack.c.bf16 %v4862, %v4861
    %v4867 = vpack.c.bf16 %v4864, %v4863
    %v4868 = vpack.c.bf16 %v4865, %v4865
    %s4869 = scalar_lea.vmem [#allocation5], 1792
    %v4870 = vld [vmem:[%s4869] sm:$0xf]
    %v4871 = vld [vmem:[%s4869 + $0x4] sm:$0xf]
    %v4872 = vld [vmem:[%s4869 + $0x8] sm:$0xf]
    %v4873 = vld [vmem:[%s4869 + $0xc] sm:$0xf]
    %v4874 = vld [vmem:[%s4869 + $0x10] sm:$0xf]
    %v4875 = vld [vmem:[%s4869 + $0x14] sm:$0xf]
    %v4876 = vld [vmem:[%s4869 + $0x18] sm:$0xf]
    %v4877 = vld [vmem:[%s4869 + $0x1c] sm:$0xf]
    %v4878 = vld [vmem:[%s4869 + $0x20] sm:$0xf]
    %v4879 = vld [vmem:[%s4869 + $0x24] sm:$0xf]
    %v4880 = vld [vmem:[%s4869 + $0x28] sm:$0xf]
    %v4881 = vld [vmem:[%s4869 + $0x2c] sm:$0xf]
    %v4882 = vld [vmem:[%s4869 + $0x30] sm:$0xf]
    %v4883 = vld [vmem:[%s4869 + $0x34] sm:$0xf]
    %v4884 = vld [vmem:[%s4869 + $0x38] sm:$0xf]
    %v4885 = vld [vmem:[%s4869 + $0x3c] sm:$0xf]
    %v4902 = vunpack.c.l.b16 %v4870
    %v4903 = vunpack.c.l.b16 %v4871
    %v4904 = vunpack.c.l.b16 %v4872
    %v4905 = vunpack.c.l.b16 %v4873
    %v4906 = vunpack.c.l.b16 %v4874
    %v4907 = vunpack.c.l.b16 %v4875
    %v4908 = vunpack.c.l.b16 %v4876
    %v4909 = vunpack.c.l.b16 %v4877
    %v4910 = vunpack.c.l.b16 %v4878
    %v4911 = vunpack.c.l.b16 %v4879
    %v4912 = vunpack.c.l.b16 %v4880
    %v4913 = vunpack.c.l.b16 %v4881
    %v4914 = vunpack.c.l.b16 %v4882
    %v4915 = vunpack.c.l.b16 %v4883
    %v4916 = vunpack.c.l.b16 %v4884
    %v4917 = vunpack.c.l.b16 %v4885
    %v4918 = vpack.c.b16 %v4903, %v4902
    %v4919 = vpack.c.b16 %v4905, %v4904
    %v4920 = vpack.c.b16 %v4907, %v4906
    %v4921 = vpack.c.b16 %v4909, %v4908
    %v4922 = vpack.c.b16 %v4911, %v4910
    %v4923 = vpack.c.b16 %v4913, %v4912
    %v4924 = vpack.c.b16 %v4915, %v4914
    %v4925 = vpack.c.b16 %v4917, %v4916
    %4934 = vmatpush.bf16.msra.mxu0 %v4925
    %4935 = vmatpush.bf16.msra.mxu0 %v4924
    %4936 = vmatpush.bf16.msra.mxu0 %v4923
    %4937 = vmatpush.bf16.msra.mxu0 %v4922
    %4938 = vmatpush.bf16.msra.mxu0 %v4921
    %4939 = vmatpush.bf16.msra.mxu0 %v4920
    %4940 = vmatpush.bf16.msra.mxu0 %v4919
    %4941 = vmatpush.bf16.msra.mxu0 %v4918
    %4942 = vmatmul.bf16.gmra.mxu0 %v4866
    %v4943 = vpop.f32.mrf.mxu0
    %v4944 = vadd.f32 0.0, %v4943
    %v4945 = vpop.f32.mrf.mxu0
    %v4946 = vadd.f32 0.0, %v4945
    %4947 = vmatmul.bf16.gmra.mxu0 %v4867
    %v4948 = vpop.f32.mrf.mxu0
    %v4949 = vadd.f32 0.0, %v4948
    %v4950 = vpop.f32.mrf.mxu0
    %v4951 = vadd.f32 0.0, %v4950
    %4952 = vmatmul.bf16.gmra.mxu0 %v4868
    %v4953 = vpop.f32.mrf.mxu0
    %v4954 = vadd.f32 0.0, %v4953
    %v4955 = vpop.f32.mrf.mxu0
    %4956 = vdwg.mxu0
    %s4957 = scalar_lea.vmem [#allocation5], 1856
    %v4958 = vld [vmem:[%s4957] sm:$0xf]
    %v4959 = vld [vmem:[%s4957 + $0x4] sm:$0xf]
    %v4960 = vld [vmem:[%s4957 + $0x8] sm:$0xf]
    %v4961 = vld [vmem:[%s4957 + $0xc] sm:$0xf]
    %v4962 = vld [vmem:[%s4957 + $0x10] sm:$0xf]
    %v4963 = vld [vmem:[%s4957 + $0x14] sm:$0xf]
    %v4964 = vld [vmem:[%s4957 + $0x18] sm:$0xf]
    %v4965 = vld [vmem:[%s4957 + $0x1c] sm:$0xf]
    %v4966 = vld [vmem:[%s4957 + $0x20] sm:$0xf]
    %v4967 = vld [vmem:[%s4957 + $0x24] sm:$0xf]
    %v4968 = vld [vmem:[%s4957 + $0x28] sm:$0xf]
    %v4969 = vld [vmem:[%s4957 + $0x2c] sm:$0xf]
    %v4970 = vld [vmem:[%s4957 + $0x30] sm:$0xf]
    %v4971 = vld [vmem:[%s4957 + $0x34] sm:$0xf]
    %v4972 = vld [vmem:[%s4957 + $0x38] sm:$0xf]
    %v4973 = vld [vmem:[%s4957 + $0x3c] sm:$0xf]
    %v4990 = vunpack.c.l.b16 %v4958
    %v4991 = vunpack.c.l.b16 %v4959
    %v4992 = vunpack.c.l.b16 %v4960
    %v4993 = vunpack.c.l.b16 %v4961
    %v4994 = vunpack.c.l.b16 %v4962
    %v4995 = vunpack.c.l.b16 %v4963
    %v4996 = vunpack.c.l.b16 %v4964
    %v4997 = vunpack.c.l.b16 %v4965
    %v4998 = vunpack.c.l.b16 %v4966
    %v4999 = vunpack.c.l.b16 %v4967
    %v5000 = vunpack.c.l.b16 %v4968
    %v5001 = vunpack.c.l.b16 %v4969
    %v5002 = vunpack.c.l.b16 %v4970
    %v5003 = vunpack.c.l.b16 %v4971
    %v5004 = vunpack.c.l.b16 %v4972
    %v5005 = vunpack.c.l.b16 %v4973
    %v5006 = vpack.c.b16 %v4991, %v4990
    %v5007 = vpack.c.b16 %v4993, %v4992
    %v5008 = vpack.c.b16 %v4995, %v4994
    %v5009 = vpack.c.b16 %v4997, %v4996
    %v5010 = vpack.c.b16 %v4999, %v4998
    %v5011 = vpack.c.b16 %v5001, %v5000
    %v5012 = vpack.c.b16 %v5003, %v5002
    %v5013 = vpack.c.b16 %v5005, %v5004
    %5022 = vmatpush.bf16.msra.mxu0 %v5013
    %5023 = vmatpush.bf16.msra.mxu0 %v5012
    %5024 = vmatpush.bf16.msra.mxu0 %v5011
    %5025 = vmatpush.bf16.msra.mxu0 %v5010
    %5026 = vmatpush.bf16.msra.mxu0 %v5009
    %5027 = vmatpush.bf16.msra.mxu0 %v5008
    %5028 = vmatpush.bf16.msra.mxu0 %v5007
    %5029 = vmatpush.bf16.msra.mxu0 %v5006
    %5030 = vmatmul.bf16.gmra.mxu0 %v4866
    %v5031 = vpop.f32.mrf.mxu0
    %v5032 = vadd.f32 0.0, %v5031
    %v5033 = vpop.f32.mrf.mxu0
    %v5034 = vadd.f32 0.0, %v5033
    %5035 = vmatmul.bf16.gmra.mxu0 %v4867
    %v5036 = vpop.f32.mrf.mxu0
    %v5037 = vadd.f32 0.0, %v5036
    %v5038 = vpop.f32.mrf.mxu0
    %v5039 = vadd.f32 0.0, %v5038
    %5040 = vmatmul.bf16.gmra.mxu0 %v4868
    %v5041 = vpop.f32.mrf.mxu0
    %v5042 = vadd.f32 0.0, %v5041
    %v5043 = vpop.f32.mrf.mxu0
    %5044 = vdwg.mxu0
    %s5045 = scalar_lea.vmem [#allocation5], 1920
    %v5046 = vld [vmem:[%s5045] sm:$0xf]
    %v5047 = vld [vmem:[%s5045 + $0x4] sm:$0xf]
    %v5048 = vld [vmem:[%s5045 + $0x8] sm:$0xf]
    %v5049 = vld [vmem:[%s5045 + $0xc] sm:$0xf]
    %v5050 = vld [vmem:[%s5045 + $0x10] sm:$0xf]
    %v5051 = vld [vmem:[%s5045 + $0x14] sm:$0xf]
    %v5052 = vld [vmem:[%s5045 + $0x18] sm:$0xf]
    %v5053 = vld [vmem:[%s5045 + $0x1c] sm:$0xf]
    %v5054 = vld [vmem:[%s5045 + $0x20] sm:$0xf]
    %v5055 = vld [vmem:[%s5045 + $0x24] sm:$0xf]
    %v5056 = vld [vmem:[%s5045 + $0x28] sm:$0xf]
    %v5057 = vld [vmem:[%s5045 + $0x2c] sm:$0xf]
    %v5058 = vld [vmem:[%s5045 + $0x30] sm:$0xf]
    %v5059 = vld [vmem:[%s5045 + $0x34] sm:$0xf]
    %v5060 = vld [vmem:[%s5045 + $0x38] sm:$0xf]
    %v5061 = vld [vmem:[%s5045 + $0x3c] sm:$0xf]
    %v5078 = vunpack.c.l.b16 %v5046
    %v5079 = vunpack.c.l.b16 %v5047
    %v5080 = vunpack.c.l.b16 %v5048
    %v5081 = vunpack.c.l.b16 %v5049
    %v5082 = vunpack.c.l.b16 %v5050
    %v5083 = vunpack.c.l.b16 %v5051
    %v5084 = vunpack.c.l.b16 %v5052
    %v5085 = vunpack.c.l.b16 %v5053
    %v5086 = vunpack.c.l.b16 %v5054
    %v5087 = vunpack.c.l.b16 %v5055
    %v5088 = vunpack.c.l.b16 %v5056
    %v5089 = vunpack.c.l.b16 %v5057
    %v5090 = vunpack.c.l.b16 %v5058
    %v5091 = vunpack.c.l.b16 %v5059
    %v5092 = vunpack.c.l.b16 %v5060
    %v5093 = vunpack.c.l.b16 %v5061
    %v5094 = vpack.c.b16 %v5079, %v5078
    %v5095 = vpack.c.b16 %v5081, %v5080
    %v5096 = vpack.c.b16 %v5083, %v5082
    %v5097 = vpack.c.b16 %v5085, %v5084
    %v5098 = vpack.c.b16 %v5087, %v5086
    %v5099 = vpack.c.b16 %v5089, %v5088
    %v5100 = vpack.c.b16 %v5091, %v5090
    %v5101 = vpack.c.b16 %v5093, %v5092
    %5110 = vmatpush.bf16.msra.mxu0 %v5101
    %5111 = vmatpush.bf16.msra.mxu0 %v5100
    %5112 = vmatpush.bf16.msra.mxu0 %v5099
    %5113 = vmatpush.bf16.msra.mxu0 %v5098
    %5114 = vmatpush.bf16.msra.mxu0 %v5097
    %5115 = vmatpush.bf16.msra.mxu0 %v5096
    %5116 = vmatpush.bf16.msra.mxu0 %v5095
    %5117 = vmatpush.bf16.msra.mxu0 %v5094
    %5118 = vmatmul.bf16.gmra.mxu0 %v4866
    %v5119 = vpop.f32.mrf.mxu0
    %v5120 = vadd.f32 0.0, %v5119
    %v5121 = vpop.f32.mrf.mxu0
    %v5122 = vadd.f32 0.0, %v5121
    %5123 = vmatmul.bf16.gmra.mxu0 %v4867
    %v5124 = vpop.f32.mrf.mxu0
    %v5125 = vadd.f32 0.0, %v5124
    %v5126 = vpop.f32.mrf.mxu0
    %v5127 = vadd.f32 0.0, %v5126
    %5128 = vmatmul.bf16.gmra.mxu0 %v4868
    %v5129 = vpop.f32.mrf.mxu0
    %v5130 = vadd.f32 0.0, %v5129
    %v5131 = vpop.f32.mrf.mxu0
    %5132 = vdwg.mxu0
    %v5133 = vrot.slane %v4944, 7
    %v5134 = vrot.slane %v4946, 7
    %v5135 = vrot.slane %v4949, 7
    %v5136 = vrot.slane %v4951, 7
    %v5137 = vrot.slane %v4954, 7
    %v5138 = vsel %vm574, %v5136, %v5137
    %v5139 = vsel %vm574, %v5135, %v5136
    %v5140 = vsel %vm574, %v5134, %v5135
    %v5141 = vsel %vm574, %v5133, %v5134
    %v5142 = vsel %vm574, %v5137, %v5133
    %v5143 = vmul.f32 %v5142, %v3945
    %v5144 = vmul.f32 %v5141, %v3950
    %v5145 = vmul.f32 %v5140, %v3955
    %v5146 = vmul.f32 %v5139, %v3960
    %v5147 = vmul.f32 %v5138, %v3965
    %v5148 = vrot.slane %v5120, 1
    %v5149 = vrot.slane %v5122, 1
    %v5150 = vrot.slane %v5125, 1
    %v5151 = vrot.slane %v5127, 1
    %v5152 = vrot.slane %v5130, 1
    %v5153 = vsel %vm755, %v5151, %v5152
    %v5154 = vsel %vm755, %v5150, %v5151
    %v5155 = vsel %vm755, %v5149, %v5150
    %v5156 = vsel %vm755, %v5148, %v5149
    %v5157 = vsel %vm755, %v5152, %v5148
    %v5158 = vmul.f32 %v5156, %v3991
    %v5159 = vmul.f32 %v5155, %v3996
    %v5160 = vmul.f32 %v5154, %v4001
    %v5161 = vmul.f32 %v5153, %v4006
    %v5162 = vmul.f32 %v5157, %v4011
    %v5163 = vadd.f32 %v5143, %v5032
    %v5164 = vadd.f32 %v5144, %v5034
    %v5165 = vadd.f32 %v5145, %v5037
    %v5166 = vadd.f32 %v5146, %v5039
    %v5167 = vadd.f32 %v5147, %v5042
    %v5168 = vadd.f32 %v5163, %v5158
    %v5169 = vadd.f32 %v5164, %v5159
    %v5170 = vadd.f32 %v5165, %v5160
    %v5171 = vadd.f32 %v5166, %v5161
    %v5172 = vadd.f32 %v5167, %v5162
    %v5173 = vperm.slane %v150, 4
    %v5174 = vadd.f32 %v5168, %v5173
    %v5175 = vadd.f32 %v5169, %v5173
    %v5176 = vadd.f32 %v5170, %v5173
    %v5177 = vadd.f32 %v5171, %v5173
    %v5178 = vadd.f32 %v5172, %v5173
    %v5179 = vmax.f32 %v5174, 0.0
    %v5180 = vmax.f32 %v5175, 0.0
    %v5181 = vmax.f32 %v5176, 0.0
    %v5182 = vmax.f32 %v5177, 0.0
    %v5183 = vmax.f32 %v5178, 0.0
    %v5184 = vpack.c.bf16 %v5180, %v5179
    %v5185 = vpack.c.bf16 %v5182, %v5181
    %v5186 = vpack.c.bf16 %v5183, %v5183
    %s5187 = scalar_lea.vmem [#allocation5], 1984
    %v5188 = vld [vmem:[%s5187] sm:$0xf]
    %v5189 = vld [vmem:[%s5187 + $0x4] sm:$0xf]
    %v5190 = vld [vmem:[%s5187 + $0x8] sm:$0xf]
    %v5191 = vld [vmem:[%s5187 + $0xc] sm:$0xf]
    %v5192 = vld [vmem:[%s5187 + $0x10] sm:$0xf]
    %v5193 = vld [vmem:[%s5187 + $0x14] sm:$0xf]
    %v5194 = vld [vmem:[%s5187 + $0x18] sm:$0xf]
    %v5195 = vld [vmem:[%s5187 + $0x1c] sm:$0xf]
    %v5196 = vld [vmem:[%s5187 + $0x20] sm:$0xf]
    %v5197 = vld [vmem:[%s5187 + $0x24] sm:$0xf]
    %v5198 = vld [vmem:[%s5187 + $0x28] sm:$0xf]
    %v5199 = vld [vmem:[%s5187 + $0x2c] sm:$0xf]
    %v5200 = vld [vmem:[%s5187 + $0x30] sm:$0xf]
    %v5201 = vld [vmem:[%s5187 + $0x34] sm:$0xf]
    %v5202 = vld [vmem:[%s5187 + $0x38] sm:$0xf]
    %v5203 = vld [vmem:[%s5187 + $0x3c] sm:$0xf]
    %v5220 = vunpack.c.l.b16 %v5188
    %v5221 = vunpack.c.l.b16 %v5189
    %v5222 = vunpack.c.l.b16 %v5190
    %v5223 = vunpack.c.l.b16 %v5191
    %v5224 = vunpack.c.l.b16 %v5192
    %v5225 = vunpack.c.l.b16 %v5193
    %v5226 = vunpack.c.l.b16 %v5194
    %v5227 = vunpack.c.l.b16 %v5195
    %v5228 = vunpack.c.l.b16 %v5196
    %v5229 = vunpack.c.l.b16 %v5197
    %v5230 = vunpack.c.l.b16 %v5198
    %v5231 = vunpack.c.l.b16 %v5199
    %v5232 = vunpack.c.l.b16 %v5200
    %v5233 = vunpack.c.l.b16 %v5201
    %v5234 = vunpack.c.l.b16 %v5202
    %v5235 = vunpack.c.l.b16 %v5203
    %v5236 = vpack.c.b16 %v5221, %v5220
    %v5237 = vpack.c.b16 %v5223, %v5222
    %v5238 = vpack.c.b16 %v5225, %v5224
    %v5239 = vpack.c.b16 %v5227, %v5226
    %v5240 = vpack.c.b16 %v5229, %v5228
    %v5241 = vpack.c.b16 %v5231, %v5230
    %v5242 = vpack.c.b16 %v5233, %v5232
    %v5243 = vpack.c.b16 %v5235, %v5234
    %5252 = vmatpush.bf16.msra.mxu0 %v5243
    %5253 = vmatpush.bf16.msra.mxu0 %v5242
    %5254 = vmatpush.bf16.msra.mxu0 %v5241
    %5255 = vmatpush.bf16.msra.mxu0 %v5240
    %5256 = vmatpush.bf16.msra.mxu0 %v5239
    %5257 = vmatpush.bf16.msra.mxu0 %v5238
    %5258 = vmatpush.bf16.msra.mxu0 %v5237
    %5259 = vmatpush.bf16.msra.mxu0 %v5236
    %5260 = vmatmul.bf16.gmra.mxu0 %v5184
    %v5261 = vpop.f32.mrf.mxu0
    %v5262 = vadd.f32 0.0, %v5261
    %v5263 = vpop.f32.mrf.mxu0
    %v5264 = vadd.f32 0.0, %v5263
    %5265 = vmatmul.bf16.gmra.mxu0 %v5185
    %v5266 = vpop.f32.mrf.mxu0
    %v5267 = vadd.f32 0.0, %v5266
    %v5268 = vpop.f32.mrf.mxu0
    %v5269 = vadd.f32 0.0, %v5268
    %5270 = vmatmul.bf16.gmra.mxu0 %v5186
    %v5271 = vpop.f32.mrf.mxu0
    %v5272 = vadd.f32 0.0, %v5271
    %v5273 = vpop.f32.mrf.mxu0
    %5274 = vdwg.mxu0
    %s5275 = scalar_lea.vmem [#allocation5], 2048
    %v5276 = vld [vmem:[%s5275] sm:$0xf]
    %v5277 = vld [vmem:[%s5275 + $0x4] sm:$0xf]
    %v5278 = vld [vmem:[%s5275 + $0x8] sm:$0xf]
    %v5279 = vld [vmem:[%s5275 + $0xc] sm:$0xf]
    %v5280 = vld [vmem:[%s5275 + $0x10] sm:$0xf]
    %v5281 = vld [vmem:[%s5275 + $0x14] sm:$0xf]
    %v5282 = vld [vmem:[%s5275 + $0x18] sm:$0xf]
    %v5283 = vld [vmem:[%s5275 + $0x1c] sm:$0xf]
    %v5284 = vld [vmem:[%s5275 + $0x20] sm:$0xf]
    %v5285 = vld [vmem:[%s5275 + $0x24] sm:$0xf]
    %v5286 = vld [vmem:[%s5275 + $0x28] sm:$0xf]
    %v5287 = vld [vmem:[%s5275 + $0x2c] sm:$0xf]
    %v5288 = vld [vmem:[%s5275 + $0x30] sm:$0xf]
    %v5289 = vld [vmem:[%s5275 + $0x34] sm:$0xf]
    %v5290 = vld [vmem:[%s5275 + $0x38] sm:$0xf]
    %v5291 = vld [vmem:[%s5275 + $0x3c] sm:$0xf]
    %v5308 = vunpack.c.l.b16 %v5276
    %v5309 = vunpack.c.l.b16 %v5277
    %v5310 = vunpack.c.l.b16 %v5278
    %v5311 = vunpack.c.l.b16 %v5279
    %v5312 = vunpack.c.l.b16 %v5280
    %v5313 = vunpack.c.l.b16 %v5281
    %v5314 = vunpack.c.l.b16 %v5282
    %v5315 = vunpack.c.l.b16 %v5283
    %v5316 = vunpack.c.l.b16 %v5284
    %v5317 = vunpack.c.l.b16 %v5285
    %v5318 = vunpack.c.l.b16 %v5286
    %v5319 = vunpack.c.l.b16 %v5287
    %v5320 = vunpack.c.l.b16 %v5288
    %v5321 = vunpack.c.l.b16 %v5289
    %v5322 = vunpack.c.l.b16 %v5290
    %v5323 = vunpack.c.l.b16 %v5291
    %v5324 = vpack.c.b16 %v5309, %v5308
    %v5325 = vpack.c.b16 %v5311, %v5310
    %v5326 = vpack.c.b16 %v5313, %v5312
    %v5327 = vpack.c.b16 %v5315, %v5314
    %v5328 = vpack.c.b16 %v5317, %v5316
    %v5329 = vpack.c.b16 %v5319, %v5318
    %v5330 = vpack.c.b16 %v5321, %v5320
    %v5331 = vpack.c.b16 %v5323, %v5322
    %5340 = vmatpush.bf16.msra.mxu0 %v5331
    %5341 = vmatpush.bf16.msra.mxu0 %v5330
    %5342 = vmatpush.bf16.msra.mxu0 %v5329
    %5343 = vmatpush.bf16.msra.mxu0 %v5328
    %5344 = vmatpush.bf16.msra.mxu0 %v5327
    %5345 = vmatpush.bf16.msra.mxu0 %v5326
    %5346 = vmatpush.bf16.msra.mxu0 %v5325
    %5347 = vmatpush.bf16.msra.mxu0 %v5324
    %5348 = vmatmul.bf16.gmra.mxu0 %v5184
    %v5349 = vpop.f32.mrf.mxu0
    %v5350 = vadd.f32 0.0, %v5349
    %v5351 = vpop.f32.mrf.mxu0
    %v5352 = vadd.f32 0.0, %v5351
    %5353 = vmatmul.bf16.gmra.mxu0 %v5185
    %v5354 = vpop.f32.mrf.mxu0
    %v5355 = vadd.f32 0.0, %v5354
    %v5356 = vpop.f32.mrf.mxu0
    %v5357 = vadd.f32 0.0, %v5356
    %5358 = vmatmul.bf16.gmra.mxu0 %v5186
    %v5359 = vpop.f32.mrf.mxu0
    %v5360 = vadd.f32 0.0, %v5359
    %v5361 = vpop.f32.mrf.mxu0
    %5362 = vdwg.mxu0
    %s5363 = scalar_lea.vmem [#allocation5], 2112
    %v5364 = vld [vmem:[%s5363] sm:$0xf]
    %v5365 = vld [vmem:[%s5363 + $0x4] sm:$0xf]
    %v5366 = vld [vmem:[%s5363 + $0x8] sm:$0xf]
    %v5367 = vld [vmem:[%s5363 + $0xc] sm:$0xf]
    %v5368 = vld [vmem:[%s5363 + $0x10] sm:$0xf]
    %v5369 = vld [vmem:[%s5363 + $0x14] sm:$0xf]
    %v5370 = vld [vmem:[%s5363 + $0x18] sm:$0xf]
    %v5371 = vld [vmem:[%s5363 + $0x1c] sm:$0xf]
    %v5372 = vld [vmem:[%s5363 + $0x20] sm:$0xf]
    %v5373 = vld [vmem:[%s5363 + $0x24] sm:$0xf]
    %v5374 = vld [vmem:[%s5363 + $0x28] sm:$0xf]
    %v5375 = vld [vmem:[%s5363 + $0x2c] sm:$0xf]
    %v5376 = vld [vmem:[%s5363 + $0x30] sm:$0xf]
    %v5377 = vld [vmem:[%s5363 + $0x34] sm:$0xf]
    %v5378 = vld [vmem:[%s5363 + $0x38] sm:$0xf]
    %v5379 = vld [vmem:[%s5363 + $0x3c] sm:$0xf]
    %v5396 = vunpack.c.l.b16 %v5364
    %v5397 = vunpack.c.l.b16 %v5365
    %v5398 = vunpack.c.l.b16 %v5366
    %v5399 = vunpack.c.l.b16 %v5367
    %v5400 = vunpack.c.l.b16 %v5368
    %v5401 = vunpack.c.l.b16 %v5369
    %v5402 = vunpack.c.l.b16 %v5370
    %v5403 = vunpack.c.l.b16 %v5371
    %v5404 = vunpack.c.l.b16 %v5372
    %v5405 = vunpack.c.l.b16 %v5373
    %v5406 = vunpack.c.l.b16 %v5374
    %v5407 = vunpack.c.l.b16 %v5375
    %v5408 = vunpack.c.l.b16 %v5376
    %v5409 = vunpack.c.l.b16 %v5377
    %v5410 = vunpack.c.l.b16 %v5378
    %v5411 = vunpack.c.l.b16 %v5379
    %v5412 = vpack.c.b16 %v5397, %v5396
    %v5413 = vpack.c.b16 %v5399, %v5398
    %v5414 = vpack.c.b16 %v5401, %v5400
    %v5415 = vpack.c.b16 %v5403, %v5402
    %v5416 = vpack.c.b16 %v5405, %v5404
    %v5417 = vpack.c.b16 %v5407, %v5406
    %v5418 = vpack.c.b16 %v5409, %v5408
    %v5419 = vpack.c.b16 %v5411, %v5410
    %5428 = vmatpush.bf16.msra.mxu0 %v5419
    %5429 = vmatpush.bf16.msra.mxu0 %v5418
    %5430 = vmatpush.bf16.msra.mxu0 %v5417
    %5431 = vmatpush.bf16.msra.mxu0 %v5416
    %5432 = vmatpush.bf16.msra.mxu0 %v5415
    %5433 = vmatpush.bf16.msra.mxu0 %v5414
    %5434 = vmatpush.bf16.msra.mxu0 %v5413
    %5435 = vmatpush.bf16.msra.mxu0 %v5412
    %5436 = vmatmul.bf16.gmra.mxu0 %v5184
    %v5437 = vpop.f32.mrf.mxu0
    %v5438 = vadd.f32 0.0, %v5437
    %v5439 = vpop.f32.mrf.mxu0
    %v5440 = vadd.f32 0.0, %v5439
    %5441 = vmatmul.bf16.gmra.mxu0 %v5185
    %v5442 = vpop.f32.mrf.mxu0
    %v5443 = vadd.f32 0.0, %v5442
    %v5444 = vpop.f32.mrf.mxu0
    %v5445 = vadd.f32 0.0, %v5444
    %5446 = vmatmul.bf16.gmra.mxu0 %v5186
    %v5447 = vpop.f32.mrf.mxu0
    %v5448 = vadd.f32 0.0, %v5447
    %v5449 = vpop.f32.mrf.mxu0
    %5450 = vdwg.mxu0
    %v5451 = vrot.slane %v5262, 7
    %v5452 = vrot.slane %v5264, 7
    %v5453 = vrot.slane %v5267, 7
    %v5454 = vrot.slane %v5269, 7
    %v5455 = vrot.slane %v5272, 7
    %v5456 = vsel %vm574, %v5454, %v5455
    %v5457 = vsel %vm574, %v5453, %v5454
    %v5458 = vsel %vm574, %v5452, %v5453
    %v5459 = vsel %vm574, %v5451, %v5452
    %v5460 = vsel %vm574, %v5455, %v5451
    %v5461 = vmul.f32 %v5460, %v3945
    %v5462 = vmul.f32 %v5459, %v3950
    %v5463 = vmul.f32 %v5458, %v3955
    %v5464 = vmul.f32 %v5457, %v3960
    %v5465 = vmul.f32 %v5456, %v3965
    %v5466 = vrot.slane %v5438, 1
    %v5467 = vrot.slane %v5440, 1
    %v5468 = vrot.slane %v5443, 1
    %v5469 = vrot.slane %v5445, 1
    %v5470 = vrot.slane %v5448, 1
    %v5471 = vsel %vm755, %v5469, %v5470
    %v5472 = vsel %vm755, %v5468, %v5469
    %v5473 = vsel %vm755, %v5467, %v5468
    %v5474 = vsel %vm755, %v5466, %v5467
    %v5475 = vsel %vm755, %v5470, %v5466
    %v5476 = vmul.f32 %v5474, %v3991
    %v5477 = vmul.f32 %v5473, %v3996
    %v5478 = vmul.f32 %v5472, %v4001
    %v5479 = vmul.f32 %v5471, %v4006
    %v5480 = vmul.f32 %v5475, %v4011
    %v5481 = vadd.f32 %v5461, %v5350
    %v5482 = vadd.f32 %v5462, %v5352
    %v5483 = vadd.f32 %v5463, %v5355
    %v5484 = vadd.f32 %v5464, %v5357
    %v5485 = vadd.f32 %v5465, %v5360
    %v5486 = vadd.f32 %v5481, %v5476
    %v5487 = vadd.f32 %v5482, %v5477
    %v5488 = vadd.f32 %v5483, %v5478
    %v5489 = vadd.f32 %v5484, %v5479
    %v5490 = vadd.f32 %v5485, %v5480
    %v5491 = vperm.slane %v150, 5
    %v5492 = vadd.f32 %v5486, %v5491
    %v5493 = vadd.f32 %v5487, %v5491
    %v5494 = vadd.f32 %v5488, %v5491
    %v5495 = vadd.f32 %v5489, %v5491
    %v5496 = vadd.f32 %v5490, %v5491
    %s5497 = scalar_lea.vmem [#allocation5], 2176
    %v5498 = vld [vmem:[%s5497] sm:$0xf]
    %v5499 = vld [vmem:[%s5497 + $0x4] sm:$0xf]
    %v5500 = vld [vmem:[%s5497 + $0x8] sm:$0xf]
    %v5501 = vld [vmem:[%s5497 + $0xc] sm:$0xf]
    %v5502 = vld [vmem:[%s5497 + $0x10] sm:$0xf]
    %v5503 = vld [vmem:[%s5497 + $0x14] sm:$0xf]
    %v5504 = vld [vmem:[%s5497 + $0x18] sm:$0xf]
    %v5505 = vld [vmem:[%s5497 + $0x1c] sm:$0xf]
    %v5506 = vld [vmem:[%s5497 + $0x20] sm:$0xf]
    %v5507 = vld [vmem:[%s5497 + $0x24] sm:$0xf]
    %v5508 = vld [vmem:[%s5497 + $0x28] sm:$0xf]
    %v5509 = vld [vmem:[%s5497 + $0x2c] sm:$0xf]
    %v5510 = vld [vmem:[%s5497 + $0x30] sm:$0xf]
    %v5511 = vld [vmem:[%s5497 + $0x34] sm:$0xf]
    %v5512 = vld [vmem:[%s5497 + $0x38] sm:$0xf]
    %v5513 = vld [vmem:[%s5497 + $0x3c] sm:$0xf]
    %v5514 = vperm.slane %v150, 6
    %v5531 = vunpack.c.l.b16 %v5498
    %v5532 = vunpack.c.l.b16 %v5499
    %v5533 = vunpack.c.l.b16 %v5500
    %v5534 = vunpack.c.l.b16 %v5501
    %v5535 = vunpack.c.l.b16 %v5502
    %v5536 = vunpack.c.l.b16 %v5503
    %v5537 = vunpack.c.l.b16 %v5504
    %v5538 = vunpack.c.l.b16 %v5505
    %v5539 = vunpack.c.l.b16 %v5506
    %v5540 = vunpack.c.l.b16 %v5507
    %v5541 = vunpack.c.l.b16 %v5508
    %v5542 = vunpack.c.l.b16 %v5509
    %v5543 = vunpack.c.l.b16 %v5510
    %v5544 = vunpack.c.l.b16 %v5511
    %v5545 = vunpack.c.l.b16 %v5512
    %v5546 = vunpack.c.l.b16 %v5513
    %v5547 = vpack.c.b16 %v5532, %v5531
    %v5548 = vpack.c.b16 %v5534, %v5533
    %v5549 = vpack.c.b16 %v5536, %v5535
    %v5550 = vpack.c.b16 %v5538, %v5537
    %v5551 = vpack.c.b16 %v5540, %v5539
    %v5552 = vpack.c.b16 %v5542, %v5541
    %v5553 = vpack.c.b16 %v5544, %v5543
    %v5554 = vpack.c.b16 %v5546, %v5545
    %5563 = vmatpush.bf16.msra.mxu0 %v5554
    %5564 = vmatpush.bf16.msra.mxu0 %v5553
    %5565 = vmatpush.bf16.msra.mxu0 %v5552
    %5566 = vmatpush.bf16.msra.mxu0 %v5551
    %5567 = vmatpush.bf16.msra.mxu0 %v5550
    %5568 = vmatpush.bf16.msra.mxu0 %v5549
    %5569 = vmatpush.bf16.msra.mxu0 %v5548
    %5570 = vmatpush.bf16.msra.mxu0 %v5547
    %5571 = vmatmul.bf16.gmra.mxu0 %v4866
    %v5572 = vpop.f32.mrf.mxu0
    %v5573 = vadd.f32 %v5514, %v5572
    %v5574 = vpop.f32.mrf.mxu0
    %v5575 = vadd.f32 %v5514, %v5574
    %5576 = vmatmul.bf16.gmra.mxu0 %v4867
    %v5577 = vpop.f32.mrf.mxu0
    %v5578 = vadd.f32 %v5514, %v5577
    %v5579 = vpop.f32.mrf.mxu0
    %v5580 = vadd.f32 %v5514, %v5579
    %5581 = vmatmul.bf16.gmra.mxu0 %v4868
    %v5582 = vpop.f32.mrf.mxu0
    %v5583 = vadd.f32 %v5514, %v5582
    %v5584 = vpop.f32.mrf.mxu0
    %5585 = vdwg.mxu0
    %v5586 = vadd.f32 %v5492, %v5573
    %v5587 = vadd.f32 %v5493, %v5575
    %v5588 = vadd.f32 %v5494, %v5578
    %v5589 = vadd.f32 %v5495, %v5580
    %v5590 = vadd.f32 %v5496, %v5583
    %v5591 = vmax.f32 %v5586, 0.0
    %v5592 = vmax.f32 %v5587, 0.0
    %v5593 = vmax.f32 %v5588, 0.0
    %v5594 = vmax.f32 %v5589, 0.0
    %v5595 = vmax.f32 %v5590, 0.0
    %v5596 = vld [vmem:[#allocation11] sm:$0xff]
    %v5597 = vld [vmem:[#allocation11 + $0x8] sm:$0xff]
    %v5598 = vld [vmem:[#allocation11 + $0x10] sm:$0xff]
    %v5599 = vld [vmem:[#allocation11 + $0x18] sm:$0xff]
    %v5600 = vld [vmem:[#allocation11 + $0x20] sm:$0xff]
    %v5601 = vmul.f32 %v5591, %v5596
    %v5602 = vmul.f32 %v5592, %v5597
    %v5603 = vmul.f32 %v5593, %v5598
    %v5604 = vmul.f32 %v5594, %v5599
    %v5605 = vmul.f32 %v5595, %v5600
    %v5606 = vld [vmem:[#allocation13] sm:$0xff]
    %vm5607 = vcmask 326656
    %v5609 = vsel %vm5607, %v5606, 0
    %5611 = vmatpush.msra.mxu0 0.0
    %5612 = vmatpush.msra.mxu0 0.0
    %5613 = vmatpush.msra.mxu0 0.0
    %5614 = vmatpush.msra.mxu0 0.0
    %5615 = vmatpush.msra.mxu0 0.0
    %5616 = vmatpush.msra.mxu0 0.0
    %5617 = vmatpush.msra.mxu0 0.0
    %5618 = vmatpush.msra.mxu0 0.0
    %5619 = vmatpush.msra.mxu0 0.0
    %5620 = vmatpush.msra.mxu0 0.0
    %5621 = vmatpush.msra.mxu0 0.0
    %5622 = vmatpush.msra.mxu0 %v5605
    %5623 = vmatpush.msra.mxu0 %v5604
    %5624 = vmatpush.msra.mxu0 %v5603
    %5625 = vmatpush.msra.mxu0 %v5602
    %5626 = vmatpush.msra.mxu0 %v5601
    %5627 = vmatmul.f32.gmra.mxu0 %v5609
    %v5628 = vpop.f32.mrf.mxu0
    %v5629 = vadd.f32 0.0, %v5628
    %5630 = vdwg.mxu0
    %v5631 = vld [vmem:[%s10] sm:$0xff]
    %v5632 = vld [vmem:[%s10 + $0x8] sm:$0xff]
    %v5633 = vld [vmem:[%s10 + $0x10] sm:$0xff]
    %v5634 = vld [vmem:[%s10 + $0x18] sm:$0xff]
    %v5635 = vld [vmem:[%s10 + $0x20] sm:$0xff]
    %v5636 = vld [vmem:[%s10 + $0x28] sm:$0xff]
    %v5637 = vld [vmem:[%s10 + $0x30] sm:$0xff]
    %v5638 = vld [vmem:[%s10 + $0x38] sm:$0xff]
    %v5639 = vld [vmem:[%s10 + $0x40] sm:$0xff]
    %v5640 = vld [vmem:[%s10 + $0x48] sm:$0xff]
    %v5641 = vld [vmem:[%s10 + $0x50] sm:$0xff]
    %v5642 = vld [vmem:[%s10 + $0x58] sm:$0xff]
    %v5643 = vld [vmem:[%s10 + $0x60] sm:$0xff]
    %v5644 = vld [vmem:[%s10 + $0x68] sm:$0xff]
    %v5645 = vld [vmem:[%s10 + $0x70] sm:$0xff]
    %v5646 = vld [vmem:[%s10 + $0x78] sm:$0xff]
    %s5647 = sld [smem:[#allocation2]]
    %v5648 = vstv %s5647
    %5649 = vmatpush.msra.mxu0 %v5646
    %5650 = vmatpush.msra.mxu0 %v5645
    %5651 = vmatpush.msra.mxu0 %v5644
    %5652 = vmatpush.msra.mxu0 %v5643
    %5653 = vmatpush.msra.mxu0 %v5642
    %5654 = vmatpush.msra.mxu0 %v5641
    %5655 = vmatpush.msra.mxu0 %v5640
    %5656 = vmatpush.msra.mxu0 %v5639
    %5657 = vmatpush.msra.mxu0 %v5638
    %5658 = vmatpush.msra.mxu0 %v5637
    %5659 = vmatpush.msra.mxu0 %v5636
    %5660 = vmatpush.msra.mxu0 %v5635
    %5661 = vmatpush.msra.mxu0 %v5634
    %5662 = vmatpush.msra.mxu0 %v5633
    %5663 = vmatpush.msra.mxu0 %v5632
    %5664 = vmatpush.msra.mxu0 %v5631
    %5665 = vmatmul.f32.gmra.mxu0 %v5629
    %v5666 = vpop.f32.mrf.mxu0
    %v5667 = vadd.f32 %v5648, %v5666
    %5668 = vdwg.mxu0
    %vm5669 = vcmask 7168
    %5670 = vst.msk [vmem:[%s12] sm:$0xff] %vm5669, %v5667
    // Predicated region
    $region78: #{tpu_custom_call.1} parent=1 // pred_check
      _
    $region79: #{tpu_custom_call.1} parent=1 // pred_check_branch
      %5672 = sbr.rel (0) target = $region81
    $region80: #{tpu_custom_call.1} parent=1 // pred_region
      _
    $region81: #{tpu_custom_call.1} parent=1 // pred_fallthru
      _
    // Predicated region
    $region82: #{tpu_custom_call.1} parent=1 // pred_check
      _
    $region83: #{tpu_custom_call.1} parent=1 // pred_check_branch
      %5674 = sbr.rel (0) target = $region85
    $region84: #{tpu_custom_call.1} parent=1 // pred_region
      _
    $region85: #{tpu_custom_call.1} parent=1 // pred_fallthru
      _
    %5675 = vsyncpa [#allocation4], 1
    %5676 = vsyncpa [#allocation6], 1
    %5677 = vsyncpa [#allocation9], 1
    %5678 = vsyncpa [#allocation12], 1

</llo_original>
